<compile_context>
chip_gen: v7x
topology: tpu7x:2x2x1
jax: 0.10.0
libtpu: 0.0.40
codegen_flags: <defaults>
</compile_context>

<pallas_src>
import functools

import jax
import jax.numpy as jnp
from jax import lax
from jax.experimental import pallas as pl
from jax.experimental.pallas import tpu as pltpu

LN_EPS = 1e-5


def _device_info():
    try:
        kind = jax.devices()[0].device_kind.lower()
    except Exception:  # pragma: no cover - defensive
        kind = ""
    is_v7 = ("v7" in kind) or ("7x" in kind)
    return kind, is_v7


# --------------------------------------------------------------------------------------
# Kernel A: tiled forward + analytic gradients of sum(cross_entropy) w.r.t. the 4 params.
# grid = (n_shards, n_tiles); axis 0 "parallel"/CORE_PARALLEL (megacore), axis 1
# "arbitrary" (token reduction, accumulated in VMEM scratch).
# --------------------------------------------------------------------------------------
def fwd_grad_kernel(h_ref, lab_ref, eT_ref, e_ref, ob_ref,
                    whT_ref, bh_ref, wpT_ref, wp_ref, bp_ref, gamma_ref, beta_ref,
                    v_ref, gwh_ref, gbh_ref, gwp_ref, gbp_ref,
                    acc_gwh, acc_gbh, acc_gwp, acc_gbp,
                    *, approx, n_valid, need_mask):
    f32 = jnp.float32
    mx = h_ref.dtype                                     # MXU operand dtype (bf16 / f32)
    t_idx = pl.program_id(1)

    @pl.when(t_idx == 0)
    def _init():
        acc_gwh[...] = jnp.zeros_like(acc_gwh)
        acc_gbh[...] = jnp.zeros_like(acc_gbh)
        acc_gwp[...] = jnp.zeros_like(acc_gwp)
        acc_gbp[...] = jnp.zeros_like(acc_gbp)

    # ---- forward: linear -> (+hidden bias) -> relu -> projection -> layernorm ----
    h_mx = h_ref[...]                                    # (rows, H), already matmul dtype
    pre1 = jnp.dot(h_mx, whT_ref[...], preferred_element_type=f32) + bh_ref[...]
    v = jnp.maximum(pre1, 0.0)                           # relu, (rows, F) f32
    v_ref[...] = v.astype(v_ref.dtype)                   # emitted in matmul dtype
    v_mx = v.astype(mx)

    pre2 = jnp.dot(v_mx, wpT_ref[...], preferred_element_type=f32) + bp_ref[...]
    mu = jnp.mean(pre2, axis=-1, keepdims=True)
    xc = pre2 - mu
    var = jnp.mean(xc * xc, axis=-1, keepdims=True)
    inv = lax.rsqrt(var + LN_EPS)
    xhat = xc * inv
    o = xhat * gamma_ref[...] + beta_ref[...]            # (rows, F)

    # ---- logits + d(sum CE)/dlogits (fused one-hot) ----
    logits = jnp.dot(o.astype(mx), eT_ref[...], preferred_element_type=f32) + ob_ref[...]
    m = jnp.max(logits, axis=-1, keepdims=True)
    ex = jnp.exp(logits - m)
    denom = jnp.sum(ex, axis=-1, keepdims=True)
    inv_denom = pl.reciprocal(denom, approx=True) if approx else 1.0 / denom
    p = ex * inv_denom
    ids = lax.broadcasted_iota(jnp.int32, logits.shape, 1)
    dlogits = jnp.where(ids == lab_ref[...], p - 1.0, p)                  # (rows, V)

    do = jnp.dot(dlogits.astype(mx), e_ref[...], preferred_element_type=f32)  # (rows, F)
    if need_mask:
        # mask padded token rows here ((rows,F) work instead of (rows,V)); a zeroed
        # `do` row propagates to zero dx / dpre1, so gradients are identical.
        rows = h_ref.shape[0]
        row0 = (pl.program_id(0) * pl.num_programs(1) + t_idx) * rows
        rid = lax.broadcasted_iota(jnp.int32, (rows, 1), 0)
        do = jnp.where(row0 + rid < n_valid, do, 0.0)

    # ---- LayerNorm backward ----
    dxhat = do * gamma_ref[...]
    mean_dxhat = jnp.mean(dxhat, axis=-1, keepdims=True)
    mean_dxhat_xhat = jnp.mean(dxhat * xhat, axis=-1, keepdims=True)
    dx = inv * (dxhat - mean_dxhat - xhat * mean_dxhat_xhat)              # d/dpre2

    # ---- accumulate this tile's parameter-gradient contributions ----
    acc_gbp[...] += jnp.sum(dx, axis=0, keepdims=True)                    # (1, F)
    acc_gwp[...] += lax.dot_general(dx.astype(mx), v_mx, (((0,), (0,)), ((), ())),
                                    preferred_element_type=f32)           # (F, F)
    dv = jnp.dot(dx.astype(mx), wp_ref[...], preferred_element_type=f32)  # (rows, F)
    dpre1 = jnp.where(pre1 > 0.0, dv, 0.0)
    acc_gbh[...] += jnp.sum(dpre1, axis=0, keepdims=True)                 # (1, F)
    acc_gwh[...] += lax.dot_general(dpre1.astype(mx), h_mx, (((0,), (0,)), ((), ())),
                                    preferred_element_type=f32)           # (F, H)

    @pl.when(t_idx == pl.num_programs(1) - 1)
    def _writeback():
        gwh_ref[...] = acc_gwh[...]
        gbh_ref[...] = acc_gbh[...]
        gwp_ref[...] = acc_gwp[...]
        gbp_ref[...] = acc_gbp[...]


# --------------------------------------------------------------------------------------
# Kernel B: fast-weight update + layernorm + logits + per-token CE, t_blk timesteps per
# grid step (batched einsums).
# --------------------------------------------------------------------------------------
def fast_step_kernel(v_ref, lab_ref, eT_ref, ob_ref, wp_ref, bp_ref,
                     gamma_ref, beta_ref, sp_ref, sb_ref, gwp_ref, gbp_ref,
                     loss_ref):
    f32 = jnp.float32
    mx = eT_ref.dtype
    t_blk, b_dim, f_dim = v_ref.shape
    n_vocab = eT_ref.shape[1]

    v_t = v_ref[...]                                                      # (T, B, F) mx

    # Gram matrices G[t] = v_t v_t^T  (B == F required by the reference code).
    G = jnp.einsum('tbf,tcf->tbc', v_t, v_t, preferred_element_type=f32)  # (T, B, B)
    G_mx = G.astype(mx)

    # fast_w[t] = W_p - step_p * (G[t] @ grad_Wp)   (grad_Wp pre-cast to mx in wrapper)
    delta_w = jnp.dot(G_mx.reshape(t_blk * b_dim, b_dim), gwp_ref[...],
                      preferred_element_type=f32).reshape(t_blk, b_dim, f_dim)
    fast_w = wp_ref[...] - sp_ref[...] * delta_w                          # (T, F, F) f32

    # fast_b[t] = b_p - step_b * (G[t] @ grad_bp)   (G symmetric -> grad_bp @ G)
    gbp_b = jnp.broadcast_to(gbp_ref[...], (t_blk, 1, b_dim))
    delta_b = jnp.einsum('tob,tbk->tok', gbp_b, G_mx,
                         preferred_element_type=f32)                      # (T, 1, F)
    fast_b = bp_ref[...][None] - sb_ref[...][None] * delta_b              # (T, 1, F)

    # o_fast = LayerNorm(v_t @ fast_w^T + fast_b)
    # TODO(synk): fast_w.transpose(1, 2) on a 2-D tensor has no valid torch semantics.
    pre2 = jnp.einsum('tbf,tkf->tbk', v_t, fast_w.astype(mx),
                      preferred_element_type=f32) + fast_b                # (T, B, F)
    mu = jnp.mean(pre2, axis=-1, keepdims=True)
    xc = pre2 - mu
    var = jnp.mean(xc * xc, axis=-1, keepdims=True)
    xhat = xc * lax.rsqrt(var + LN_EPS)
    o_fast = xhat * gamma_ref[...] + beta_ref[...]                        # (T, B, F)

    # logits + per-token cross entropy ("fast loss"); the softmax shift `m` is reused
    # for the true-logit (single max over V, no duplicate XLU reduce).
    logits = (jnp.dot(o_fast.reshape(t_blk * b_dim, f_dim).astype(mx), eT_ref[...],
                      preferred_element_type=f32) + ob_ref[...]
              ).reshape(t_blk, b_dim, n_vocab)
    m = jnp.max(logits, axis=-1, keepdims=True)
    shifted = logits - m
    sumexp = jnp.sum(jnp.exp(shifted), axis=-1)                           # (T, B)
    ids = lax.broadcasted_iota(jnp.int32, logits.shape, 2)
    true_shifted = jnp.sum(jnp.where(ids == lab_ref[...], shifted, 0.0), axis=-1)
    loss_ref[...] = jnp.log(sumexp) - true_shifted                        # (T, B)


# --------------------------------------------------------------------------------------
# Wrapper
# --------------------------------------------------------------------------------------
def fast_weight_layer(h, embedding_matrix, output_bias, labels, params, *,
                      matmul_dtype=jnp.bfloat16, approx_reciprocal=False,
                      tile_rows=None, t_blk=None, n_shards=None,
                      vmem_limit_bytes=None):
    B, S, H = h.shape
    F = params["w_h"].shape[0]
    V = embedding_matrix.shape[0]
    assert B == F, "reference code requires batch_size == fwl_dim ((B,B) @ (F,F))"
    N = S * B
    mx = matmul_dtype
    f32 = jnp.float32
    itemsz = jnp.dtype(mx).itemsize

    # ---------- per-chip defaults ----------
    _, is_v7 = _device_info()
    if n_shards is None:
        n_shards = 2 if is_v7 else 1          # shard axis is pure overhead on 1-TC parts
    n_shards = max(1, int(n_shards))
    if vmem_limit_bytes is None:
        vmem_limit_bytes = (48 if is_v7 else 96) * 1024 * 1024
    ws_target = (4 if is_v7 else 12) * 1024 * 1024
    par_a = pltpu.CORE_PARALLEL if (is_v7 and n_shards > 1) else "parallel"
    par_b = pltpu.CORE_PARALLEL if is_v7 else "parallel"

    # ---------- one-time XLA-side transposes / casts of the weight operands ----------
    e = embedding_matrix.astype(f32)
    e_mx = e.astype(mx)                       # (V, F)
    eT_mx = e.T.astype(mx)                    # (F, V)
    ob = output_bias.reshape(1, V).astype(f32)
    wh = params["w_h"].astype(f32)
    whT_mx = wh.T.astype(mx)                  # (H, F)
    bh = (params["b_lin"] + params["b_hid"]).reshape(1, F).astype(f32)
    wp = params["w_p"].astype(f32)
    wpT_mx = wp.T.astype(mx)
    wp_mx = wp.astype(mx)
    bp = params["b_p"].reshape(1, F).astype(f32)
    gamma = params["gamma"].reshape(1, F).astype(f32)
    beta = params["beta"].reshape(1, F).astype(f32)
    sp = params["step_p"].astype(f32)
    sb = params["step_b"].reshape(1, F).astype(f32)

    # ---------- time-major token flattening (h already in matmul dtype) ----------
    h_tm = jnp.transpose(h, (1, 0, 2)).reshape(N, H).astype(mx)
    lab_sb = jnp.transpose(labels, (1, 0)).astype(jnp.int32)     # (S, B)
    lab_tm = lab_sb.reshape(N, 1)

    # ---------- tile_rows: granularity 16 for bf16 packing, snap to a divisor of N ----
    gran = 16 if itemsz < 4 else 8
    auto_rows = tile_rows is None
    if auto_rows:
        bytes_per_row = 4 * 4 * max(V, 128) + itemsz * (H + 2 * F) + 4 * 8 * F
        tile_rows = ws_target // max(bytes_per_row, 1)
    tile_rows = max(gran, (int(tile_rows) // gran) * gran)
    max_rows = ((pl.cdiv(N, n_shards) + gran - 1) // gran) * gran
    tile_rows = min(tile_rows, max_rows)
    if auto_rows:
        for tr in range(tile_rows, gran - 1, -gran):
            if N % (n_shards * tr) == 0:      # exact split -> no padding, no v copy
                tile_rows = tr
                break
    n_tiles = pl.cdiv(N, n_shards * tile_rows)
    n_pad = n_shards * n_tiles * tile_rows
    pad = n_pad - N

    h_p = jnp.pad(h_tm, ((0, pad), (0, 0))) if pad else h_tm
    lab_p = jnp.pad(lab_tm, ((0, pad), (0, 0))) if pad else lab_tm

    row_idx = lambda c, t: (c * n_tiles + t, 0)
    full2 = lambda c, t: (0, 0)
    shard_idx = lambda c, t: (c, 0, 0)

    v_pad, gwh_sh, gbh_sh, gwp_sh, gbp_sh = pl.pallas_call(
        functools.partial(fwd_grad_kernel, approx=approx_reciprocal,
                          n_valid=N, need_mask=pad > 0),
        grid=(n_shards, n_tiles),
        in_specs=[
            pl.BlockSpec((tile_rows, H), row_idx),    # h (time-major tokens, mx dtype)
            pl.BlockSpec((tile_rows, 1), row_idx),    # labels
            pl.BlockSpec((F, V), full2),              # E^T   (matmul dtype)
            pl.BlockSpec((V, F), full2),              # E     (matmul dtype)
            pl.BlockSpec((1, V), full2),              # output bias
            pl.BlockSpec((H, F), full2),              # W_h^T (matmul dtype)
            pl.BlockSpec((1, F), full2),              # hidden biases (lin + hidden)
            pl.BlockSpec((F, F), full2),              # W_p^T (matmul dtype)
            pl.BlockSpec((F, F), full2),              # W_p   (matmul dtype)
            pl.BlockSpec((1, F), full2),              # projection bias
            pl.BlockSpec((1, F), full2),              # LN gamma
            pl.BlockSpec((1, F), full2),              # LN beta
        ],
        out_specs=(
            pl.BlockSpec((tile_rows, F), row_idx),    # v (relu activations)
            pl.BlockSpec((None, F, H), shard_idx),    # per-shard grad hidden_layer.weight
            pl.BlockSpec((None, 1, F), shard_idx),    # per-shard grad hidden_bias
            pl.BlockSpec((None, F, F), shard_idx),    # per-shard grad projection weight
            pl.BlockSpec((None, 1, F), shard_idx),    # per-shard grad projection bias
        ),
        out_shape=(
            jax.ShapeDtypeStruct((n_pad, F), mx),
            jax.ShapeDtypeStruct((n_shards, F, H), f32),
            jax.ShapeDtypeStruct((n_shards, 1, F), f32),
            jax.ShapeDtypeStruct((n_shards, F, F), f32),
            jax.ShapeDtypeStruct((n_shards, 1, F), f32),
        ),
        scratch_shapes=[
            pltpu.VMEM((F, H), f32), pltpu.VMEM((1, F), f32),
            pltpu.VMEM((F, F), f32), pltpu.VMEM((1, F), f32),
        ],
        compiler_params=pltpu.CompilerParams(
            dimension_semantics=(par_a, "arbitrary"),
            vmem_limit_bytes=vmem_limit_bytes),
    )(h_p, lab_p, eT_mx, e_mx, ob, whT_mx, bh, wpT_mx, wp_mx, bp, gamma, beta)

    gwh = jnp.sum(gwh_sh, axis=0)          # (F, H)
    gbh = jnp.sum(gbh_sh, axis=0)          # (1, F)
    gwp = jnp.sum(gwp_sh, axis=0)          # (F, F)
    gbp = jnp.sum(gbp_sh, axis=0)          # (1, F)

    # constant operands of Kernel B pre-cast once (no per-grid-step VPU cast)
    gwp_mx = gwp.astype(mx)
    gbp_mx = gbp.astype(mx)

    # ---------- Kernel B: t_blk clamped from a per-chip VMEM budget ----------
    if t_blk is None:
        budget = (8 if is_v7 else 16) * 1024 * 1024
        bytes_per_t = (B * B) * (4 + itemsz) + (B * F) * (4 * 6 + 2 * itemsz) + (B * V) * 8
        t_blk = max(8, min(32, budget // max(bytes_per_t, 1)))
        t_blk = max(8, (int(t_blk) // 8) * 8)
        for tb in range(int(t_blk), 7, -8):
            if S % tb == 0:                   # exact split -> no padded timesteps
                t_blk = tb
                break
    t_blk = max(8, ((int(t_blk) + 7) // 8) * 8)
    s_pad = pl.cdiv(S, t_blk) * t_blk

    v3 = v_pad[:N].reshape(S, B, F)           # no-copy when tiling divides N exactly
    lab3 = lab_sb[:, :, None]                 # (S, B, 1)
    if s_pad != S:
        v3 = jnp.pad(v3, ((0, s_pad - S), (0, 0), (0, 0)))
        lab3 = jnp.pad(lab3, ((0, s_pad - S), (0, 0), (0, 0)))

    blk3 = lambda i: (i, 0, 0)
    fullb = lambda i: (0, 0)

    loss_pad = pl.pallas_call(
        fast_step_kernel,
        grid=(s_pad // t_blk,),
        in_specs=[
            pl.BlockSpec((t_blk, B, F), blk3),     # v_t blocks (matmul dtype)
            pl.BlockSpec((t_blk, B, 1), blk3),     # labels
            pl.BlockSpec((F, V), fullb),           # E^T  (matmul dtype)
            pl.BlockSpec((1, V), fullb),           # output bias
            pl.BlockSpec((F, F), fullb),           # W_p  (f32)
            pl.BlockSpec((1, F), fullb),           # projection bias
            pl.BlockSpec((1, F), fullb),           # LN gamma
            pl.BlockSpec((1, F), fullb),           # LN beta
            pl.BlockSpec((F, F), fullb),           # step_size_projection_layer
            pl.BlockSpec((1, F), fullb),           # step_size_projection_bias
            pl.BlockSpec((F, F), fullb),           # grad projection weight (mx)
            pl.BlockSpec((1, F), fullb),           # grad projection bias   (mx)
        ],
        out_specs=pl.BlockSpec((t_blk, B), lambda i: (i, 0)),
        out_shape=jax.ShapeDtypeStruct((s_pad, B), f32),
        compiler_params=pltpu.CompilerParams(
            dimension_semantics=(par_b,),
            vmem_limit_bytes=vmem_limit_bytes),
    )(v3, lab3, eT_mx, ob, wp, bp, gamma, beta, sp, sb, gwp_mx, gbp_mx)

    fast_loss = jnp.transpose(loss_pad[:S], (1, 0))              # (B, S)
    gradients = (gwh, gbh[0], gwp, gbp[0])
    return fast_loss, gradients


# --------------------------------------------------------------------------------------
# Pure-JAX reference.  `matmul_dtype` mirrors the kernels' precision policy (matmul
# operands cast, f32 accumulation, element-wise math in f32).
# --------------------------------------------------------------------------------------
def reference(h, e, ob, labels, params, matmul_dtype=jnp.float32):
    f32 = jnp.float32
    hi = jax.lax.Precision.HIGHEST
    c = lambda x: x.astype(matmul_dtype)

    def mm(spec, a, b):
        return jnp.einsum(spec, c(a), c(b), precision=hi, preferred_element_type=f32)

    wh, blin, bhid = params["w_h"], params["b_lin"], params["b_hid"]
    wp, bp = params["w_p"], params["b_p"]
    gamma, beta = params["gamma"], params["beta"]
    sp, sb = params["step_p"], params["step_b"]

    def ln(x):
        mu = jnp.mean(x, -1, keepdims=True)
        var = jnp.mean((x - mu) ** 2, -1, keepdims=True)
        return (x - mu) / jnp.sqrt(var + LN_EPS) * gamma + beta

    def loss_fn(wh_, bhid_, wp_, bp_):
        v = jax.nn.relu(mm("bsh,fh->bsf", h, wh_) + blin + bhid_)
        o = ln(mm("bsf,gf->bsg", v, wp_) + bp_)
        logits = mm("bsf,vf->bsv", o, e) + ob
        lse = jax.scipy.special.logsumexp(logits, axis=-1)
        true = jnp.take_along_axis(logits, labels[..., None], axis=-1)[..., 0]
        return jnp.sum(lse - true)

    grads = jax.grad(loss_fn, argnums=(0, 1, 2, 3))(wh, bhid, wp, bp)
    gwh, gbh, gwp, gbp = grads

    v_all = jax.nn.relu(mm("bsh,fh->bsf", h, wh) + blin + bhid)
    S = h.shape[1]
    losses = []
    for t in range(S):
        v_t = v_all[:, t, :]
        G = mm("bf,cf->bc", v_t, v_t)
        fast_w = wp - sp * mm("bg,gf->bf", G, gwp)
        fast_b = bp - sb * mm("bg,g->b", G, gbp)
        o_fast = ln(mm("bf,gf->bg", v_t, fast_w) + fast_b)
        logits = mm("bf,vf->bv", o_fast, e) + ob
        lse = jax.scipy.special.logsumexp(logits, axis=-1)
        true = jnp.take_along_axis(logits, labels[:, t][:, None], axis=-1)[:, 0]
        losses.append(lse - true)
    fast_loss = jnp.stack(losses, axis=1)
    return fast_loss, (gwh, gbh, gwp, gbp)


if __name__ == "__main__":
    import numpy as np

    key = jax.random.PRNGKey(0)
    # batch must equal fwl_dim (the reference torch code requires it to run at all)
    B, S, H, F, V = 8, 16, 16, 8, 32
    ks = jax.random.split(key, 8)
    h = jax.random.normal(ks[0], (B, S, H), jnp.float32)
    embedding_matrix = 0.3 * jax.random.normal(ks[1], (V, F), jnp.float32)
    output_bias = 0.05 * jax.random.normal(ks[2], (V,), jnp.float32)
    labels = jax.random.randint(ks[3], (B, S), 0, V, jnp.int32)

    params = dict(
        w_h=0.2 * jax.random.normal(ks[4], (F, H), jnp.float32),   # hidden_layer.weight
        b_lin=0.1 * jax.random.normal(ks[5], (F,), jnp.float32),   # hidden_layer.bias
        b_hid=jnp.zeros((F,), jnp.float32),                        # hidden_bias (zeros)
        w_p=0.2 * jax.random.normal(ks[6], (F, F), jnp.float32),   # projection_layer.weight
        b_p=jnp.zeros((F,), jnp.float32),                          # projection_bias (zeros)
        gamma=jnp.ones((F,), jnp.float32),                         # LayerNorm weight
        beta=jnp.zeros((F,), jnp.float32),                         # LayerNorm bias
        step_p=jnp.ones((F, F), jnp.float32),                      # step_size_projection_layer
        step_b=jnp.ones((F,), jnp.float32),                        # step_size_projection_bias
        # step_size_hidden_layer / step_size_hidden_bias exist in the torch module
        # but are unused in forward(), so they are omitted here.
    )

    # 1) strict check: exact f32 path vs the f32 reference (fixed small tiles)
    run_f32 = jax.jit(functools.partial(
        fast_weight_layer, matmul_dtype=jnp.float32, approx_reciprocal=False,
        tile_rows=16, t_blk=8, n_shards=2))
    loss32, grads32 = run_f32(h, embedding_matrix, output_bias, labels, params)
    jax.block_until_ready((loss32, grads32))
    ref_loss, ref_grads = reference(h, embedding_matrix, output_bias, labels, params)
    np.testing.assert_allclose(np.asarray(loss32), np.asarray(ref_loss),
                               rtol=2e-2, atol=2e-2)
    for got, want in zip(grads32, ref_grads):
        np.testing.assert_allclose(np.asarray(got), np.asarray(want),
                                   rtol=2e-2, atol=2e-2)

    # 2) performance-default path (bf16 MXU operands, auto per-chip tiling/shards) vs a
    #    precision-mirrored reference (same operand casts, f32 accumulation).
    run_perf = jax.jit(functools.partial(fast_weight_layer))
    loss_bf, grads_bf = run_perf(h, embedding_matrix, output_bias, labels, params)
    jax.block_until_ready((loss_bf, grads_bf))
    ref_loss_bf, ref_grads_bf = reference(h, embedding_matrix, output_bias, labels,
                                          params, matmul_dtype=jnp.bfloat16)
    np.testing.assert_allclose(np.asarray(loss_bf), np.asarray(ref_loss_bf),
                               rtol=1e-1, atol=1e-1)
    for got, want in zip(grads_bf, ref_grads_bf):
        np.testing.assert_allclose(np.asarray(got), np.asarray(want),
                                   rtol=1e-1, atol=1e-1)

    print("KERNEL_OK")
</pallas_src>

<mosaic_0001>
module attributes {stable_mosaic.version = 11 : i64} {
  func.func @fwd_grad_kernel(%arg0: i32, %arg1: i32, %arg2: memref<16x16xf32, #tpu.memory_space<vmem>>, %arg3: memref<16x1xi32, #tpu.memory_space<vmem>>, %arg4: memref<8x32xf32, #tpu.memory_space<vmem>>, %arg5: memref<32x8xf32, #tpu.memory_space<vmem>>, %arg6: memref<1x32xf32, #tpu.memory_space<vmem>>, %arg7: memref<16x8xf32, #tpu.memory_space<vmem>>, %arg8: memref<1x8xf32, #tpu.memory_space<vmem>>, %arg9: memref<8x8xf32, #tpu.memory_space<vmem>>, %arg10: memref<8x8xf32, #tpu.memory_space<vmem>>, %arg11: memref<1x8xf32, #tpu.memory_space<vmem>>, %arg12: memref<1x8xf32, #tpu.memory_space<vmem>>, %arg13: memref<1x8xf32, #tpu.memory_space<vmem>>, %arg14: memref<16x8xf32, #tpu.memory_space<vmem>>, %arg15: memref<1x8x16xf32, #tpu.memory_space<vmem>>, %arg16: memref<1x1x8xf32, #tpu.memory_space<vmem>>, %arg17: memref<1x8x8xf32, #tpu.memory_space<vmem>>, %arg18: memref<1x1x8xf32, #tpu.memory_space<vmem>>, %arg19: memref<8x16xf32, #tpu.memory_space<vmem>>, %arg20: memref<1x8xf32, #tpu.memory_space<vmem>>, %arg21: memref<8x8xf32, #tpu.memory_space<vmem>>, %arg22: memref<1x8xf32, #tpu.memory_space<vmem>>) attributes {dimension_semantics = [#tpu.dimension_semantics<parallel>, #tpu.dimension_semantics<arbitrary>], iteration_bounds = array<i64: 2, 4>, scalar_prefetch = 0 : i64, scratch_operands = 4 : i64, tpu.core_type = #tpu.core_type<tc>, window_params = [{transform_indices = @transform_0, window_bounds = array<i64: 16, 16>}, {transform_indices = @transform_1, window_bounds = array<i64: 16, 1>}, {pipeline_mode = #tpu.pipeline_mode<synchronous>, transform_indices = @transform_2, window_bounds = array<i64: 8, 32>}, {pipeline_mode = #tpu.pipeline_mode<synchronous>, transform_indices = @transform_3, window_bounds = array<i64: 32, 8>}, {pipeline_mode = #tpu.pipeline_mode<synchronous>, transform_indices = @transform_4, window_bounds = array<i64: 1, 32>}, {pipeline_mode = #tpu.pipeline_mode<synchronous>, transform_indices = @transform_5, window_bounds = array<i64: 16, 8>}, {pipeline_mode = #tpu.pipeline_mode<synchronous>, transform_indices = @transform_6, window_bounds = array<i64: 1, 8>}, {pipeline_mode = #tpu.pipeline_mode<synchronous>, transform_indices = @transform_7, window_bounds = array<i64: 8, 8>}, {pipeline_mode = #tpu.pipeline_mode<synchronous>, transform_indices = @transform_8, window_bounds = array<i64: 8, 8>}, {pipeline_mode = #tpu.pipeline_mode<synchronous>, transform_indices = @transform_9, window_bounds = array<i64: 1, 8>}, {pipeline_mode = #tpu.pipeline_mode<synchronous>, transform_indices = @transform_10, window_bounds = array<i64: 1, 8>}, {pipeline_mode = #tpu.pipeline_mode<synchronous>, transform_indices = @transform_11, window_bounds = array<i64: 1, 8>}, {transform_indices = @transform_12, window_bounds = array<i64: 16, 8>}, {transform_indices = @transform_13, window_bounds = array<i64: 1, 8, 16>}, {transform_indices = @transform_14, window_bounds = array<i64: 1, 1, 8>}, {transform_indices = @transform_15, window_bounds = array<i64: 1, 8, 8>}, {transform_indices = @transform_16, window_bounds = array<i64: 1, 1, 8>}]} {
    %c0_i32 = arith.constant 0 : i32
    %0 = arith.cmpi eq, %arg1, %c0_i32 : i32
    %1 = arith.extui %0 : i1 to i32
    %c0_i32_0 = arith.constant 0 : i32
    %2 = arith.cmpi ne, %1, %c0_i32_0 : i32
    scf.if %2 {
      %cst_69 = arith.constant 0.000000e+00 : f32
      %110 = vector.broadcast %cst_69 : f32 to vector<8x16xf32>
      %c0_70 = arith.constant 0 : index
      %c0_71 = arith.constant 0 : index
      %111 = vector.load %arg19[%c0_70, %c0_71] : memref<8x16xf32, #tpu.memory_space<vmem>>, vector<8x16xf32>
      tpu.vector_store %arg19[%c0_70, %c0_71], %110 {strides = array<i32>} : memref<8x16xf32, #tpu.memory_space<vmem>>, vector<8x16xf32>,
      %cst_72 = arith.constant 0.000000e+00 : f32
      %112 = vector.broadcast %cst_72 : f32 to vector<1x8xf32>
      %c0_73 = arith.constant 0 : index
      %c0_74 = arith.constant 0 : index
      %113 = vector.load %arg20[%c0_73, %c0_74] : memref<1x8xf32, #tpu.memory_space<vmem>>, vector<1x8xf32>
      tpu.vector_store %arg20[%c0_73, %c0_74], %112 {strides = array<i32>} : memref<1x8xf32, #tpu.memory_space<vmem>>, vector<1x8xf32>,
      %cst_75 = arith.constant 0.000000e+00 : f32
      %114 = vector.broadcast %cst_75 : f32 to vector<8x8xf32>
      %c0_76 = arith.constant 0 : index
      %c0_77 = arith.constant 0 : index
      %115 = vector.load %arg21[%c0_76, %c0_77] : memref<8x8xf32, #tpu.memory_space<vmem>>, vector<8x8xf32>
      tpu.vector_store %arg21[%c0_76, %c0_77], %114 {strides = array<i32>} : memref<8x8xf32, #tpu.memory_space<vmem>>, vector<8x8xf32>,
      %cst_78 = arith.constant 0.000000e+00 : f32
      %116 = vector.broadcast %cst_78 : f32 to vector<1x8xf32>
      %c0_79 = arith.constant 0 : index
      %c0_80 = arith.constant 0 : index
      %117 = vector.load %arg22[%c0_79, %c0_80] : memref<1x8xf32, #tpu.memory_space<vmem>>, vector<1x8xf32>
      tpu.vector_store %arg22[%c0_79, %c0_80], %116 {strides = array<i32>} : memref<1x8xf32, #tpu.memory_space<vmem>>, vector<1x8xf32>,
    } else {
    }
    %c0 = arith.constant 0 : index
    %c0_1 = arith.constant 0 : index
    %3 = vector.load %arg2[%c0, %c0_1] : memref<16x16xf32, #tpu.memory_space<vmem>>, vector<16x16xf32>
    %c0_2 = arith.constant 0 : index
    %c0_3 = arith.constant 0 : index
    %4 = vector.load %arg7[%c0_2, %c0_3] : memref<16x8xf32, #tpu.memory_space<vmem>>, vector<16x8xf32>
    %cst = arith.constant dense<0.000000e+00> : vector<16x8xf32>
    %5 = tpu.matmul %3, %4, %cst {dimension_numbers = #tpu.dot_dimension_numbers<[1], [0], [0], [1], [0, 0, 1, 1], [], []>} : vector<16x16xf32>, vector<16x8xf32>, vector<16x8xf32> -> vector<16x8xf32>
    %c0_4 = arith.constant 0 : index
    %c0_5 = arith.constant 0 : index
    %6 = vector.load %arg8[%c0_4, %c0_5] : memref<1x8xf32, #tpu.memory_space<vmem>>, vector<1x8xf32>
    %7 = vector.broadcast %6 : vector<1x8xf32> to vector<16x8xf32>
    %8 = arith.addf %5, %7 : vector<16x8xf32>
    %cst_6 = arith.constant 0.000000e+00 : f32
    %9 = vector.broadcast %cst_6 : f32 to vector<16x8xf32>
    %10 = arith.maximumf %8, %9 : vector<16x8xf32>
    %c0_7 = arith.constant 0 : index
    %c0_8 = arith.constant 0 : index
    %11 = vector.load %arg14[%c0_7, %c0_8] : memref<16x8xf32, #tpu.memory_space<vmem>>, vector<16x8xf32>
    tpu.vector_store %arg14[%c0_7, %c0_8], %10 {strides = array<i32>} : memref<16x8xf32, #tpu.memory_space<vmem>>, vector<16x8xf32>,
    %c0_9 = arith.constant 0 : index
    %c0_10 = arith.constant 0 : index
    %12 = vector.load %arg9[%c0_9, %c0_10] : memref<8x8xf32, #tpu.memory_space<vmem>>, vector<8x8xf32>
    %cst_11 = arith.constant dense<0.000000e+00> : vector<16x8xf32>
    %13 = tpu.matmul %10, %12, %cst_11 {dimension_numbers = #tpu.dot_dimension_numbers<[1], [0], [0], [1], [0, 0, 1, 1], [], []>} : vector<16x8xf32>, vector<8x8xf32>, vector<16x8xf32> -> vector<16x8xf32>
    %c0_12 = arith.constant 0 : index
    %c0_13 = arith.constant 0 : index
    %14 = vector.load %arg11[%c0_12, %c0_13] : memref<1x8xf32, #tpu.memory_space<vmem>>, vector<1x8xf32>
    %15 = vector.broadcast %14 : vector<1x8xf32> to vector<16x8xf32>
    %16 = arith.addf %13, %15 : vector<16x8xf32>
    %cst_14 = arith.constant dense<0.000000e+00> : vector<16xf32>
    %17 = vector.multi_reduction <add>, %16, %cst_14 [1] : vector<16x8xf32> to vector<16xf32>
    %18 = vector.shape_cast %17 : vector<16xf32> to vector<16x1xf32>
    %cst_15 = arith.constant 8.000000e+00 : f32
    %19 = vector.broadcast %cst_15 : f32 to vector<16x1xf32>
    %20 = arith.divf %18, %19 : vector<16x1xf32>
    %21 = vector.broadcast %20 : vector<16x1xf32> to vector<16x8xf32>
    %22 = arith.subf %16, %21 : vector<16x8xf32>
    %23 = arith.mulf %22, %22 : vector<16x8xf32>
    %cst_16 = arith.constant dense<0.000000e+00> : vector<16xf32>
    %24 = vector.multi_reduction <add>, %23, %cst_16 [1] : vector<16x8xf32> to vector<16xf32>
    %25 = vector.shape_cast %24 : vector<16xf32> to vector<16x1xf32>
    %cst_17 = arith.constant 8.000000e+00 : f32
    %26 = vector.broadcast %cst_17 : f32 to vector<16x1xf32>
    %27 = arith.divf %25, %26 : vector<16x1xf32>
    %cst_18 = arith.constant 9.99999974E-6 : f32
    %28 = vector.broadcast %cst_18 : f32 to vector<16x1xf32>
    %29 = arith.addf %27, %28 : vector<16x1xf32>
    %30 = math.rsqrt %29 : vector<16x1xf32>
    %31 = vector.broadcast %30 : vector<16x1xf32> to vector<16x8xf32>
    %32 = arith.mulf %22, %31 : vector<16x8xf32>
    %c0_19 = arith.constant 0 : index
    %c0_20 = arith.constant 0 : index
    %33 = vector.load %arg12[%c0_19, %c0_20] : memref<1x8xf32, #tpu.memory_space<vmem>>, vector<1x8xf32>
    %34 = vector.broadcast %33 : vector<1x8xf32> to vector<16x8xf32>
    %35 = arith.mulf %32, %34 : vector<16x8xf32>
    %c0_21 = arith.constant 0 : index
    %c0_22 = arith.constant 0 : index
    %36 = vector.load %arg13[%c0_21, %c0_22] : memref<1x8xf32, #tpu.memory_space<vmem>>, vector<1x8xf32>
    %37 = vector.broadcast %36 : vector<1x8xf32> to vector<16x8xf32>
    %38 = arith.addf %35, %37 : vector<16x8xf32>
    %c0_23 = arith.constant 0 : index
    %c0_24 = arith.constant 0 : index
    %39 = vector.load %arg4[%c0_23, %c0_24] : memref<8x32xf32, #tpu.memory_space<vmem>>, vector<8x32xf32>
    %cst_25 = arith.constant dense<0.000000e+00> : vector<16x32xf32>
    %40 = tpu.matmul %38, %39, %cst_25 {dimension_numbers = #tpu.dot_dimension_numbers<[1], [0], [0], [1], [0, 0, 1, 1], [], []>} : vector<16x8xf32>, vector<8x32xf32>, vector<16x32xf32> -> vector<16x32xf32>
    %c0_26 = arith.constant 0 : index
    %c0_27 = arith.constant 0 : index
    %41 = vector.load %arg6[%c0_26, %c0_27] : memref<1x32xf32, #tpu.memory_space<vmem>>, vector<1x32xf32>
    %42 = vector.broadcast %41 : vector<1x32xf32> to vector<16x32xf32>
    %43 = arith.addf %40, %42 : vector<16x32xf32>
    %cst_28 = arith.constant dense<0xFF800000> : vector<16xf32>
    %44 = vector.multi_reduction <maximumf>, %43, %cst_28 [1] : vector<16x32xf32> to vector<16xf32>
    %45 = vector.shape_cast %44 : vector<16xf32> to vector<16x1xf32>
    %46 = vector.broadcast %45 : vector<16x1xf32> to vector<16x32xf32>
    %47 = arith.subf %43, %46 : vector<16x32xf32>
    %48 = math.exp %47 : vector<16x32xf32>
    %cst_29 = arith.constant dense<0.000000e+00> : vector<16xf32>
    %49 = vector.multi_reduction <add>, %48, %cst_29 [1] : vector<16x32xf32> to vector<16xf32>
    %50 = vector.shape_cast %49 : vector<16xf32> to vector<16x1xf32>
    %cst_30 = arith.constant 1.000000e+00 : f32
    %51 = vector.broadcast %cst_30 : f32 to vector<16x1xf32>
    %52 = arith.divf %51, %50 : vector<16x1xf32>
    %53 = vector.broadcast %52 : vector<16x1xf32> to vector<16x32xf32>
    %54 = arith.mulf %48, %53 : vector<16x32xf32>
    %55 = tpu.iota {dimensions = array<i32: 1>} : vector<16x32xi32>
    %c0_31 = arith.constant 0 : index
    %c0_32 = arith.constant 0 : index
    %56 = vector.load %arg3[%c0_31, %c0_32] : memref<16x1xi32, #tpu.memory_space<vmem>>, vector<16x1xi32>
    %57 = vector.broadcast %56 : vector<16x1xi32> to vector<16x32xi32>
    %58 = arith.cmpi eq, %55, %57 : vector<16x32xi32>
    %cst_33 = arith.constant 1.000000e+00 : f32
    %59 = vector.broadcast %cst_33 : f32 to vector<16x32xf32>
    %60 = arith.subf %54, %59 : vector<16x32xf32>
    %61 = arith.select %58, %60, %54 : vector<16x32xi1>, vector<16x32xf32>
    %c0_34 = arith.constant 0 : index
    %c0_35 = arith.constant 0 : index
    %62 = vector.load %arg5[%c0_34, %c0_35] : memref<32x8xf32, #tpu.memory_space<vmem>>, vector<32x8xf32>
    %cst_36 = arith.constant dense<0.000000e+00> : vector<16x8xf32>
    %63 = tpu.matmul %61, %62, %cst_36 {dimension_numbers = #tpu.dot_dimension_numbers<[1], [0], [0], [1], [0, 0, 1, 1], [], []>} : vector<16x32xf32>, vector<32x8xf32>, vector<16x8xf32> -> vector<16x8xf32>
    %c0_37 = arith.constant 0 : index
    %c0_38 = arith.constant 0 : index
    %64 = vector.load %arg12[%c0_37, %c0_38] : memref<1x8xf32, #tpu.memory_space<vmem>>, vector<1x8xf32>
    %65 = vector.broadcast %64 : vector<1x8xf32> to vector<16x8xf32>
    %66 = arith.mulf %63, %65 : vector<16x8xf32>
    %cst_39 = arith.constant dense<0.000000e+00> : vector<16xf32>
    %67 = vector.multi_reduction <add>, %66, %cst_39 [1] : vector<16x8xf32> to vector<16xf32>
    %68 = vector.shape_cast %67 : vector<16xf32> to vector<16x1xf32>
    %cst_40 = arith.constant 8.000000e+00 : f32
    %69 = vector.broadcast %cst_40 : f32 to vector<16x1xf32>
    %70 = arith.divf %68, %69 : vector<16x1xf32>
    %71 = arith.mulf %66, %32 : vector<16x8xf32>
    %cst_41 = arith.constant dense<0.000000e+00> : vector<16xf32>
    %72 = vector.multi_reduction <add>, %71, %cst_41 [1] : vector<16x8xf32> to vector<16xf32>
    %73 = vector.shape_cast %72 : vector<16xf32> to vector<16x1xf32>
    %cst_42 = arith.constant 8.000000e+00 : f32
    %74 = vector.broadcast %cst_42 : f32 to vector<16x1xf32>
    %75 = arith.divf %73, %74 : vector<16x1xf32>
    %76 = vector.broadcast %70 : vector<16x1xf32> to vector<16x8xf32>
    %77 = arith.subf %66, %76 : vector<16x8xf32>
    %78 = vector.broadcast %75 : vector<16x1xf32> to vector<16x8xf32>
    %79 = arith.mulf %32, %78 : vector<16x8xf32>
    %80 = arith.subf %77, %79 : vector<16x8xf32>
    %81 = vector.broadcast %30 : vector<16x1xf32> to vector<16x8xf32>
    %82 = arith.mulf %81, %80 : vector<16x8xf32>
    %c0_43 = arith.constant 0 : index
    %c0_44 = arith.constant 0 : index
    %83 = vector.load %arg22[%c0_43, %c0_44] : memref<1x8xf32, #tpu.memory_space<vmem>>, vector<1x8xf32>
    %cst_45 = arith.constant dense<0.000000e+00> : vector<8xf32>
    %84 = vector.multi_reduction <add>, %82, %cst_45 [0] : vector<16x8xf32> to vector<8xf32>
    %85 = vector.shape_cast %84 : vector<8xf32> to vector<1x8xf32>
    %86 = arith.addf %83, %85 : vector<1x8xf32>
    %c0_46 = arith.constant 0 : index
    %c0_47 = arith.constant 0 : index
    %87 = vector.load %arg22[%c0_46, %c0_47] : memref<1x8xf32, #tpu.memory_space<vmem>>, vector<1x8xf32>
    tpu.vector_store %arg22[%c0_46, %c0_47], %86 {strides = array<i32>} : memref<1x8xf32, #tpu.memory_space<vmem>>, vector<1x8xf32>,
    %c0_48 = arith.constant 0 : index
    %c0_49 = arith.constant 0 : index
    %88 = vector.load %arg21[%c0_48, %c0_49] : memref<8x8xf32, #tpu.memory_space<vmem>>, vector<8x8xf32>
    %cst_50 = arith.constant dense<0.000000e+00> : vector<8x8xf32>
    %89 = tpu.matmul %82, %10, %cst_50 {dimension_numbers = #tpu.dot_dimension_numbers<[0], [0], [1], [1], [0, 1, 1, 1], [], []>} : vector<16x8xf32>, vector<16x8xf32>, vector<8x8xf32> -> vector<8x8xf32>
    %90 = arith.addf %88, %89 : vector<8x8xf32>
    %c0_51 = arith.constant 0 : index
    %c0_52 = arith.constant 0 : index
    %91 = vector.load %arg21[%c0_51, %c0_52] : memref<8x8xf32, #tpu.memory_space<vmem>>, vector<8x8xf32>
    tpu.vector_store %arg21[%c0_51, %c0_52], %90 {strides = array<i32>} : memref<8x8xf32, #tpu.memory_space<vmem>>, vector<8x8xf32>,
    %c0_53 = arith.constant 0 : index
    %c0_54 = arith.constant 0 : index
    %92 = vector.load %arg10[%c0_53, %c0_54] : memref<8x8xf32, #tpu.memory_space<vmem>>, vector<8x8xf32>
    %cst_55 = arith.constant dense<0.000000e+00> : vector<16x8xf32>
    %93 = tpu.matmul %82, %92, %cst_55 {dimension_numbers = #tpu.dot_dimension_numbers<[1], [0], [0], [1], [0, 0, 1, 1], [], []>} : vector<16x8xf32>, vector<8x8xf32>, vector<16x8xf32> -> vector<16x8xf32>
    %cst_56 = arith.constant 0.000000e+00 : f32
    %94 = vector.broadcast %cst_56 : f32 to vector<16x8xf32>
    %95 = arith.cmpf ogt, %8, %94 : vector<16x8xf32>
    %cst_57 = arith.constant 0.000000e+00 : f32
    %96 = vector.broadcast %cst_57 : f32 to vector<16x8xf32>
    %97 = arith.select %95, %93, %96 : vector<16x8xi1>, vector<16x8xf32>
    %c0_58 = arith.constant 0 : index
    %c0_59 = arith.constant 0 : index
    %98 = vector.load %arg20[%c0_58, %c0_59] : memref<1x8xf32, #tpu.memory_space<vmem>>, vector<1x8xf32>
    %cst_60 = arith.constant dense<0.000000e+00> : vector<8xf32>
    %99 = vector.multi_reduction <add>, %97, %cst_60 [0] : vector<16x8xf32> to vector<8xf32>
    %100 = vector.shape_cast %99 : vector<8xf32> to vector<1x8xf32>
    %101 = arith.addf %98, %100 : vector<1x8xf32>
    %c0_61 = arith.constant 0 : index
    %c0_62 = arith.constant 0 : index
    %102 = vector.load %arg20[%c0_61, %c0_62] : memref<1x8xf32, #tpu.memory_space<vmem>>, vector<1x8xf32>
    tpu.vector_store %arg20[%c0_61, %c0_62], %101 {strides = array<i32>} : memref<1x8xf32, #tpu.memory_space<vmem>>, vector<1x8xf32>,
    %c0_63 = arith.constant 0 : index
    %c0_64 = arith.constant 0 : index
    %103 = vector.load %arg19[%c0_63, %c0_64] : memref<8x16xf32, #tpu.memory_space<vmem>>, vector<8x16xf32>
    %cst_65 = arith.constant dense<0.000000e+00> : vector<8x16xf32>
    %104 = tpu.matmul %97, %3, %cst_65 {dimension_numbers = #tpu.dot_dimension_numbers<[0], [0], [1], [1], [0, 1, 1, 1], [], []>} : vector<16x8xf32>, vector<16x16xf32>, vector<8x16xf32> -> vector<8x16xf32>
    %105 = arith.addf %103, %104 : vector<8x16xf32>
    %c0_66 = arith.constant 0 : index
    %c0_67 = arith.constant 0 : index
    %106 = vector.load %arg19[%c0_66, %c0_67] : memref<8x16xf32, #tpu.memory_space<vmem>>, vector<8x16xf32>
    tpu.vector_store %arg19[%c0_66, %c0_67], %105 {strides = array<i32>} : memref<8x16xf32, #tpu.memory_space<vmem>>, vector<8x16xf32>,
    %c3_i32 = arith.constant 3 : i32
    %107 = arith.cmpi eq, %arg1, %c3_i32 : i32
    %108 = arith.extui %107 : i1 to i32
    %c0_i32_68 = arith.constant 0 : i32
    %109 = arith.cmpi ne, %108, %c0_i32_68 : i32
    scf.if %109 {
      %c0_69 = arith.constant 0 : index
      %c0_70 = arith.constant 0 : index
      %110 = vector.load %arg19[%c0_69, %c0_70] : memref<8x16xf32, #tpu.memory_space<vmem>>, vector<8x16xf32>
      %c0_71 = arith.constant 0 : index
      %c0_72 = arith.constant 0 : index
      %c0_73 = arith.constant 0 : index
      %111 = vector.load %arg15[%c0_71, %c0_72, %c0_73] : memref<1x8x16xf32, #tpu.memory_space<vmem>>, vector<1x8x16xf32>
      %112 = vector.shape_cast %111 : vector<1x8x16xf32> to vector<8x16xf32>
      %113 = vector.shape_cast %110 : vector<8x16xf32> to vector<1x8x16xf32>
      tpu.vector_store %arg15[%c0_71, %c0_72, %c0_73], %113 {strides = array<i32>} : memref<1x8x16xf32, #tpu.memory_space<vmem>>, vector<1x8x16xf32>,
      %c0_74 = arith.constant 0 : index
      %c0_75 = arith.constant 0 : index
      %114 = vector.load %arg20[%c0_74, %c0_75] : memref<1x8xf32, #tpu.memory_space<vmem>>, vector<1x8xf32>
      %c0_76 = arith.constant 0 : index
      %c0_77 = arith.constant 0 : index
      %c0_78 = arith.constant 0 : index
      %115 = vector.load %arg16[%c0_76, %c0_77, %c0_78] : memref<1x1x8xf32, #tpu.memory_space<vmem>>, vector<1x1x8xf32>
      %116 = vector.shape_cast %115 : vector<1x1x8xf32> to vector<1x8xf32>
      %117 = vector.shape_cast %114 : vector<1x8xf32> to vector<1x1x8xf32>
      tpu.vector_store %arg16[%c0_76, %c0_77, %c0_78], %117 {strides = array<i32>} : memref<1x1x8xf32, #tpu.memory_space<vmem>>, vector<1x1x8xf32>,
      %c0_79 = arith.constant 0 : index
      %c0_80 = arith.constant 0 : index
      %118 = vector.load %arg21[%c0_79, %c0_80] : memref<8x8xf32, #tpu.memory_space<vmem>>, vector<8x8xf32>
      %c0_81 = arith.constant 0 : index
      %c0_82 = arith.constant 0 : index
      %c0_83 = arith.constant 0 : index
      %119 = vector.load %arg17[%c0_81, %c0_82, %c0_83] : memref<1x8x8xf32, #tpu.memory_space<vmem>>, vector<1x8x8xf32>
      %120 = vector.shape_cast %119 : vector<1x8x8xf32> to vector<8x8xf32>
      %121 = vector.shape_cast %118 : vector<8x8xf32> to vector<1x8x8xf32>
      tpu.vector_store %arg17[%c0_81, %c0_82, %c0_83], %121 {strides = array<i32>} : memref<1x8x8xf32, #tpu.memory_space<vmem>>, vector<1x8x8xf32>,
      %c0_84 = arith.constant 0 : index
      %c0_85 = arith.constant 0 : index
      %122 = vector.load %arg22[%c0_84, %c0_85] : memref<1x8xf32, #tpu.memory_space<vmem>>, vector<1x8xf32>
      %c0_86 = arith.constant 0 : index
      %c0_87 = arith.constant 0 : index
      %c0_88 = arith.constant 0 : index
      %123 = vector.load %arg18[%c0_86, %c0_87, %c0_88] : memref<1x1x8xf32, #tpu.memory_space<vmem>>, vector<1x1x8xf32>
      %124 = vector.shape_cast %123 : vector<1x1x8xf32> to vector<1x8xf32>
      %125 = vector.shape_cast %122 : vector<1x8xf32> to vector<1x1x8xf32>
      tpu.vector_store %arg18[%c0_86, %c0_87, %c0_88], %125 {strides = array<i32>} : memref<1x1x8xf32, #tpu.memory_space<vmem>>, vector<1x1x8xf32>,
    } else {
    }
    return
  }
  func.func @transform_0(%arg0: i32, %arg1: i32) -> (i32, i32) {
    %c4_i32 = arith.constant 4 : i32
    %0 = arith.muli %arg0, %c4_i32 : i32
    %1 = arith.addi %0, %arg1 : i32
    %c0_i32 = arith.constant 0 : i32
    %c0_i32_0 = arith.constant 0 : i32
    return %1, %c0_i32 : i32, i32
  }
  func.func @transform_1(%arg0: i32, %arg1: i32) -> (i32, i32) {
    %c4_i32 = arith.constant 4 : i32
    %0 = arith.muli %arg0, %c4_i32 : i32
    %1 = arith.addi %0, %arg1 : i32
    %c0_i32 = arith.constant 0 : i32
    %c0_i32_0 = arith.constant 0 : i32
    return %1, %c0_i32 : i32, i32
  }
  func.func @transform_2(%arg0: i32, %arg1: i32) -> (i32, i32) {
    %c0_i32 = arith.constant 0 : i32
    %c0_i32_0 = arith.constant 0 : i32
    %c0_i32_1 = arith.constant 0 : i32
    return %c0_i32, %c0_i32_0 : i32, i32
  }
  func.func @transform_3(%arg0: i32, %arg1: i32) -> (i32, i32) {
    %c0_i32 = arith.constant 0 : i32
    %c0_i32_0 = arith.constant 0 : i32
    %c0_i32_1 = arith.constant 0 : i32
    return %c0_i32, %c0_i32_0 : i32, i32
  }
  func.func @transform_4(%arg0: i32, %arg1: i32) -> (i32, i32) {
    %c0_i32 = arith.constant 0 : i32
    %c0_i32_0 = arith.constant 0 : i32
    %c0_i32_1 = arith.constant 0 : i32
    return %c0_i32, %c0_i32_0 : i32, i32
  }
  func.func @transform_5(%arg0: i32, %arg1: i32) -> (i32, i32) {
    %c0_i32 = arith.constant 0 : i32
    %c0_i32_0 = arith.constant 0 : i32
    %c0_i32_1 = arith.constant 0 : i32
    return %c0_i32, %c0_i32_0 : i32, i32
  }
  func.func @transform_6(%arg0: i32, %arg1: i32) -> (i32, i32) {
    %c0_i32 = arith.constant 0 : i32
    %c0_i32_0 = arith.constant 0 : i32
    %c0_i32_1 = arith.constant 0 : i32
    return %c0_i32, %c0_i32_0 : i32, i32
  }
  func.func @transform_7(%arg0: i32, %arg1: i32) -> (i32, i32) {
    %c0_i32 = arith.constant 0 : i32
    %c0_i32_0 = arith.constant 0 : i32
    %c0_i32_1 = arith.constant 0 : i32
    return %c0_i32, %c0_i32_0 : i32, i32
  }
  func.func @transform_8(%arg0: i32, %arg1: i32) -> (i32, i32) {
    %c0_i32 = arith.constant 0 : i32
    %c0_i32_0 = arith.constant 0 : i32
    %c0_i32_1 = arith.constant 0 : i32
    return %c0_i32, %c0_i32_0 : i32, i32
  }
  func.func @transform_9(%arg0: i32, %arg1: i32) -> (i32, i32) {
    %c0_i32 = arith.constant 0 : i32
    %c0_i32_0 = arith.constant 0 : i32
    %c0_i32_1 = arith.constant 0 : i32
    return %c0_i32, %c0_i32_0 : i32, i32
  }
  func.func @transform_10(%arg0: i32, %arg1: i32) -> (i32, i32) {
    %c0_i32 = arith.constant 0 : i32
    %c0_i32_0 = arith.constant 0 : i32
    %c0_i32_1 = arith.constant 0 : i32
    return %c0_i32, %c0_i32_0 : i32, i32
  }
  func.func @transform_11(%arg0: i32, %arg1: i32) -> (i32, i32) {
    %c0_i32 = arith.constant 0 : i32
    %c0_i32_0 = arith.constant 0 : i32
    %c0_i32_1 = arith.constant 0 : i32
    return %c0_i32, %c0_i32_0 : i32, i32
  }
  func.func @transform_12(%arg0: i32, %arg1: i32) -> (i32, i32) {
    %c4_i32 = arith.constant 4 : i32
    %0 = arith.muli %arg0, %c4_i32 : i32
    %1 = arith.addi %0, %arg1 : i32
    %c0_i32 = arith.constant 0 : i32
    %c0_i32_0 = arith.constant 0 : i32
    return %1, %c0_i32 : i32, i32
  }
  func.func @transform_13(%arg0: i32, %arg1: i32) -> (i32, i32, i32) {
    %c0_i32 = arith.constant 0 : i32
    %c0_i32_0 = arith.constant 0 : i32
    %c0_i32_1 = arith.constant 0 : i32
    return %arg0, %c0_i32, %c0_i32_0 : i32, i32, i32
  }
  func.func @transform_14(%arg0: i32, %arg1: i32) -> (i32, i32, i32) {
    %c0_i32 = arith.constant 0 : i32
    %c0_i32_0 = arith.constant 0 : i32
    %c0_i32_1 = arith.constant 0 : i32
    return %arg0, %c0_i32, %c0_i32_0 : i32, i32, i32
  }
  func.func @transform_15(%arg0: i32, %arg1: i32) -> (i32, i32, i32) {
    %c0_i32 = arith.constant 0 : i32
    %c0_i32_0 = arith.constant 0 : i32
    %c0_i32_1 = arith.constant 0 : i32
    return %arg0, %c0_i32, %c0_i32_0 : i32, i32, i32
  }
  func.func @transform_16(%arg0: i32, %arg1: i32) -> (i32, i32, i32) {
    %c0_i32 = arith.constant 0 : i32
    %c0_i32_0 = arith.constant 0 : i32
    %c0_i32_1 = arith.constant 0 : i32
    return %arg0, %c0_i32, %c0_i32_0 : i32, i32, i32
  }
}

module attributes {stable_mosaic.version = 11 : i64} {
  func.func @fast_step_kernel(%arg0: i32, %arg1: memref<8x8x8xf32, #tpu.memory_space<vmem>>, %arg2: memref<8x8x1xi32, #tpu.memory_space<vmem>>, %arg3: memref<8x32xf32, #tpu.memory_space<vmem>>, %arg4: memref<1x32xf32, #tpu.memory_space<vmem>>, %arg5: memref<8x8xf32, #tpu.memory_space<vmem>>, %arg6: memref<1x8xf32, #tpu.memory_space<vmem>>, %arg7: memref<1x8xf32, #tpu.memory_space<vmem>>, %arg8: memref<1x8xf32, #tpu.memory_space<vmem>>, %arg9: memref<8x8xf32, #tpu.memory_space<vmem>>, %arg10: memref<1x8xf32, #tpu.memory_space<vmem>>, %arg11: memref<8x8xf32, #tpu.memory_space<vmem>>, %arg12: memref<1x8xf32, #tpu.memory_space<vmem>>, %arg13: memref<8x8xf32, #tpu.memory_space<vmem>>) attributes {dimension_semantics = [#tpu.dimension_semantics<parallel>], iteration_bounds = array<i64: 2>, scalar_prefetch = 0 : i64, scratch_operands = 0 : i64, tpu.core_type = #tpu.core_type<tc>, window_params = [{transform_indices = @transform_0, window_bounds = array<i64: 8, 8, 8>}, {transform_indices = @transform_1, window_bounds = array<i64: 8, 8, 1>}, {pipeline_mode = #tpu.pipeline_mode<synchronous>, transform_indices = @transform_2, window_bounds = array<i64: 8, 32>}, {pipeline_mode = #tpu.pipeline_mode<synchronous>, transform_indices = @transform_3, window_bounds = array<i64: 1, 32>}, {pipeline_mode = #tpu.pipeline_mode<synchronous>, transform_indices = @transform_4, window_bounds = array<i64: 8, 8>}, {pipeline_mode = #tpu.pipeline_mode<synchronous>, transform_indices = @transform_5, window_bounds = array<i64: 1, 8>}, {pipeline_mode = #tpu.pipeline_mode<synchronous>, transform_indices = @transform_6, window_bounds = array<i64: 1, 8>}, {pipeline_mode = #tpu.pipeline_mode<synchronous>, transform_indices = @transform_7, window_bounds = array<i64: 1, 8>}, {pipeline_mode = #tpu.pipeline_mode<synchronous>, transform_indices = @transform_8, window_bounds = array<i64: 8, 8>}, {pipeline_mode = #tpu.pipeline_mode<synchronous>, transform_indices = @transform_9, window_bounds = array<i64: 1, 8>}, {pipeline_mode = #tpu.pipeline_mode<synchronous>, transform_indices = @transform_10, window_bounds = array<i64: 8, 8>}, {pipeline_mode = #tpu.pipeline_mode<synchronous>, transform_indices = @transform_11, window_bounds = array<i64: 1, 8>}, {transform_indices = @transform_12, window_bounds = array<i64: 8, 8>}]} {
    %c0 = arith.constant 0 : index
    %c0_0 = arith.constant 0 : index
    %c0_1 = arith.constant 0 : index
    %0 = vector.load %arg1[%c0, %c0_0, %c0_1] : memref<8x8x8xf32, #tpu.memory_space<vmem>>, vector<8x8x8xf32>
    "tpu.trace_start"() <{level = 10 : i32, message = "tbf,tcf->tbc"}> : () -> ()
    %cst = arith.constant dense<0.000000e+00> : vector<8x8x8xf32>
    %1 = tpu.matmul %0, %0, %cst {dimension_numbers = #tpu.dot_dimension_numbers<[2], [2], [1], [1], [0, 0, 0, 1, 1, 1], [0], [0]>} : vector<8x8x8xf32>, vector<8x8x8xf32>, vector<8x8x8xf32> -> vector<8x8x8xf32>
    "tpu.trace_stop"() : () -> ()
    %2 = vector.shape_cast %1 : vector<8x8x8xf32> to vector<64x8xf32>
    %c0_2 = arith.constant 0 : index
    %c0_3 = arith.constant 0 : index
    %3 = vector.load %arg11[%c0_2, %c0_3] : memref<8x8xf32, #tpu.memory_space<vmem>>, vector<8x8xf32>
    %cst_4 = arith.constant dense<0.000000e+00> : vector<64x8xf32>
    %4 = tpu.matmul %2, %3, %cst_4 {dimension_numbers = #tpu.dot_dimension_numbers<[1], [0], [0], [1], [0, 0, 1, 1], [], []>} : vector<64x8xf32>, vector<8x8xf32>, vector<64x8xf32> -> vector<64x8xf32>
    %5 = vector.shape_cast %4 : vector<64x8xf32> to vector<8x8x8xf32>
    %c0_5 = arith.constant 0 : index
    %c0_6 = arith.constant 0 : index
    %6 = vector.load %arg5[%c0_5, %c0_6] : memref<8x8xf32, #tpu.memory_space<vmem>>, vector<8x8xf32>
    %c0_7 = arith.constant 0 : index
    %c0_8 = arith.constant 0 : index
    %7 = vector.load %arg9[%c0_7, %c0_8] : memref<8x8xf32, #tpu.memory_space<vmem>>, vector<8x8xf32>
    %8 = vector.shape_cast %7 : vector<8x8xf32> to vector<1x8x8xf32>
    %9 = vector.broadcast %8 : vector<1x8x8xf32> to vector<8x8x8xf32>
    %10 = arith.mulf %9, %5 : vector<8x8x8xf32>
    %11 = vector.shape_cast %6 : vector<8x8xf32> to vector<1x8x8xf32>
    %12 = vector.broadcast %11 : vector<1x8x8xf32> to vector<8x8x8xf32>
    %13 = arith.subf %12, %10 : vector<8x8x8xf32>
    %c0_9 = arith.constant 0 : index
    %c0_10 = arith.constant 0 : index
    %14 = vector.load %arg12[%c0_9, %c0_10] : memref<1x8xf32, #tpu.memory_space<vmem>>, vector<1x8xf32>
    %15 = vector.shape_cast %14 : vector<1x8xf32> to vector<1x1x8xf32>
    %16 = vector.broadcast %15 : vector<1x1x8xf32> to vector<8x1x8xf32>
    "tpu.trace_start"() <{level = 10 : i32, message = "tob,tbk->tok"}> : () -> ()
    %cst_11 = arith.constant dense<0.000000e+00> : vector<8x1x8xf32>
    %17 = tpu.matmul %16, %1, %cst_11 {dimension_numbers = #tpu.dot_dimension_numbers<[2], [1], [1], [2], [0, 0, 0, 1, 1, 2], [0], [0]>} : vector<8x1x8xf32>, vector<8x8x8xf32>, vector<8x1x8xf32> -> vector<8x1x8xf32>
    "tpu.trace_stop"() : () -> ()
    %c0_12 = arith.constant 0 : index
    %c0_13 = arith.constant 0 : index
    %18 = vector.load %arg6[%c0_12, %c0_13] : memref<1x8xf32, #tpu.memory_space<vmem>>, vector<1x8xf32>
    %19 = vector.shape_cast %18 : vector<1x8xf32> to vector<1x1x8xf32>
    %c0_14 = arith.constant 0 : index
    %c0_15 = arith.constant 0 : index
    %20 = vector.load %arg10[%c0_14, %c0_15] : memref<1x8xf32, #tpu.memory_space<vmem>>, vector<1x8xf32>
    %21 = vector.shape_cast %20 : vector<1x8xf32> to vector<1x1x8xf32>
    %22 = vector.broadcast %21 : vector<1x1x8xf32> to vector<8x1x8xf32>
    %23 = arith.mulf %22, %17 : vector<8x1x8xf32>
    %24 = vector.broadcast %19 : vector<1x1x8xf32> to vector<8x1x8xf32>
    %25 = arith.subf %24, %23 : vector<8x1x8xf32>
    "tpu.trace_start"() <{level = 10 : i32, message = "tbf,tkf->tbk"}> : () -> ()
    %cst_16 = arith.constant dense<0.000000e+00> : vector<8x8x8xf32>
    %26 = tpu.matmul %0, %13, %cst_16 {dimension_numbers = #tpu.dot_dimension_numbers<[2], [2], [1], [1], [0, 0, 0, 1, 1, 1], [0], [0]>} : vector<8x8x8xf32>, vector<8x8x8xf32>, vector<8x8x8xf32> -> vector<8x8x8xf32>
    "tpu.trace_stop"() : () -> ()
    %27 = vector.broadcast %25 : vector<8x1x8xf32> to vector<8x8x8xf32>
    %28 = arith.addf %26, %27 : vector<8x8x8xf32>
    %cst_17 = arith.constant dense<0.000000e+00> : vector<8x8xf32>
    %29 = vector.multi_reduction <add>, %28, %cst_17 [2] : vector<8x8x8xf32> to vector<8x8xf32>
    %30 = vector.shape_cast %29 : vector<8x8xf32> to vector<8x8x1xf32>
    %cst_18 = arith.constant 8.000000e+00 : f32
    %31 = vector.broadcast %cst_18 : f32 to vector<8x8x1xf32>
    %32 = arith.divf %30, %31 : vector<8x8x1xf32>
    %33 = vector.broadcast %32 : vector<8x8x1xf32> to vector<8x8x8xf32>
    %34 = arith.subf %28, %33 : vector<8x8x8xf32>
    %35 = arith.mulf %34, %34 : vector<8x8x8xf32>
    %cst_19 = arith.constant dense<0.000000e+00> : vector<8x8xf32>
    %36 = vector.multi_reduction <add>, %35, %cst_19 [2] : vector<8x8x8xf32> to vector<8x8xf32>
    %37 = vector.shape_cast %36 : vector<8x8xf32> to vector<8x8x1xf32>
    %cst_20 = arith.constant 8.000000e+00 : f32
    %38 = vector.broadcast %cst_20 : f32 to vector<8x8x1xf32>
    %39 = arith.divf %37, %38 : vector<8x8x1xf32>
    %cst_21 = arith.constant 9.99999974E-6 : f32
    %40 = vector.broadcast %cst_21 : f32 to vector<8x8x1xf32>
    %41 = arith.addf %39, %40 : vector<8x8x1xf32>
    %42 = math.rsqrt %41 : vector<8x8x1xf32>
    %43 = vector.broadcast %42 : vector<8x8x1xf32> to vector<8x8x8xf32>
    %44 = arith.mulf %34, %43 : vector<8x8x8xf32>
    %c0_22 = arith.constant 0 : index
    %c0_23 = arith.constant 0 : index
    %45 = vector.load %arg7[%c0_22, %c0_23] : memref<1x8xf32, #tpu.memory_space<vmem>>, vector<1x8xf32>
    %46 = vector.shape_cast %45 : vector<1x8xf32> to vector<1x1x8xf32>
    %47 = vector.broadcast %46 : vector<1x1x8xf32> to vector<8x8x8xf32>
    %48 = arith.mulf %44, %47 : vector<8x8x8xf32>
    %c0_24 = arith.constant 0 : index
    %c0_25 = arith.constant 0 : index
    %49 = vector.load %arg8[%c0_24, %c0_25] : memref<1x8xf32, #tpu.memory_space<vmem>>, vector<1x8xf32>
    %50 = vector.shape_cast %49 : vector<1x8xf32> to vector<1x1x8xf32>
    %51 = vector.broadcast %50 : vector<1x1x8xf32> to vector<8x8x8xf32>
    %52 = arith.addf %48, %51 : vector<8x8x8xf32>
    %53 = vector.shape_cast %52 : vector<8x8x8xf32> to vector<64x8xf32>
    %c0_26 = arith.constant 0 : index
    %c0_27 = arith.constant 0 : index
    %54 = vector.load %arg3[%c0_26, %c0_27] : memref<8x32xf32, #tpu.memory_space<vmem>>, vector<8x32xf32>
    %cst_28 = arith.constant dense<0.000000e+00> : vector<64x32xf32>
    %55 = tpu.matmul %53, %54, %cst_28 {dimension_numbers = #tpu.dot_dimension_numbers<[1], [0], [0], [1], [0, 0, 1, 1], [], []>} : vector<64x8xf32>, vector<8x32xf32>, vector<64x32xf32> -> vector<64x32xf32>
    %c0_29 = arith.constant 0 : index
    %c0_30 = arith.constant 0 : index
    %56 = vector.load %arg4[%c0_29, %c0_30] : memref<1x32xf32, #tpu.memory_space<vmem>>, vector<1x32xf32>
    %57 = vector.broadcast %56 : vector<1x32xf32> to vector<64x32xf32>
    %58 = arith.addf %55, %57 : vector<64x32xf32>
    %59 = vector.shape_cast %58 : vector<64x32xf32> to vector<8x8x32xf32>
    %cst_31 = arith.constant dense<0xFF800000> : vector<8x8xf32>
    %60 = vector.multi_reduction <maximumf>, %59, %cst_31 [2] : vector<8x8x32xf32> to vector<8x8xf32>
    %61 = vector.shape_cast %60 : vector<8x8xf32> to vector<8x8x1xf32>
    %62 = vector.broadcast %61 : vector<8x8x1xf32> to vector<8x8x32xf32>
    %63 = arith.subf %59, %62 : vector<8x8x32xf32>
    %64 = math.exp %63 : vector<8x8x32xf32>
    %cst_32 = arith.constant dense<0.000000e+00> : vector<8x8xf32>
    %65 = vector.multi_reduction <add>, %64, %cst_32 [2] : vector<8x8x32xf32> to vector<8x8xf32>
    %66 = tpu.iota {dimensions = array<i32: 2>} : vector<8x8x32xi32>
    %c0_33 = arith.constant 0 : index
    %c0_34 = arith.constant 0 : index
    %c0_35 = arith.constant 0 : index
    %67 = vector.load %arg2[%c0_33, %c0_34, %c0_35] : memref<8x8x1xi32, #tpu.memory_space<vmem>>, vector<8x8x1xi32>
    %68 = vector.broadcast %67 : vector<8x8x1xi32> to vector<8x8x32xi32>
    %69 = arith.cmpi eq, %66, %68 : vector<8x8x32xi32>
    %cst_36 = arith.constant 0.000000e+00 : f32
    %70 = vector.broadcast %cst_36 : f32 to vector<8x8x32xf32>
    %71 = arith.select %69, %63, %70 : vector<8x8x32xi1>, vector<8x8x32xf32>
    %cst_37 = arith.constant dense<0.000000e+00> : vector<8x8xf32>
    %72 = vector.multi_reduction <add>, %71, %cst_37 [2] : vector<8x8x32xf32> to vector<8x8xf32>
    %73 = math.log %65 : vector<8x8xf32>
    %74 = arith.subf %73, %72 : vector<8x8xf32>
    %c0_38 = arith.constant 0 : index
    %c0_39 = arith.constant 0 : index
    %75 = vector.load %arg13[%c0_38, %c0_39] : memref<8x8xf32, #tpu.memory_space<vmem>>, vector<8x8xf32>
    tpu.vector_store %arg13[%c0_38, %c0_39], %74 {strides = array<i32>} : memref<8x8xf32, #tpu.memory_space<vmem>>, vector<8x8xf32>,
    return
  }
  func.func @transform_0(%arg0: i32) -> (i32, i32, i32) {
    %c0_i32 = arith.constant 0 : i32
    %c0_i32_0 = arith.constant 0 : i32
    %c0_i32_1 = arith.constant 0 : i32
    return %arg0, %c0_i32, %c0_i32_0 : i32, i32, i32
  }
  func.func @transform_1(%arg0: i32) -> (i32, i32, i32) {
    %c0_i32 = arith.constant 0 : i32
    %c0_i32_0 = arith.constant 0 : i32
    %c0_i32_1 = arith.constant 0 : i32
    return %arg0, %c0_i32, %c0_i32_0 : i32, i32, i32
  }
  func.func @transform_2(%arg0: i32) -> (i32, i32) {
    %c0_i32 = arith.constant 0 : i32
    %c0_i32_0 = arith.constant 0 : i32
    %c0_i32_1 = arith.constant 0 : i32
    return %c0_i32, %c0_i32_0 : i32, i32
  }
  func.func @transform_3(%arg0: i32) -> (i32, i32) {
    %c0_i32 = arith.constant 0 : i32
    %c0_i32_0 = arith.constant 0 : i32
    %c0_i32_1 = arith.constant 0 : i32
    return %c0_i32, %c0_i32_0 : i32, i32
  }
  func.func @transform_4(%arg0: i32) -> (i32, i32) {
    %c0_i32 = arith.constant 0 : i32
    %c0_i32_0 = arith.constant 0 : i32
    %c0_i32_1 = arith.constant 0 : i32
    return %c0_i32, %c0_i32_0 : i32, i32
  }
  func.func @transform_5(%arg0: i32) -> (i32, i32) {
    %c0_i32 = arith.constant 0 : i32
    %c0_i32_0 = arith.constant 0 : i32
    %c0_i32_1 = arith.constant 0 : i32
    return %c0_i32, %c0_i32_0 : i32, i32
  }
  func.func @transform_6(%arg0: i32) -> (i32, i32) {
    %c0_i32 = arith.constant 0 : i32
    %c0_i32_0 = arith.constant 0 : i32
    %c0_i32_1 = arith.constant 0 : i32
    return %c0_i32, %c0_i32_0 : i32, i32
  }
  func.func @transform_7(%arg0: i32) -> (i32, i32) {
    %c0_i32 = arith.constant 0 : i32
    %c0_i32_0 = arith.constant 0 : i32
    %c0_i32_1 = arith.constant 0 : i32
    return %c0_i32, %c0_i32_0 : i32, i32
  }
  func.func @transform_8(%arg0: i32) -> (i32, i32) {
    %c0_i32 = arith.constant 0 : i32
    %c0_i32_0 = arith.constant 0 : i32
    %c0_i32_1 = arith.constant 0 : i32
    return %c0_i32, %c0_i32_0 : i32, i32
  }
  func.func @transform_9(%arg0: i32) -> (i32, i32) {
    %c0_i32 = arith.constant 0 : i32
    %c0_i32_0 = arith.constant 0 : i32
    %c0_i32_1 = arith.constant 0 : i32
    return %c0_i32, %c0_i32_0 : i32, i32
  }
  func.func @transform_10(%arg0: i32) -> (i32, i32) {
    %c0_i32 = arith.constant 0 : i32
    %c0_i32_0 = arith.constant 0 : i32
    %c0_i32_1 = arith.constant 0 : i32
    return %c0_i32, %c0_i32_0 : i32, i32
  }
  func.func @transform_11(%arg0: i32) -> (i32, i32) {
    %c0_i32 = arith.constant 0 : i32
    %c0_i32_0 = arith.constant 0 : i32
    %c0_i32_1 = arith.constant 0 : i32
    return %c0_i32, %c0_i32_0 : i32, i32
  }
  func.func @transform_12(%arg0: i32) -> (i32, i32) {
    %c0_i32 = arith.constant 0 : i32
    %c0_i32_0 = arith.constant 0 : i32
    return %arg0, %c0_i32 : i32, i32
  }
}

</mosaic_0001>

<llo_original>
// kernel: fast_weight_layer.2
$region0: #{fast_weight_layer.2}
  #allocation0 [shape = 'u32[]', space=smem, size = 0x4, offset = 0x4, fixed_abs, tag = 'smem constant byte address 0x4 - core index']
  #allocation1 [shape = 'u32[144,128]{1,0:T(1,128)}', space=vmem, size = 0x12000, scoped, tag = 'internal scratch']
  #allocation2 [shape = 'f32[8,16]{1,0:T(8,128)}', space=vmem, size = 0x1000, scoped, tag = 'scratch operand']
  #allocation3 [shape = 'f32[1,8]{1,0:T(1,128)}', space=vmem, size = 0x200, scoped, tag = 'scratch operand']
  #allocation4 [shape = 'f32[8,8]{1,0:T(8,128)}', space=vmem, size = 0x1000, scoped, tag = 'scratch operand']
  #allocation5 [shape = 'f32[1,8]{1,0:T(1,128)}', space=vmem, size = 0x200, scoped, tag = 'scratch operand']
  %s0 = inlined_call_operand.hbm [shape: f32[128,16], index: 0, kind: input, shape index: {}]
  %s1 = inlined_call_operand.hbm [shape: s32[128,1], index: 1, kind: input, shape index: {}]
  %s2 = inlined_call_operand.hbm [shape: f32[8,32], index: 2, kind: input, shape index: {}]
  %s3 = inlined_call_operand.hbm [shape: f32[32,8], index: 3, kind: input, shape index: {}]
  %s4 = inlined_call_operand.hbm [shape: f32[1,32], index: 4, kind: input, shape index: {}]
  %s5 = inlined_call_operand.hbm [shape: f32[16,8], index: 5, kind: input, shape index: {}]
  %s6 = inlined_call_operand.hbm [shape: f32[1,8], index: 6, kind: input, shape index: {}]
  %s7 = inlined_call_operand.hbm [shape: f32[8,8], index: 7, kind: input, shape index: {}]
  %s8 = inlined_call_operand.hbm [shape: f32[8,8], index: 8, kind: input, shape index: {}]
  %s9 = inlined_call_operand.hbm [shape: f32[1,8], index: 9, kind: input, shape index: {}]
  %s10 = inlined_call_operand.hbm [shape: f32[1,8], index: 10, kind: input, shape index: {}]
  %s11 = inlined_call_operand.hbm [shape: f32[1,8], index: 11, kind: input, shape index: {}]
  %s12 = inlined_call_operand.hbm [shape: f32[128,8], index: 12, kind: output, shape index: {0}]
  %s13 = inlined_call_operand.hbm [shape: f32[2,8,16], index: 13, kind: output, shape index: {1}]
  %s14 = inlined_call_operand.hbm [shape: f32[2,1,8], index: 14, kind: output, shape index: {2}]
  %s15 = inlined_call_operand.hbm [shape: f32[2,8,8], index: 15, kind: output, shape index: {3}]
  %s16 = inlined_call_operand.hbm [shape: f32[2,1,8], index: 16, kind: output, shape index: {4}]
  %17 = xla_tuple %s12, %s13, %s14, %s15, %s16
  %s18 = sld [smem:[#allocation0]]
  $region169: #{fast_weight_layer.2} parent=0
    _
  %s20 = ssub.s32 1, %s18
  %s21 = scalar_select 0, %s20, %s18
  $region1: #{fast_weight_layer.2} parent=0
    #allocation6 [shape = 'u8[16384]{0}', space=vmem, size = 0x4000, scoped, tag = 'input window, operand 0']
    #allocation7 [shape = 's32[2]{0}', space=sflag, size = 0x8, scoped, tag = 'scoped memory for fast_weight_layer.2']
    #allocation8 [shape = 's32[2]{0}', space=sflag, size = 0x8, scoped, tag = 'scoped memory for fast_weight_layer.2']
    #allocation9 [shape = 'u8[16384]{0}', space=vmem, size = 0x4000, scoped, tag = 'input window, operand 1']
    #allocation10 [shape = 's32[2]{0}', space=sflag, size = 0x8, scoped, tag = 'scoped memory for fast_weight_layer.2']
    #allocation11 [shape = 'u8[4096]{0}', space=vmem, size = 0x1000, scoped, tag = 'input window, operand 2, single buffered']
    #allocation12 [shape = 'u8[16384]{0}', space=vmem, size = 0x4000, scoped, tag = 'input window, operand 3, single buffered']
    #allocation13 [shape = 's32[1]{0}', space=sflag, size = 0x4, scoped, tag = 'scoped memory for fast_weight_layer.2']
    #allocation14 [shape = 'u8[512]{0}', space=vmem, size = 0x400, scoped, tag = 'input window, operand 4, single buffered']
    #allocation15 [shape = 'u8[8192]{0}', space=vmem, size = 0x2000, scoped, tag = 'input window, operand 5, single buffered']
    #allocation16 [shape = 's32[1]{0}', space=sflag, size = 0x4, scoped, tag = 'scoped memory for fast_weight_layer.2']
    #allocation17 [shape = 'u8[512]{0}', space=vmem, size = 0x400, scoped, tag = 'input window, operand 6, single buffered']
    #allocation18 [shape = 'u8[4096]{0}', space=vmem, size = 0x1000, scoped, tag = 'input window, operand 7, single buffered']
    #allocation19 [shape = 's32[1]{0}', space=sflag, size = 0x4, scoped, tag = 'scoped memory for fast_weight_layer.2']
    #allocation20 [shape = 'u8[4096]{0}', space=vmem, size = 0x1000, scoped, tag = 'input window, operand 8, single buffered']
    #allocation21 [shape = 'u8[512]{0}', space=vmem, size = 0x400, scoped, tag = 'input window, operand 9, single buffered']
    #allocation22 [shape = 's32[1]{0}', space=sflag, size = 0x4, scoped, tag = 'scoped memory for fast_weight_layer.2']
    #allocation23 [shape = 'u8[512]{0}', space=vmem, size = 0x400, scoped, tag = 'input window, operand 10, single buffered']
    #allocation24 [shape = 'u8[512]{0}', space=vmem, size = 0x400, scoped, tag = 'input window, operand 11, single buffered']
    #allocation25 [shape = 's32[1]{0}', space=sflag, size = 0x4, scoped, tag = 'scoped memory for fast_weight_layer.2']
    #allocation26 [shape = 'u8[16384]{0}', space=vmem, size = 0x4000, scoped, tag = 'output window, operand 0']
    #allocation27 [shape = 'u8[8192]{0}', space=vmem, size = 0x2000, scoped, tag = 'output window, operand 1']
    #allocation28 [shape = 's32[2]{0}', space=sflag, size = 0x8, scoped, tag = 'scoped memory for fast_weight_layer.2']
    #allocation29 [shape = 'u8[1024]{0}', space=vmem, size = 0x400, scoped, tag = 'output window, operand 2']
    #allocation30 [shape = 'u8[8192]{0}', space=vmem, size = 0x2000, scoped, tag = 'output window, operand 3']
    #allocation31 [shape = 's32[2]{0}', space=sflag, size = 0x8, scoped, tag = 'scoped memory for fast_weight_layer.2']
    #allocation32 [shape = 'u8[1024]{0}', space=vmem, size = 0x400, scoped, tag = 'output window, operand 4']
    %22 = vsyncpa [#allocation7], 0
    %s23 = scalar_lea.sflag [#allocation7], 1
    %24 = vsyncpa %s23, 0
    %25 = vsyncpa [#allocation10], 0
    %s26 = scalar_lea.sflag [#allocation10], 1
    %27 = vsyncpa %s26, 0
    %28 = vsyncpa [#allocation13], 0
    %29 = vsyncpa [#allocation16], 0
    %30 = vsyncpa [#allocation19], 0
    %31 = vsyncpa [#allocation22], 0
    %32 = vsyncpa [#allocation25], 0
    %33 = vsyncpa [#allocation8], 0
    %s34 = scalar_lea.sflag [#allocation8], 1
    %35 = vsyncpa %s34, 0
    %36 = vsyncpa [#allocation28], 0
    %s37 = scalar_lea.sflag [#allocation28], 1
    %38 = vsyncpa %s37, 0
    %39 = vsyncpa [#allocation31], 0
    %s40 = scalar_lea.sflag [#allocation31], 1
    %41 = vsyncpa %s40, 0
    loop: start=0, step=1, limit=10
    $region2: #{fast_weight_layer.2} parent=1 // loop_pre_header
      _
    $region3: #{fast_weight_layer.2} parent=1 // loop_header
      %s43 = sphi 0, %s47
      %p44 = scmp.ge.s32.totalorder %s43, 10
      %s50 = sphi 0, %s62
      %s51 = sphi 0, %s58
      %s52 = sphi 0, %s50
      %s53 = sphi 0, %s51
      %s54 = sphi 0, %s52
      %s55 = sphi 0, %s53
      %s69 = sphi 0, %s71
      %s72 = sphi 0, %s69
      %s73 = sphi 0, %s72
      %s89 = sphi 0, %s73
      %s99 = sphi 0, %s101
      %s102 = sphi 0, %s99
      %s103 = sphi 0, %s102
      %s119 = sphi 0, %s103
      %s123 = sphi 0, %s123
      %s125 = sphi 0, %s123
      %s126 = sphi 0, %s125
      %s140 = sphi 0, %s126
      %s144 = sphi 0, %s144
      %s146 = sphi 0, %s144
      %s147 = sphi 0, %s146
      %s161 = sphi 0, %s147
      %s165 = sphi 0, %s165
      %s167 = sphi 0, %s165
      %s168 = sphi 0, %s167
      %s182 = sphi 0, %s168
      %s186 = sphi 0, %s186
      %s188 = sphi 0, %s186
      %s189 = sphi 0, %s188
      %s203 = sphi 0, %s189
      %s207 = sphi 0, %s207
      %s209 = sphi 0, %s207
      %s210 = sphi 0, %s209
      %s224 = sphi 0, %s210
      %s228 = sphi 0, %s228
      %s230 = sphi 0, %s228
      %s231 = sphi 0, %s230
      %s245 = sphi 0, %s231
      %s249 = sphi 0, %s249
      %s251 = sphi 0, %s249
      %s252 = sphi 0, %s251
      %s266 = sphi 0, %s252
      %s270 = sphi 0, %s270
      %s272 = sphi 0, %s270
      %s273 = sphi 0, %s272
      %s287 = sphi 0, %s273
      %s291 = sphi 0, %s291
      %s293 = sphi 0, %s291
      %s294 = sphi 0, %s293
      %s308 = sphi 0, %s294
      %s312 = sphi 0, %s312
      %s314 = sphi 0, %s312
      %s315 = sphi 0, %s314
      %s329 = sphi 0, %s315
      %s339 = sphi 0, %s341
      %s342 = sphi 0, %s339
      %s343 = sphi 0, %s342
      %s359 = sphi 0, %s343
      %s365 = sphi 0, %s367
      %s368 = sphi 0, %s365
      %s369 = sphi 0, %s368
      %s385 = sphi 0, %s369
      %s391 = sphi 0, %s393
      %s394 = sphi 0, %s391
      %s395 = sphi 0, %s394
      %s411 = sphi 0, %s395
      %s417 = sphi 0, %s419
      %s420 = sphi 0, %s417
      %s421 = sphi 0, %s420
      %s437 = sphi 0, %s421
      %s443 = sphi 0, %s445
      %s446 = sphi 0, %s443
      %s447 = sphi 0, %s446
      %s463 = sphi 0, %s447
    $region4: #{fast_weight_layer.2} parent=1 // loop_header_branch
      %46 = sbr.rel (%p44) target = $region8
    $region5: #{fast_weight_layer.2} parent=1 // loop_body
      %s48 = ssub.s32 %s43, 1
      %s49 = ssub.s32 %s43, 2
      %s56 = sadd.s32 1, %s51
      %p57 = scmp.ge.s32.totalorder %s56, 4
      %s58 = scalar_select %p57, 0, %s56
      %s59 = sadd.s32 1, %s50
      %s60 = scalar_select %p57, %s59, %s50
      %p61 = scmp.ge.s32.totalorder %s60, 2
      %s62 = scalar_select %p61, 0, %s60
      %s63 = smul.u32 %s50, 4
      %s64 = sadd.s32 %s63, %s51
      %s65 = smul.u32 %s62, 4
      %s66 = sadd.s32 %s65, %s58
      %s67 = ssub.s32 %s64, %s66
      %p68 = scmp.eq.s32.totalorder %s67, 0
      %s70 = sadd.s32 %s69, 1
      %s71 = scalar_select %p68, %s69, %s70
      %p74 = pneg %p68
      %p75 = scmp.eq.s32.totalorder %s43, 7
      %p76 = por %p74, %p75
      %p77 = scmp.ne.s32.totalorder %s69, %s72
      %p78 = scmp.eq.s32.totalorder %s43, 0
      %p79 = por %p77, %p78
      %p80 = scmp.ne.s32.totalorder %s69, %s72
      %p81 = scmp.eq.s32.totalorder %s48, 7
      %p82 = por %p80, %p81
      %p83 = scmp.ne.s32.totalorder %s72, %s73
      %p84 = scmp.eq.s32.totalorder %s48, 0
      %p85 = por %p83, %p84
      %p86 = scmp.ne.s32.totalorder %s72, %s73
      %p87 = scmp.eq.s32.totalorder %s49, 7
      %p88 = por %p86, %p87
      %p90 = scmp.ne.s32.totalorder %s73, %s89
      %p91 = scmp.eq.s32.totalorder %s49, 0
      %p92 = por %p90, %p91
      %s93 = smul.u32 %s50, 4
      %s94 = sadd.s32 %s93, %s51
      %s95 = smul.u32 %s62, 4
      %s96 = sadd.s32 %s95, %s58
      %s97 = ssub.s32 %s94, %s96
      %p98 = scmp.eq.s32.totalorder %s97, 0
      %s100 = sadd.s32 %s99, 1
      %s101 = scalar_select %p98, %s99, %s100
      %p104 = pneg %p98
      %p105 = scmp.eq.s32.totalorder %s43, 7
      %p106 = por %p104, %p105
      %p107 = scmp.ne.s32.totalorder %s99, %s102
      %p108 = scmp.eq.s32.totalorder %s43, 0
      %p109 = por %p107, %p108
      %p110 = scmp.ne.s32.totalorder %s99, %s102
      %p111 = scmp.eq.s32.totalorder %s48, 7
      %p112 = por %p110, %p111
      %p113 = scmp.ne.s32.totalorder %s102, %s103
      %p114 = scmp.eq.s32.totalorder %s48, 0
      %p115 = por %p113, %p114
      %p116 = scmp.ne.s32.totalorder %s102, %s103
      %p117 = scmp.eq.s32.totalorder %s49, 7
      %p118 = por %p116, %p117
      %p120 = scmp.ne.s32.totalorder %s103, %s119
      %p121 = scmp.eq.s32.totalorder %s49, 0
      %p122 = por %p120, %p121
      %s124 = sadd.s32 %s123, 1
      %p127 = scmp.eq.s32.totalorder %s43, 7
      %p128 = scmp.ne.s32.totalorder %s123, %s125
      %p129 = scmp.eq.s32.totalorder %s43, 0
      %p130 = por %p128, %p129
      %p131 = scmp.ne.s32.totalorder %s123, %s125
      %p132 = scmp.eq.s32.totalorder %s48, 7
      %p133 = por %p131, %p132
      %p134 = scmp.ne.s32.totalorder %s125, %s126
      %p135 = scmp.eq.s32.totalorder %s48, 0
      %p136 = por %p134, %p135
      %p137 = scmp.ne.s32.totalorder %s125, %s126
      %p138 = scmp.eq.s32.totalorder %s49, 7
      %p139 = por %p137, %p138
      %p141 = scmp.ne.s32.totalorder %s126, %s140
      %p142 = scmp.eq.s32.totalorder %s49, 0
      %p143 = por %p141, %p142
      %s145 = sadd.s32 %s144, 1
      %p148 = scmp.eq.s32.totalorder %s43, 7
      %p149 = scmp.ne.s32.totalorder %s144, %s146
      %p150 = scmp.eq.s32.totalorder %s43, 0
      %p151 = por %p149, %p150
      %p152 = scmp.ne.s32.totalorder %s144, %s146
      %p153 = scmp.eq.s32.totalorder %s48, 7
      %p154 = por %p152, %p153
      %p155 = scmp.ne.s32.totalorder %s146, %s147
      %p156 = scmp.eq.s32.totalorder %s48, 0
      %p157 = por %p155, %p156
      %p158 = scmp.ne.s32.totalorder %s146, %s147
      %p159 = scmp.eq.s32.totalorder %s49, 7
      %p160 = por %p158, %p159
      %p162 = scmp.ne.s32.totalorder %s147, %s161
      %p163 = scmp.eq.s32.totalorder %s49, 0
      %p164 = por %p162, %p163
      %s166 = sadd.s32 %s165, 1
      %p169 = scmp.eq.s32.totalorder %s43, 7
      %p170 = scmp.ne.s32.totalorder %s165, %s167
      %p171 = scmp.eq.s32.totalorder %s43, 0
      %p172 = por %p170, %p171
      %p173 = scmp.ne.s32.totalorder %s165, %s167
      %p174 = scmp.eq.s32.totalorder %s48, 7
      %p175 = por %p173, %p174
      %p176 = scmp.ne.s32.totalorder %s167, %s168
      %p177 = scmp.eq.s32.totalorder %s48, 0
      %p178 = por %p176, %p177
      %p179 = scmp.ne.s32.totalorder %s167, %s168
      %p180 = scmp.eq.s32.totalorder %s49, 7
      %p181 = por %p179, %p180
      %p183 = scmp.ne.s32.totalorder %s168, %s182
      %p184 = scmp.eq.s32.totalorder %s49, 0
      %p185 = por %p183, %p184
      %s187 = sadd.s32 %s186, 1
      %p190 = scmp.eq.s32.totalorder %s43, 7
      %p191 = scmp.ne.s32.totalorder %s186, %s188
      %p192 = scmp.eq.s32.totalorder %s43, 0
      %p193 = por %p191, %p192
      %p194 = scmp.ne.s32.totalorder %s186, %s188
      %p195 = scmp.eq.s32.totalorder %s48, 7
      %p196 = por %p194, %p195
      %p197 = scmp.ne.s32.totalorder %s188, %s189
      %p198 = scmp.eq.s32.totalorder %s48, 0
      %p199 = por %p197, %p198
      %p200 = scmp.ne.s32.totalorder %s188, %s189
      %p201 = scmp.eq.s32.totalorder %s49, 7
      %p202 = por %p200, %p201
      %p204 = scmp.ne.s32.totalorder %s189, %s203
      %p205 = scmp.eq.s32.totalorder %s49, 0
      %p206 = por %p204, %p205
      %s208 = sadd.s32 %s207, 1
      %p211 = scmp.eq.s32.totalorder %s43, 7
      %p212 = scmp.ne.s32.totalorder %s207, %s209
      %p213 = scmp.eq.s32.totalorder %s43, 0
      %p214 = por %p212, %p213
      %p215 = scmp.ne.s32.totalorder %s207, %s209
      %p216 = scmp.eq.s32.totalorder %s48, 7
      %p217 = por %p215, %p216
      %p218 = scmp.ne.s32.totalorder %s209, %s210
      %p219 = scmp.eq.s32.totalorder %s48, 0
      %p220 = por %p218, %p219
      %p221 = scmp.ne.s32.totalorder %s209, %s210
      %p222 = scmp.eq.s32.totalorder %s49, 7
      %p223 = por %p221, %p222
      %p225 = scmp.ne.s32.totalorder %s210, %s224
      %p226 = scmp.eq.s32.totalorder %s49, 0
      %p227 = por %p225, %p226
      %s229 = sadd.s32 %s228, 1
      %p232 = scmp.eq.s32.totalorder %s43, 7
      %p233 = scmp.ne.s32.totalorder %s228, %s230
      %p234 = scmp.eq.s32.totalorder %s43, 0
      %p235 = por %p233, %p234
      %p236 = scmp.ne.s32.totalorder %s228, %s230
      %p237 = scmp.eq.s32.totalorder %s48, 7
      %p238 = por %p236, %p237
      %p239 = scmp.ne.s32.totalorder %s230, %s231
      %p240 = scmp.eq.s32.totalorder %s48, 0
      %p241 = por %p239, %p240
      %p242 = scmp.ne.s32.totalorder %s230, %s231
      %p243 = scmp.eq.s32.totalorder %s49, 7
      %p244 = por %p242, %p243
      %p246 = scmp.ne.s32.totalorder %s231, %s245
      %p247 = scmp.eq.s32.totalorder %s49, 0
      %p248 = por %p246, %p247
      %s250 = sadd.s32 %s249, 1
      %p253 = scmp.eq.s32.totalorder %s43, 7
      %p254 = scmp.ne.s32.totalorder %s249, %s251
      %p255 = scmp.eq.s32.totalorder %s43, 0
      %p256 = por %p254, %p255
      %p257 = scmp.ne.s32.totalorder %s249, %s251
      %p258 = scmp.eq.s32.totalorder %s48, 7
      %p259 = por %p257, %p258
      %p260 = scmp.ne.s32.totalorder %s251, %s252
      %p261 = scmp.eq.s32.totalorder %s48, 0
      %p262 = por %p260, %p261
      %p263 = scmp.ne.s32.totalorder %s251, %s252
      %p264 = scmp.eq.s32.totalorder %s49, 7
      %p265 = por %p263, %p264
      %p267 = scmp.ne.s32.totalorder %s252, %s266
      %p268 = scmp.eq.s32.totalorder %s49, 0
      %p269 = por %p267, %p268
      %s271 = sadd.s32 %s270, 1
      %p274 = scmp.eq.s32.totalorder %s43, 7
      %p275 = scmp.ne.s32.totalorder %s270, %s272
      %p276 = scmp.eq.s32.totalorder %s43, 0
      %p277 = por %p275, %p276
      %p278 = scmp.ne.s32.totalorder %s270, %s272
      %p279 = scmp.eq.s32.totalorder %s48, 7
      %p280 = por %p278, %p279
      %p281 = scmp.ne.s32.totalorder %s272, %s273
      %p282 = scmp.eq.s32.totalorder %s48, 0
      %p283 = por %p281, %p282
      %p284 = scmp.ne.s32.totalorder %s272, %s273
      %p285 = scmp.eq.s32.totalorder %s49, 7
      %p286 = por %p284, %p285
      %p288 = scmp.ne.s32.totalorder %s273, %s287
      %p289 = scmp.eq.s32.totalorder %s49, 0
      %p290 = por %p288, %p289
      %s292 = sadd.s32 %s291, 1
      %p295 = scmp.eq.s32.totalorder %s43, 7
      %p296 = scmp.ne.s32.totalorder %s291, %s293
      %p297 = scmp.eq.s32.totalorder %s43, 0
      %p298 = por %p296, %p297
      %p299 = scmp.ne.s32.totalorder %s291, %s293
      %p300 = scmp.eq.s32.totalorder %s48, 7
      %p301 = por %p299, %p300
      %p302 = scmp.ne.s32.totalorder %s293, %s294
      %p303 = scmp.eq.s32.totalorder %s48, 0
      %p304 = por %p302, %p303
      %p305 = scmp.ne.s32.totalorder %s293, %s294
      %p306 = scmp.eq.s32.totalorder %s49, 7
      %p307 = por %p305, %p306
      %p309 = scmp.ne.s32.totalorder %s294, %s308
      %p310 = scmp.eq.s32.totalorder %s49, 0
      %p311 = por %p309, %p310
      %s313 = sadd.s32 %s312, 1
      %p316 = scmp.eq.s32.totalorder %s43, 7
      %p317 = scmp.ne.s32.totalorder %s312, %s314
      %p318 = scmp.eq.s32.totalorder %s43, 0
      %p319 = por %p317, %p318
      %p320 = scmp.ne.s32.totalorder %s312, %s314
      %p321 = scmp.eq.s32.totalorder %s48, 7
      %p322 = por %p320, %p321
      %p323 = scmp.ne.s32.totalorder %s314, %s315
      %p324 = scmp.eq.s32.totalorder %s48, 0
      %p325 = por %p323, %p324
      %p326 = scmp.ne.s32.totalorder %s314, %s315
      %p327 = scmp.eq.s32.totalorder %s49, 7
      %p328 = por %p326, %p327
      %p330 = scmp.ne.s32.totalorder %s315, %s329
      %p331 = scmp.eq.s32.totalorder %s49, 0
      %p332 = por %p330, %p331
      %s333 = smul.u32 %s50, 4
      %s334 = sadd.s32 %s333, %s51
      %s335 = smul.u32 %s62, 4
      %s336 = sadd.s32 %s335, %s58
      %s337 = ssub.s32 %s334, %s336
      %p338 = scmp.eq.s32.totalorder %s337, 0
      %s340 = sadd.s32 %s339, 1
      %s341 = scalar_select %p338, %s339, %s340
      %p344 = pneg %p338
      %p345 = scmp.eq.s32.totalorder %s43, 7
      %p346 = por %p344, %p345
      %p347 = scmp.ne.s32.totalorder %s339, %s342
      %p348 = scmp.eq.s32.totalorder %s43, 0
      %p349 = por %p347, %p348
      %p350 = scmp.ne.s32.totalorder %s339, %s342
      %p351 = scmp.eq.s32.totalorder %s48, 7
      %p352 = por %p350, %p351
      %p353 = scmp.ne.s32.totalorder %s342, %s343
      %p354 = scmp.eq.s32.totalorder %s48, 0
      %p355 = por %p353, %p354
      %p356 = scmp.ne.s32.totalorder %s342, %s343
      %p357 = scmp.eq.s32.totalorder %s49, 7
      %p358 = por %p356, %p357
      %p360 = scmp.ne.s32.totalorder %s343, %s359
      %p361 = scmp.eq.s32.totalorder %s49, 0
      %p362 = por %p360, %p361
      %s363 = ssub.s32 %s50, %s62
      %p364 = scmp.eq.s32.totalorder %s363, 0
      %s366 = sadd.s32 %s365, 1
      %s367 = scalar_select %p364, %s365, %s366
      %p370 = pneg %p364
      %p371 = scmp.eq.s32.totalorder %s43, 7
      %p372 = por %p370, %p371
      %p373 = scmp.ne.s32.totalorder %s365, %s368
      %p374 = scmp.eq.s32.totalorder %s43, 0
      %p375 = por %p373, %p374
      %p376 = scmp.ne.s32.totalorder %s365, %s368
      %p377 = scmp.eq.s32.totalorder %s48, 7
      %p378 = por %p376, %p377
      %p379 = scmp.ne.s32.totalorder %s368, %s369
      %p380 = scmp.eq.s32.totalorder %s48, 0
      %p381 = por %p379, %p380
      %p382 = scmp.ne.s32.totalorder %s368, %s369
      %p383 = scmp.eq.s32.totalorder %s49, 7
      %p384 = por %p382, %p383
      %p386 = scmp.ne.s32.totalorder %s369, %s385
      %p387 = scmp.eq.s32.totalorder %s49, 0
      %p388 = por %p386, %p387
      %s389 = ssub.s32 %s50, %s62
      %p390 = scmp.eq.s32.totalorder %s389, 0
      %s392 = sadd.s32 %s391, 1
      %s393 = scalar_select %p390, %s391, %s392
      %p396 = pneg %p390
      %p397 = scmp.eq.s32.totalorder %s43, 7
      %p398 = por %p396, %p397
      %p399 = scmp.ne.s32.totalorder %s391, %s394
      %p400 = scmp.eq.s32.totalorder %s43, 0
      %p401 = por %p399, %p400
      %p402 = scmp.ne.s32.totalorder %s391, %s394
      %p403 = scmp.eq.s32.totalorder %s48, 7
      %p404 = por %p402, %p403
      %p405 = scmp.ne.s32.totalorder %s394, %s395
      %p406 = scmp.eq.s32.totalorder %s48, 0
      %p407 = por %p405, %p406
      %p408 = scmp.ne.s32.totalorder %s394, %s395
      %p409 = scmp.eq.s32.totalorder %s49, 7
      %p410 = por %p408, %p409
      %p412 = scmp.ne.s32.totalorder %s395, %s411
      %p413 = scmp.eq.s32.totalorder %s49, 0
      %p414 = por %p412, %p413
      %s415 = ssub.s32 %s50, %s62
      %p416 = scmp.eq.s32.totalorder %s415, 0
      %s418 = sadd.s32 %s417, 1
      %s419 = scalar_select %p416, %s417, %s418
      %p422 = pneg %p416
      %p423 = scmp.eq.s32.totalorder %s43, 7
      %p424 = por %p422, %p423
      %p425 = scmp.ne.s32.totalorder %s417, %s420
      %p426 = scmp.eq.s32.totalorder %s43, 0
      %p427 = por %p425, %p426
      %p428 = scmp.ne.s32.totalorder %s417, %s420
      %p429 = scmp.eq.s32.totalorder %s48, 7
      %p430 = por %p428, %p429
      %p431 = scmp.ne.s32.totalorder %s420, %s421
      %p432 = scmp.eq.s32.totalorder %s48, 0
      %p433 = por %p431, %p432
      %p434 = scmp.ne.s32.totalorder %s420, %s421
      %p435 = scmp.eq.s32.totalorder %s49, 7
      %p436 = por %p434, %p435
      %p438 = scmp.ne.s32.totalorder %s421, %s437
      %p439 = scmp.eq.s32.totalorder %s49, 0
      %p440 = por %p438, %p439
      %s441 = ssub.s32 %s50, %s62
      %p442 = scmp.eq.s32.totalorder %s441, 0
      %s444 = sadd.s32 %s443, 1
      %s445 = scalar_select %p442, %s443, %s444
      %p448 = pneg %p442
      %p449 = scmp.eq.s32.totalorder %s43, 7
      %p450 = por %p448, %p449
      %p451 = scmp.ne.s32.totalorder %s443, %s446
      %p452 = scmp.eq.s32.totalorder %s43, 0
      %p453 = por %p451, %p452
      %p454 = scmp.ne.s32.totalorder %s443, %s446
      %p455 = scmp.eq.s32.totalorder %s48, 7
      %p456 = por %p454, %p455
      %p457 = scmp.ne.s32.totalorder %s446, %s447
      %p458 = scmp.eq.s32.totalorder %s48, 0
      %p459 = por %p457, %p458
      %p460 = scmp.ne.s32.totalorder %s446, %s447
      %p461 = scmp.eq.s32.totalorder %s49, 7
      %p462 = por %p460, %p461
      %p464 = scmp.ne.s32.totalorder %s447, %s463
      %p465 = scmp.eq.s32.totalorder %s49, 0
      %p466 = por %p464, %p465
      %p467 = scmp.le.s32.totalorder 1, %s43
      %p468 = scmp.lt.s32.totalorder %s43, 9
      %p469 = pnand %p467, %p468
      %p470 = pneg %p469
      // Predicated region
      $region9: #{fast_weight_layer.2} parent=5 // pred_check
        _
      $region10: #{fast_weight_layer.2} parent=5 // pred_check_branch
        %472 = sbr.rel (%p469) target = $region12
      $region11: #{fast_weight_layer.2} parent=5 // pred_region
        %s473 = ssub.s32 %s43, 1
        // Predicated region
        $region13: #{fast_weight_layer.2} parent=11 // pred_check
          %p474 = pneg %p136
        $region14: #{fast_weight_layer.2} parent=11 // pred_check_branch
          %476 = sbr.rel (%p474) target = $region16
        $region15: #{fast_weight_layer.2} parent=11 // pred_region
          %s478 = ssub.s32 128, 128
          %479 = vsyncadd [#allocation10], %s478
          %s481 = sshll.u32 [#allocation11], 4
          %s482 = int_to_ptr.vmem [resolvable:$true] %s481
          %484 = dma.hbm_to_vmem [thread:$0]  %s2, 128, %s482, [#allocation10]
        $region16: #{fast_weight_layer.2} parent=11 // pred_fallthru
          _
        // Predicated region
        $region17: #{fast_weight_layer.2} parent=11 // pred_check
          %p485 = pneg %p157
        $region18: #{fast_weight_layer.2} parent=11 // pred_check_branch
          %487 = sbr.rel (%p485) target = $region20
        $region19: #{fast_weight_layer.2} parent=11 // pred_region
          %s489 = ssub.s32 512, 512
          %490 = vsyncadd [#allocation13], %s489
          %s491 = sshll.u32 [#allocation12], 4
          %s492 = int_to_ptr.vmem [resolvable:$true] %s491
          %497 = dma.hbm_to_vmem [thread:$0]  %s3, 512, %s492, [#allocation13], 128, 128, 8
        $region20: #{fast_weight_layer.2} parent=11 // pred_fallthru
          _
        // Predicated region
        $region21: #{fast_weight_layer.2} parent=11 // pred_check
          %p498 = pneg %p178
        $region22: #{fast_weight_layer.2} parent=11 // pred_check_branch
          %500 = sbr.rel (%p498) target = $region24
        $region23: #{fast_weight_layer.2} parent=11 // pred_region
          %s502 = ssub.s32 16, 16
          %503 = vsyncadd [#allocation13], %s502
          %s505 = sshll.u32 [#allocation14], 4
          %s506 = int_to_ptr.vmem [resolvable:$true] %s505
          %508 = dma.hbm_to_vmem [thread:$0]  %s4, 16, %s506, [#allocation13]
        $region24: #{fast_weight_layer.2} parent=11 // pred_fallthru
          _
        // Predicated region
        $region25: #{fast_weight_layer.2} parent=11 // pred_check
          %p509 = pneg %p199
        $region26: #{fast_weight_layer.2} parent=11 // pred_check_branch
          %511 = sbr.rel (%p509) target = $region28
        $region27: #{fast_weight_layer.2} parent=11 // pred_region
          %s513 = ssub.s32 256, 256
          %514 = vsyncadd [#allocation16], %s513
          %s515 = sshll.u32 [#allocation15], 4
          %s516 = int_to_ptr.vmem [resolvable:$true] %s515
          %521 = dma.hbm_to_vmem [thread:$0]  %s5, 256, %s516, [#allocation16], 128, 128, 8
        $region28: #{fast_weight_layer.2} parent=11 // pred_fallthru
          _
        // Predicated region
        $region29: #{fast_weight_layer.2} parent=11 // pred_check
          %p522 = pneg %p220
        $region30: #{fast_weight_layer.2} parent=11 // pred_check_branch
          %524 = sbr.rel (%p522) target = $region32
        $region31: #{fast_weight_layer.2} parent=11 // pred_region
          %s526 = ssub.s32 16, 16
          %527 = vsyncadd [#allocation16], %s526
          %s529 = sshll.u32 [#allocation17], 4
          %s530 = int_to_ptr.vmem [resolvable:$true] %s529
          %532 = dma.hbm_to_vmem [thread:$0]  %s6, 16, %s530, [#allocation16]
        $region32: #{fast_weight_layer.2} parent=11 // pred_fallthru
          _
        // Predicated region
        $region33: #{fast_weight_layer.2} parent=11 // pred_check
          %p533 = pneg %p241
        $region34: #{fast_weight_layer.2} parent=11 // pred_check_branch
          %535 = sbr.rel (%p533) target = $region36
        $region35: #{fast_weight_layer.2} parent=11 // pred_region
          %s537 = ssub.s32 128, 128
          %538 = vsyncadd [#allocation19], %s537
          %s540 = sshll.u32 [#allocation18], 4
          %s541 = int_to_ptr.vmem [resolvable:$true] %s540
          %543 = dma.hbm_to_vmem [thread:$0]  %s7, 128, %s541, [#allocation19]
        $region36: #{fast_weight_layer.2} parent=11 // pred_fallthru
          _
        // Predicated region
        $region37: #{fast_weight_layer.2} parent=11 // pred_check
          %p544 = pneg %p262
        $region38: #{fast_weight_layer.2} parent=11 // pred_check_branch
          %546 = sbr.rel (%p544) target = $region40
        $region39: #{fast_weight_layer.2} parent=11 // pred_region
          %s548 = ssub.s32 128, 128
          %549 = vsyncadd [#allocation19], %s548
          %s551 = sshll.u32 [#allocation20], 4
          %s552 = int_to_ptr.vmem [resolvable:$true] %s551
          %554 = dma.hbm_to_vmem [thread:$0]  %s8, 128, %s552, [#allocation19]
        $region40: #{fast_weight_layer.2} parent=11 // pred_fallthru
          _
        // Predicated region
        $region41: #{fast_weight_layer.2} parent=11 // pred_check
          %p555 = pneg %p283
        $region42: #{fast_weight_layer.2} parent=11 // pred_check_branch
          %557 = sbr.rel (%p555) target = $region44
        $region43: #{fast_weight_layer.2} parent=11 // pred_region
          %s559 = ssub.s32 16, 16
          %560 = vsyncadd [#allocation22], %s559
          %s562 = sshll.u32 [#allocation21], 4
          %s563 = int_to_ptr.vmem [resolvable:$true] %s562
          %565 = dma.hbm_to_vmem [thread:$0]  %s9, 16, %s563, [#allocation22]
        $region44: #{fast_weight_layer.2} parent=11 // pred_fallthru
          _
        // Predicated region
        $region45: #{fast_weight_layer.2} parent=11 // pred_check
          %p566 = pneg %p304
        $region46: #{fast_weight_layer.2} parent=11 // pred_check_branch
          %568 = sbr.rel (%p566) target = $region48
        $region47: #{fast_weight_layer.2} parent=11 // pred_region
          %s570 = ssub.s32 16, 16
          %571 = vsyncadd [#allocation22], %s570
          %s573 = sshll.u32 [#allocation23], 4
          %s574 = int_to_ptr.vmem [resolvable:$true] %s573
          %576 = dma.hbm_to_vmem [thread:$0]  %s10, 16, %s574, [#allocation22]
        $region48: #{fast_weight_layer.2} parent=11 // pred_fallthru
          _
        // Predicated region
        $region49: #{fast_weight_layer.2} parent=11 // pred_check
          %p577 = pneg %p325
        $region50: #{fast_weight_layer.2} parent=11 // pred_check_branch
          %579 = sbr.rel (%p577) target = $region52
        $region51: #{fast_weight_layer.2} parent=11 // pred_region
          %s581 = ssub.s32 16, 16
          %582 = vsyncadd [#allocation25], %s581
          %s584 = sshll.u32 [#allocation24], 4
          %s585 = int_to_ptr.vmem [resolvable:$true] %s584
          %587 = dma.hbm_to_vmem [thread:$0]  %s11, 16, %s585, [#allocation25]
        $region52: #{fast_weight_layer.2} parent=11 // pred_fallthru
          _
      $region12: #{fast_weight_layer.2} parent=5 // pred_fallthru
        _
      %p588 = scmp.lt.s32.totalorder %s43, 8
      // Predicated region
      $region53: #{fast_weight_layer.2} parent=5 // pred_check
        %p589 = pneg %p588
      $region54: #{fast_weight_layer.2} parent=5 // pred_check_branch
        %591 = sbr.rel (%p589) target = $region56
      $region55: #{fast_weight_layer.2} parent=5 // pred_region
        // Predicated region
        $region57: #{fast_weight_layer.2} parent=55 // pred_check
          %p592 = pneg %p79
        $region58: #{fast_weight_layer.2} parent=55 // pred_check_branch
          %594 = sbr.rel (%p592) target = $region60
        $region59: #{fast_weight_layer.2} parent=55 // pred_region
          %s595 = sand.u32 %s69, 1
          %s596 = scalar_lea.sflag [#allocation7], %s595
          %s597 = sand.u32 %s69, 1
          %s598 = smul.addr %s597, 16
          %s599 = scalar_lea.vmem [#allocation6], %s598
          %s600 = smul.u32 %s50, 4
          %s601 = sadd.s32 %s600, %s51
          %s602 = smul.u32 2, %s601
          %s604 = ssub.s32 256, 256
          %605 = vsyncadd %s596, %s604
          %s606 = smul.addr %s602, 128
          %s607 = scalar_lea.hbm %s0, %s606
          %s608 = sshll.u32 %s599, 4
          %s609 = int_to_ptr.vmem [resolvable:$true] %s608
          %614 = dma.hbm_to_vmem [thread:$0]  %s607, 256, %s609, %s596, 128, 128, 8
        $region60: #{fast_weight_layer.2} parent=55 // pred_fallthru
          _
        // Predicated region
        $region61: #{fast_weight_layer.2} parent=55 // pred_check
          %p615 = pneg %p109
        $region62: #{fast_weight_layer.2} parent=55 // pred_check_branch
          %617 = sbr.rel (%p615) target = $region64
        $region63: #{fast_weight_layer.2} parent=55 // pred_region
          %s618 = sand.u32 %s43, 1
          %s619 = scalar_lea.sflag [#allocation10], %s618
          %s620 = sand.u32 %s99, 1
          %s621 = smul.addr %s620, 16
          %s622 = scalar_lea.vmem [#allocation9], %s621
          %s623 = smul.u32 %s50, 4
          %s624 = sadd.s32 %s623, %s51
          %s625 = smul.u32 2, %s624
          %s627 = ssub.s32 256, 256
          %628 = vsyncadd %s619, %s627
          %s629 = smul.addr %s625, 128
          %s630 = scalar_lea.hbm %s1, %s629
          %s631 = sshll.u32 %s622, 4
          %s632 = int_to_ptr.vmem [resolvable:$true] %s631
          %637 = dma.hbm_to_vmem [thread:$0]  %s630, 256, %s632, %s619, 128, 128, 8
        $region64: #{fast_weight_layer.2} parent=55 // pred_fallthru
          _
      $region56: #{fast_weight_layer.2} parent=5 // pred_fallthru
        _
      %p638 = scmp.le.s32.totalorder 1, %s43
      %p639 = scmp.lt.s32.totalorder %s43, 9
      %p640 = pnand %p638, %p639
      %p641 = pneg %p640
      // Predicated region
      $region65: #{fast_weight_layer.2} parent=5 // pred_check
        _
      $region66: #{fast_weight_layer.2} parent=5 // pred_check_branch
        %643 = sbr.rel (%p640) target = $region68
      $region67: #{fast_weight_layer.2} parent=5 // pred_region
        %s644 = ssub.s32 %s43, 1
        %s645 = sand.u32 %s72, 1
        %s646 = scalar_lea.sflag [#allocation7], %s645
        %s647 = sand.u32 %s72, 1
        %s648 = smul.addr %s647, 16
        %s649 = scalar_lea.vmem [#allocation6], %s648
        // Predicated region
        $region69: #{fast_weight_layer.2} parent=67 // pred_check
          %p650 = pneg %p85
        $region70: #{fast_weight_layer.2} parent=67 // pred_check_branch
          %652 = sbr.rel (%p650) target = $region72
        $region71: #{fast_weight_layer.2} parent=67 // pred_region
          %653 = dma.done %s646, 256
        $region72: #{fast_weight_layer.2} parent=67 // pred_fallthru
          _
        %s654 = sand.u32 %s48, 1
        %s655 = scalar_lea.sflag [#allocation10], %s654
        %s656 = sand.u32 %s102, 1
        %s657 = smul.addr %s656, 16
        %s658 = scalar_lea.vmem [#allocation9], %s657
        // Predicated region
        $region73: #{fast_weight_layer.2} parent=67 // pred_check
          %p659 = pneg %p115
        $region74: #{fast_weight_layer.2} parent=67 // pred_check_branch
          %661 = sbr.rel (%p659) target = $region76
        $region75: #{fast_weight_layer.2} parent=67 // pred_region
          %662 = dma.done %s655, 256
        $region76: #{fast_weight_layer.2} parent=67 // pred_fallthru
          _
        // Predicated region
        $region77: #{fast_weight_layer.2} parent=67 // pred_check
          %p663 = pneg %p136
        $region78: #{fast_weight_layer.2} parent=67 // pred_check_branch
          %665 = sbr.rel (%p663) target = $region80
        $region79: #{fast_weight_layer.2} parent=67 // pred_region
          %666 = dma.done [#allocation10], 128
        $region80: #{fast_weight_layer.2} parent=67 // pred_fallthru
          _
        // Predicated region
        $region81: #{fast_weight_layer.2} parent=67 // pred_check
          %p667 = pneg %p157
        $region82: #{fast_weight_layer.2} parent=67 // pred_check_branch
          %669 = sbr.rel (%p667) target = $region84
        $region83: #{fast_weight_layer.2} parent=67 // pred_region
          %670 = dma.done [#allocation13], 512
        $region84: #{fast_weight_layer.2} parent=67 // pred_fallthru
          _
        // Predicated region
        $region85: #{fast_weight_layer.2} parent=67 // pred_check
          %p671 = pneg %p178
        $region86: #{fast_weight_layer.2} parent=67 // pred_check_branch
          %673 = sbr.rel (%p671) target = $region88
        $region87: #{fast_weight_layer.2} parent=67 // pred_region
          %674 = dma.done [#allocation13], 16
        $region88: #{fast_weight_layer.2} parent=67 // pred_fallthru
          _
        // Predicated region
        $region89: #{fast_weight_layer.2} parent=67 // pred_check
          %p675 = pneg %p199
        $region90: #{fast_weight_layer.2} parent=67 // pred_check_branch
          %677 = sbr.rel (%p675) target = $region92
        $region91: #{fast_weight_layer.2} parent=67 // pred_region
          %678 = dma.done [#allocation16], 256
        $region92: #{fast_weight_layer.2} parent=67 // pred_fallthru
          _
        // Predicated region
        $region93: #{fast_weight_layer.2} parent=67 // pred_check
          %p679 = pneg %p220
        $region94: #{fast_weight_layer.2} parent=67 // pred_check_branch
          %681 = sbr.rel (%p679) target = $region96
        $region95: #{fast_weight_layer.2} parent=67 // pred_region
          %682 = dma.done [#allocation16], 16
        $region96: #{fast_weight_layer.2} parent=67 // pred_fallthru
          _
        // Predicated region
        $region97: #{fast_weight_layer.2} parent=67 // pred_check
          %p683 = pneg %p241
        $region98: #{fast_weight_layer.2} parent=67 // pred_check_branch
          %685 = sbr.rel (%p683) target = $region100
        $region99: #{fast_weight_layer.2} parent=67 // pred_region
          %686 = dma.done [#allocation19], 128
        $region100: #{fast_weight_layer.2} parent=67 // pred_fallthru
          _
        // Predicated region
        $region101: #{fast_weight_layer.2} parent=67 // pred_check
          %p687 = pneg %p262
        $region102: #{fast_weight_layer.2} parent=67 // pred_check_branch
          %689 = sbr.rel (%p687) target = $region104
        $region103: #{fast_weight_layer.2} parent=67 // pred_region
          %690 = dma.done [#allocation19], 128
        $region104: #{fast_weight_layer.2} parent=67 // pred_fallthru
          _
        // Predicated region
        $region105: #{fast_weight_layer.2} parent=67 // pred_check
          %p691 = pneg %p283
        $region106: #{fast_weight_layer.2} parent=67 // pred_check_branch
          %693 = sbr.rel (%p691) target = $region108
        $region107: #{fast_weight_layer.2} parent=67 // pred_region
          %694 = dma.done [#allocation22], 16
        $region108: #{fast_weight_layer.2} parent=67 // pred_fallthru
          _
        // Predicated region
        $region109: #{fast_weight_layer.2} parent=67 // pred_check
          %p695 = pneg %p304
        $region110: #{fast_weight_layer.2} parent=67 // pred_check_branch
          %697 = sbr.rel (%p695) target = $region112
        $region111: #{fast_weight_layer.2} parent=67 // pred_region
          %698 = dma.done [#allocation22], 16
        $region112: #{fast_weight_layer.2} parent=67 // pred_fallthru
          _
        // Predicated region
        $region113: #{fast_weight_layer.2} parent=67 // pred_check
          %p699 = pneg %p325
        $region114: #{fast_weight_layer.2} parent=67 // pred_check_branch
          %701 = sbr.rel (%p699) target = $region116
        $region115: #{fast_weight_layer.2} parent=67 // pred_region
          %702 = dma.done [#allocation25], 16
        $region116: #{fast_weight_layer.2} parent=67 // pred_fallthru
          _
        %s703 = sand.u32 %s72, 1
        %s704 = scalar_lea.sflag [#allocation7], %s703
        %s705 = sand.u32 %s72, 1
        %s706 = smul.addr %s705, 16
        %s707 = scalar_lea.vmem [#allocation6], %s706
        %p708 = pneg %p85
        %p709 = pneg %p82
        %s710 = sand.u32 %s48, 1
        %s711 = scalar_lea.sflag [#allocation10], %s710
        %s712 = sand.u32 %s102, 1
        %s713 = smul.addr %s712, 16
        %s714 = scalar_lea.vmem [#allocation9], %s713
        %p715 = pneg %p115
        %p716 = pneg %p112
        %p717 = pneg %p136
        %p718 = pneg %p133
        %p719 = pneg %p157
        %p720 = pneg %p154
        %p721 = pneg %p178
        %p722 = pneg %p175
        %p723 = pneg %p199
        %p724 = pneg %p196
        %p725 = pneg %p220
        %p726 = pneg %p217
        %p727 = pneg %p241
        %p728 = pneg %p238
        %p729 = pneg %p262
        %p730 = pneg %p259
        %p731 = pneg %p283
        %p732 = pneg %p280
        %p733 = pneg %p304
        %p734 = pneg %p301
        %p735 = pneg %p325
        %p736 = pneg %p322
        %p737 = pneg %p355
        %p738 = pneg %p352
        %s739 = sand.u32 %s342, 1
        %s740 = scalar_lea.sflag [#allocation8], %s739
        %s741 = sand.u32 %s342, 1
        %s742 = smul.addr %s741, 16
        %s743 = scalar_lea.vmem [#allocation26], %s742
        %p744 = pneg %p381
        %p745 = pneg %p378
        %s746 = sand.u32 %s48, 1
        %s747 = scalar_lea.sflag [#allocation28], %s746
        %s748 = sand.u32 %s368, 1
        %s749 = smul.addr %s748, 8
        %s750 = scalar_lea.vmem [#allocation27], %s749
        %p751 = pneg %p407
        %p752 = pneg %p404
        %s753 = sand.u32 %s48, 1
        %s754 = scalar_lea.sflag [#allocation28], %s753
        %s755 = sand.u32 %s394, 1
        %s756 = scalar_lea.vmem [#allocation29], %s755
        %p757 = pneg %p433
        %p758 = pneg %p430
        %s759 = sand.u32 %s48, 1
        %s760 = scalar_lea.sflag [#allocation31], %s759
        %s761 = sand.u32 %s420, 1
        %s762 = smul.addr %s761, 8
        %s763 = scalar_lea.vmem [#allocation30], %s762
        %p764 = pneg %p459
        %p765 = pneg %p456
        %s766 = sand.u32 %s48, 1
        %s767 = scalar_lea.sflag [#allocation31], %s766
        %s768 = sand.u32 %s446, 1
        %s769 = scalar_lea.vmem [#allocation32], %s768
        %s770 = smul.u32 %s52, 4
        %s771 = sadd.s32 %s770, %s53
        %s772 = smul.u32 2, %s771
        %s773 = smul.u32 %s52, 4
        %s774 = sadd.s32 %s773, %s53
        %s775 = smul.u32 2, %s774
        %s776 = smul.u32 %s52, 4
        %s777 = sadd.s32 %s776, %s53
        %s778 = smul.u32 2, %s777
        %p779 = scmp.eq.s32.totalorder %s53, 0
        // Predicated region
        $region117: #{fast_weight_layer.2} parent=67 // pred_check
          %p780 = pneg %p779
        $region118: #{fast_weight_layer.2} parent=67 // pred_check_branch
          %782 = sbr.rel (%p780) target = $region120
        $region119: #{fast_weight_layer.2} parent=67 // pred_region
          %vm783 = vcmask 130048
          %784 = vst.msk [vmem:[#allocation2] sm:$0xff] %vm783, 0.0
          %vm785 = vcmask 57344
          %786 = vst.msk [vmem:[#allocation3] sm:$0x1] %vm785, 0.0
          %vm787 = vcmask 64512
          %788 = vst.msk [vmem:[#allocation4] sm:$0xff] %vm787, 0.0
          %789 = vst.msk [vmem:[#allocation5] sm:$0x1] %vm785, 0.0
        $region120: #{fast_weight_layer.2} parent=67 // pred_fallthru
          _
        %v790 = vld [vmem:[%s649] sm:$0xff]
        %v791 = vld [vmem:[%s649 + $0x8] sm:$0xff]
        %v792 = vld [vmem:[#allocation15] sm:$0xff]
        %v793 = vld [vmem:[#allocation15 + $0x8] sm:$0xff]
        %v794 = vld [vmem:[#allocation17] sm:$0x1]
        %v796 = vlaneseq
        %v797 = vshrl.u32 %v796, 7
        %v798 = vsub.s32 0, %v797
        %v799 = vrot.slane %v794, %v798
        %vm801 = vcmask 130048
        %v803 = vsel %vm801, %v790, 0
        %v806 = vsel %vm801, %v791, 0
        %808 = vmatprep.subr.mxu0 0.0
        %809 = vmatpush1.msra.mxu0 %v792
        %810 = vmatprep.subr.mxu0 0.0
        %811 = vmatpush1.msra.mxu0 %v793
        %812 = vmatprep.subr.mxu0 0.0
        %813 = vmatpush1.msra.mxu0 0.0
        %814 = vmatprep.subr.mxu0 0.0
        %815 = vmatpush1.msra.mxu0 0.0
        %816 = vmatprep.subr.mxu0 0.0
        %817 = vmatpush1.msra.mxu0 0.0
        %818 = vmatprep.subr.mxu0 0.0
        %819 = vmatpush1.msra.mxu0 0.0
        %820 = vmatprep.subr.mxu0 0.0
        %821 = vmatpush1.msra.mxu0 0.0
        %822 = vmatprep.subr.mxu0 0.0
        %823 = vmatpush1.msra.mxu0 0.0
        %824 = vmatprep.subr.mxu0 0.0
        %825 = vmatpush1.msra.mxu0 0.0
        %826 = vmatprep.subr.mxu0 0.0
        %827 = vmatpush1.msra.mxu0 0.0
        %828 = vmatprep.subr.mxu0 0.0
        %829 = vmatpush1.msra.mxu0 0.0
        %830 = vmatprep.subr.mxu0 0.0
        %831 = vmatpush1.msra.mxu0 0.0
        %832 = vmatprep.subr.mxu0 0.0
        %833 = vmatpush1.msra.mxu0 0.0
        %834 = vmatprep.subr.mxu0 0.0
        %835 = vmatpush1.msra.mxu0 0.0
        %836 = vmatprep.subr.mxu0 0.0
        %837 = vmatpush1.msra.mxu0 0.0
        %838 = vmatprep.subr.mxu0 0.0
        %839 = vmatpush1.msra.mxu0 0.0
        %840 = vmatprep.subr.mxu0 0.0
        %841 = vmatpush1.msra.mxu0 0.0
        %842 = vmatprep.subr.mxu0 0.0
        %843 = vmatpush1.msra.mxu0 0.0
        %844 = vmatprep.subr.mxu0 0.0
        %845 = vmatpush1.msra.mxu0 0.0
        %846 = vmatprep.subr.mxu0 0.0
        %847 = vmatpush1.msra.mxu0 0.0
        %848 = vmatprep.subr.mxu0 0.0
        %849 = vmatpush1.msra.mxu0 0.0
        %850 = vmatprep.subr.mxu0 0.0
        %851 = vmatpush1.msra.mxu0 0.0
        %852 = vmatprep.subr.mxu0 0.0
        %853 = vmatpush1.msra.mxu0 0.0
        %854 = vmatprep.subr.mxu0 0.0
        %855 = vmatpush1.msra.mxu0 0.0
        %856 = vmatprep.subr.mxu0 0.0
        %857 = vmatpush1.msra.mxu0 0.0
        %858 = vmatprep.subr.mxu0 0.0
        %859 = vmatpush1.msra.mxu0 0.0
        %860 = vmatprep.subr.mxu0 0.0
        %861 = vmatpush1.msra.mxu0 0.0
        %862 = vmatprep.subr.mxu0 0.0
        %863 = vmatpush1.msra.mxu0 0.0
        %864 = vmatprep.subr.mxu0 0.0
        %865 = vmatpush1.msra.mxu0 0.0
        %866 = vmatprep.subr.mxu0 0.0
        %867 = vmatpush1.msra.mxu0 0.0
        %868 = vmatprep.subr.mxu0 0.0
        %869 = vmatpush1.msra.mxu0 0.0
        %870 = vmatprep.subr.mxu0 0.0
        %871 = vmatpush1.msra.mxu0 0.0
        %872 = vmatprep.mubr.f32.mxu0 0.0
        %873 = vmatmul.mubr.f32.gmra.mrb[0].mxu0 %v803
        %v874 = vpop.f32.mrb[0].mxu0
        %v875 = vadd.f32 %v799, %v874
        %v876 = vpop.f32.mrb[0].mxu0
        %877 = vmatprep.mubr.f32.mxu0 0.0
        %878 = vmatmul.mubr.f32.gmra.mrb[0].mxu0 %v806
        %v879 = vpop.f32.mrb[0].mxu0
        %v880 = vadd.f32 %v799, %v879
        %v881 = vpop.f32.mrb[0].mxu0
        %882 = vdwg.mxu0
        %v883 = vmax.f32 %v875, 0.0
        %v884 = vmax.f32 %v880, 0.0
        %vm885 = vcmask 64512
        %886 = vst.msk [vmem:[%s743] sm:$0xff] %vm885, %v883
        %887 = vst.msk [vmem:[%s743 + $0x8] sm:$0xff] %vm885, %v884
        %v888 = vld [vmem:[#allocation18] sm:$0xff]
        %v889 = vld [vmem:[#allocation21] sm:$0x1]
        %v891 = vlaneseq
        %v892 = vshrl.u32 %v891, 7
        %v893 = vsub.s32 0, %v892
        %v894 = vrot.slane %v889, %v893
        %v897 = vsel %vm885, %v883, 0
        %v900 = vsel %vm885, %v884, 0
        %902 = vmatprep.subr.mxu0 0.0
        %903 = vmatpush1.msra.mxu0 %v888
        %904 = vmatprep.subr.mxu0 0.0
        %905 = vmatpush1.msra.mxu0 0.0
        %906 = vmatprep.subr.mxu0 0.0
        %907 = vmatpush1.msra.mxu0 0.0
        %908 = vmatprep.subr.mxu0 0.0
        %909 = vmatpush1.msra.mxu0 0.0
        %910 = vmatprep.subr.mxu0 0.0
        %911 = vmatpush1.msra.mxu0 0.0
        %912 = vmatprep.subr.mxu0 0.0
        %913 = vmatpush1.msra.mxu0 0.0
        %914 = vmatprep.subr.mxu0 0.0
        %915 = vmatpush1.msra.mxu0 0.0
        %916 = vmatprep.subr.mxu0 0.0
        %917 = vmatpush1.msra.mxu0 0.0
        %918 = vmatprep.subr.mxu0 0.0
        %919 = vmatpush1.msra.mxu0 0.0
        %920 = vmatprep.subr.mxu0 0.0
        %921 = vmatpush1.msra.mxu0 0.0
        %922 = vmatprep.subr.mxu0 0.0
        %923 = vmatpush1.msra.mxu0 0.0
        %924 = vmatprep.subr.mxu0 0.0
        %925 = vmatpush1.msra.mxu0 0.0
        %926 = vmatprep.subr.mxu0 0.0
        %927 = vmatpush1.msra.mxu0 0.0
        %928 = vmatprep.subr.mxu0 0.0
        %929 = vmatpush1.msra.mxu0 0.0
        %930 = vmatprep.subr.mxu0 0.0
        %931 = vmatpush1.msra.mxu0 0.0
        %932 = vmatprep.subr.mxu0 0.0
        %933 = vmatpush1.msra.mxu0 0.0
        %934 = vmatprep.subr.mxu0 0.0
        %935 = vmatpush1.msra.mxu0 0.0
        %936 = vmatprep.subr.mxu0 0.0
        %937 = vmatpush1.msra.mxu0 0.0
        %938 = vmatprep.subr.mxu0 0.0
        %939 = vmatpush1.msra.mxu0 0.0
        %940 = vmatprep.subr.mxu0 0.0
        %941 = vmatpush1.msra.mxu0 0.0
        %942 = vmatprep.subr.mxu0 0.0
        %943 = vmatpush1.msra.mxu0 0.0
        %944 = vmatprep.subr.mxu0 0.0
        %945 = vmatpush1.msra.mxu0 0.0
        %946 = vmatprep.subr.mxu0 0.0
        %947 = vmatpush1.msra.mxu0 0.0
        %948 = vmatprep.subr.mxu0 0.0
        %949 = vmatpush1.msra.mxu0 0.0
        %950 = vmatprep.subr.mxu0 0.0
        %951 = vmatpush1.msra.mxu0 0.0
        %952 = vmatprep.subr.mxu0 0.0
        %953 = vmatpush1.msra.mxu0 0.0
        %954 = vmatprep.subr.mxu0 0.0
        %955 = vmatpush1.msra.mxu0 0.0
        %956 = vmatprep.subr.mxu0 0.0
        %957 = vmatpush1.msra.mxu0 0.0
        %958 = vmatprep.subr.mxu0 0.0
        %959 = vmatpush1.msra.mxu0 0.0
        %960 = vmatprep.subr.mxu0 0.0
        %961 = vmatpush1.msra.mxu0 0.0
        %962 = vmatprep.subr.mxu0 0.0
        %963 = vmatpush1.msra.mxu0 0.0
        %964 = vmatprep.subr.mxu0 0.0
        %965 = vmatpush1.msra.mxu0 0.0
        %966 = vmatprep.mubr.f32.mxu0 0.0
        %967 = vmatmul.mubr.f32.gmra.mrb[0].mxu0 %v897
        %v968 = vpop.f32.mrb[0].mxu0
        %v969 = vadd.f32 %v894, %v968
        %v970 = vpop.f32.mrb[0].mxu0
        %971 = vmatprep.mubr.f32.mxu0 0.0
        %972 = vmatmul.mubr.f32.gmra.mrb[0].mxu0 %v900
        %v973 = vpop.f32.mrb[0].mxu0
        %v974 = vadd.f32 %v894, %v973
        %v975 = vpop.f32.mrb[0].mxu0
        %976 = vdwg.mxu0
        %v977 = vsel %vm885, %v969, 0.0
        %978 = vadd.xlane.f32.xlu0 %v977
        %v979 = vpop.xlane.xlu0 %978
        %v980 = vsel %vm885, %v974, 0.0
        %981 = vadd.xlane.f32.xlu0 %v980
        %v982 = vpop.xlane.xlu0 %981
        %v983 = vrcp.pop 8.0
        %v984 = vmul.f32 %v979, %v983
        %v985 = vmul.f32 %v982, %v983
        %v986 = vsub.f32 %v969, %v984
        %v987 = vsub.f32 %v974, %v985
        %v988 = vmul.f32 %v986, %v986
        %v989 = vmul.f32 %v987, %v987
        %v990 = vsel %vm885, %v988, 0.0
        %991 = vadd.xlane.f32.xlu0 %v990
        %v992 = vpop.xlane.xlu0 %991
        %v993 = vsel %vm885, %v989, 0.0
        %994 = vadd.xlane.f32.xlu0 %v993
        %v995 = vpop.xlane.xlu0 %994
        %v996 = vmul.f32 %v992, %v983
        %v997 = vmul.f32 %v995, %v983
        %v998 = vadd.f32 %v996, 1e-05
        %v999 = vadd.f32 %v997, 1e-05
        %v1000 = vrsqrt.pop %v998
        %v1001 = vrsqrt.pop %v999
        %v1002 = vmul.f32 %v986, %v1000
        %v1003 = vmul.f32 %v987, %v1001
        %v1004 = vld [vmem:[#allocation23] sm:$0x1]
        %v1006 = vlaneseq
        %v1007 = vshrl.u32 %v1006, 7
        %v1008 = vsub.s32 0, %v1007
        %v1009 = vrot.slane %v1004, %v1008
        %v1011 = vmul.f32 %v1002, %v1009
        %v1012 = vmul.f32 %v1003, %v1009
        %v1013 = vld [vmem:[#allocation24] sm:$0x1]
        %v1015 = vlaneseq
        %v1016 = vshrl.u32 %v1015, 7
        %v1017 = vsub.s32 0, %v1016
        %v1018 = vrot.slane %v1013, %v1017
        %v1020 = vadd.f32 %v1011, %v1018
        %v1021 = vadd.f32 %v1012, %v1018
        %v1022 = vld [vmem:[#allocation11] sm:$0xff]
        %v1023 = vld [vmem:[#allocation14] sm:$0x1]
        %v1025 = vlaneseq
        %v1026 = vshrl.u32 %v1025, 7
        %v1027 = vsub.s32 0, %v1026
        %v1028 = vrot.slane %v1023, %v1027
        %v1031 = vsel %vm885, %v1020, 0
        %v1034 = vsel %vm885, %v1021, 0
        %1036 = vmatprep.subr.mxu0 0.0
        %1037 = vmatpush1.msra.mxu0 %v1022
        %1038 = vmatprep.subr.mxu0 0.0
        %1039 = vmatpush1.msra.mxu0 0.0
        %1040 = vmatprep.subr.mxu0 0.0
        %1041 = vmatpush1.msra.mxu0 0.0
        %1042 = vmatprep.subr.mxu0 0.0
        %1043 = vmatpush1.msra.mxu0 0.0
        %1044 = vmatprep.subr.mxu0 0.0
        %1045 = vmatpush1.msra.mxu0 0.0
        %1046 = vmatprep.subr.mxu0 0.0
        %1047 = vmatpush1.msra.mxu0 0.0
        %1048 = vmatprep.subr.mxu0 0.0
        %1049 = vmatpush1.msra.mxu0 0.0
        %1050 = vmatprep.subr.mxu0 0.0
        %1051 = vmatpush1.msra.mxu0 0.0
        %1052 = vmatprep.subr.mxu0 0.0
        %1053 = vmatpush1.msra.mxu0 0.0
        %1054 = vmatprep.subr.mxu0 0.0
        %1055 = vmatpush1.msra.mxu0 0.0
        %1056 = vmatprep.subr.mxu0 0.0
        %1057 = vmatpush1.msra.mxu0 0.0
        %1058 = vmatprep.subr.mxu0 0.0
        %1059 = vmatpush1.msra.mxu0 0.0
        %1060 = vmatprep.subr.mxu0 0.0
        %1061 = vmatpush1.msra.mxu0 0.0
        %1062 = vmatprep.subr.mxu0 0.0
        %1063 = vmatpush1.msra.mxu0 0.0
        %1064 = vmatprep.subr.mxu0 0.0
        %1065 = vmatpush1.msra.mxu0 0.0
        %1066 = vmatprep.subr.mxu0 0.0
        %1067 = vmatpush1.msra.mxu0 0.0
        %1068 = vmatprep.subr.mxu0 0.0
        %1069 = vmatpush1.msra.mxu0 0.0
        %1070 = vmatprep.subr.mxu0 0.0
        %1071 = vmatpush1.msra.mxu0 0.0
        %1072 = vmatprep.subr.mxu0 0.0
        %1073 = vmatpush1.msra.mxu0 0.0
        %1074 = vmatprep.subr.mxu0 0.0
        %1075 = vmatpush1.msra.mxu0 0.0
        %1076 = vmatprep.subr.mxu0 0.0
        %1077 = vmatpush1.msra.mxu0 0.0
        %1078 = vmatprep.subr.mxu0 0.0
        %1079 = vmatpush1.msra.mxu0 0.0
        %1080 = vmatprep.subr.mxu0 0.0
        %1081 = vmatpush1.msra.mxu0 0.0
        %1082 = vmatprep.subr.mxu0 0.0
        %1083 = vmatpush1.msra.mxu0 0.0
        %1084 = vmatprep.subr.mxu0 0.0
        %1085 = vmatpush1.msra.mxu0 0.0
        %1086 = vmatprep.subr.mxu0 0.0
        %1087 = vmatpush1.msra.mxu0 0.0
        %1088 = vmatprep.subr.mxu0 0.0
        %1089 = vmatpush1.msra.mxu0 0.0
        %1090 = vmatprep.subr.mxu0 0.0
        %1091 = vmatpush1.msra.mxu0 0.0
        %1092 = vmatprep.subr.mxu0 0.0
        %1093 = vmatpush1.msra.mxu0 0.0
        %1094 = vmatprep.subr.mxu0 0.0
        %1095 = vmatpush1.msra.mxu0 0.0
        %1096 = vmatprep.subr.mxu0 0.0
        %1097 = vmatpush1.msra.mxu0 0.0
        %1098 = vmatprep.subr.mxu0 0.0
        %1099 = vmatpush1.msra.mxu0 0.0
        %1100 = vmatprep.mubr.f32.mxu0 0.0
        %1101 = vmatmul.mubr.f32.gmra.mrb[0].mxu0 %v1031
        %v1102 = vpop.f32.mrb[0].mxu0
        %v1103 = vadd.f32 %v1028, %v1102
        %v1104 = vpop.f32.mrb[0].mxu0
        %1105 = vmatprep.mubr.f32.mxu0 0.0
        %1106 = vmatmul.mubr.f32.gmra.mrb[0].mxu0 %v1034
        %v1107 = vpop.f32.mrb[0].mxu0
        %v1108 = vadd.f32 %v1028, %v1107
        %v1109 = vpop.f32.mrb[0].mxu0
        %1110 = vdwg.mxu0
        %vm1111 = vcmask 261120
        %v1112 = vsel %vm1111, %v1103, -inf
        %1113 = vmax.xlane.f32.xlu0 %v1112
        %v1114 = vpop.xlane.xlu0 %1113
        %v1115 = vsel %vm1111, %v1108, -inf
        %1116 = vmax.xlane.f32.xlu0 %v1115
        %v1117 = vpop.xlane.xlu0 %1116
        %v1118 = vsub.f32 %v1103, %v1114
        %v1119 = vsub.f32 %v1108, %v1117
        %v1120 = vmul.f32 %v1118, 1.442695
        %v1121 = vpow.pop %v1120
        %v1122 = vmul.f32 %v1119, 1.442695
        %v1123 = vpow.pop %v1122
        %v1124 = vsel %vm1111, %v1121, 0.0
        %1125 = vadd.xlane.f32.xlu0 %v1124
        %v1126 = vpop.xlane.xlu0 %1125
        %v1127 = vsel %vm1111, %v1123, 0.0
        %1128 = vadd.xlane.f32.xlu0 %v1127
        %v1129 = vpop.xlane.xlu0 %1128
        %v1130 = vrcp.pop %v1126
        %v1131 = vmul.f32 1.0, %v1130
        %v1132 = vrcp.pop %v1129
        %v1133 = vmul.f32 1.0, %v1132
        %v1134 = vmul.f32 %v1121, %v1131
        %v1135 = vmul.f32 %v1123, %v1133
        %v1136 = vlaneseq
        %v1137 = vand.u32 %v1136, 127
        %v1138 = vld [vmem:[%s658] sm:$0xff]
        %v1139 = vld [vmem:[%s658 + $0x8] sm:$0xff]
        %1140 = vset.pattern.permute.xlu0 0
        %1141 = vperm.xlu0 %1140, %v1138
        %v1142 = vpop.permute.xlu0 %1141
        %1143 = vset.pattern.permute.xlu0 0
        %1144 = vperm.xlu0 %1143, %v1139
        %v1145 = vpop.permute.xlu0 %1144
        %vm1146 = vcmp.eq.s32.totalorder %v1137, %v1142
        %vm1147 = vcmp.eq.s32.totalorder %v1137, %v1145
        %v1148 = vsub.f32 %v1134, 1.0
        %v1149 = vsub.f32 %v1135, 1.0
        %v1150 = vsel %vm1146, %v1148, %v1134
        %v1151 = vsel %vm1147, %v1149, %v1135
        %v1152 = vld [vmem:[#allocation12] sm:$0xff]
        %v1153 = vld [vmem:[#allocation12 + $0x8] sm:$0xff]
        %v1154 = vld [vmem:[#allocation12 + $0x10] sm:$0xff]
        %v1155 = vld [vmem:[#allocation12 + $0x18] sm:$0xff]
        %v1157 = vsel %vm1111, %v1150, 0
        %v1160 = vsel %vm1111, %v1151, 0
        %1162 = vmatprep.subr.mxu0 0.0
        %1163 = vmatpush1.msra.mxu0 %v1152
        %1164 = vmatprep.subr.mxu0 0.0
        %1165 = vmatpush1.msra.mxu0 %v1153
        %1166 = vmatprep.subr.mxu0 0.0
        %1167 = vmatpush1.msra.mxu0 %v1154
        %1168 = vmatprep.subr.mxu0 0.0
        %1169 = vmatpush1.msra.mxu0 %v1155
        %1170 = vmatprep.subr.mxu0 0.0
        %1171 = vmatpush1.msra.mxu0 0.0
        %1172 = vmatprep.subr.mxu0 0.0
        %1173 = vmatpush1.msra.mxu0 0.0
        %1174 = vmatprep.subr.mxu0 0.0
        %1175 = vmatpush1.msra.mxu0 0.0
        %1176 = vmatprep.subr.mxu0 0.0
        %1177 = vmatpush1.msra.mxu0 0.0
        %1178 = vmatprep.subr.mxu0 0.0
        %1179 = vmatpush1.msra.mxu0 0.0
        %1180 = vmatprep.subr.mxu0 0.0
        %1181 = vmatpush1.msra.mxu0 0.0
        %1182 = vmatprep.subr.mxu0 0.0
        %1183 = vmatpush1.msra.mxu0 0.0
        %1184 = vmatprep.subr.mxu0 0.0
        %1185 = vmatpush1.msra.mxu0 0.0
        %1186 = vmatprep.subr.mxu0 0.0
        %1187 = vmatpush1.msra.mxu0 0.0
        %1188 = vmatprep.subr.mxu0 0.0
        %1189 = vmatpush1.msra.mxu0 0.0
        %1190 = vmatprep.subr.mxu0 0.0
        %1191 = vmatpush1.msra.mxu0 0.0
        %1192 = vmatprep.subr.mxu0 0.0
        %1193 = vmatpush1.msra.mxu0 0.0
        %1194 = vmatprep.subr.mxu0 0.0
        %1195 = vmatpush1.msra.mxu0 0.0
        %1196 = vmatprep.subr.mxu0 0.0
        %1197 = vmatpush1.msra.mxu0 0.0
        %1198 = vmatprep.subr.mxu0 0.0
        %1199 = vmatpush1.msra.mxu0 0.0
        %1200 = vmatprep.subr.mxu0 0.0
        %1201 = vmatpush1.msra.mxu0 0.0
        %1202 = vmatprep.subr.mxu0 0.0
        %1203 = vmatpush1.msra.mxu0 0.0
        %1204 = vmatprep.subr.mxu0 0.0
        %1205 = vmatpush1.msra.mxu0 0.0
        %1206 = vmatprep.subr.mxu0 0.0
        %1207 = vmatpush1.msra.mxu0 0.0
        %1208 = vmatprep.subr.mxu0 0.0
        %1209 = vmatpush1.msra.mxu0 0.0
        %1210 = vmatprep.subr.mxu0 0.0
        %1211 = vmatpush1.msra.mxu0 0.0
        %1212 = vmatprep.subr.mxu0 0.0
        %1213 = vmatpush1.msra.mxu0 0.0
        %1214 = vmatprep.subr.mxu0 0.0
        %1215 = vmatpush1.msra.mxu0 0.0
        %1216 = vmatprep.subr.mxu0 0.0
        %1217 = vmatpush1.msra.mxu0 0.0
        %1218 = vmatprep.subr.mxu0 0.0
        %1219 = vmatpush1.msra.mxu0 0.0
        %1220 = vmatprep.subr.mxu0 0.0
        %1221 = vmatpush1.msra.mxu0 0.0
        %1222 = vmatprep.subr.mxu0 0.0
        %1223 = vmatpush1.msra.mxu0 0.0
        %1224 = vmatprep.subr.mxu0 0.0
        %1225 = vmatpush1.msra.mxu0 0.0
        %1226 = vmatprep.mubr.f32.mxu0 0.0
        %1227 = vmatmul.mubr.f32.gmra.mrb[0].mxu0 %v1157
        %v1228 = vpop.f32.mrb[0].mxu0
        %v1229 = vadd.f32 0.0, %v1228
        %v1230 = vpop.f32.mrb[0].mxu0
        %1231 = vmatprep.mubr.f32.mxu0 0.0
        %1232 = vmatmul.mubr.f32.gmra.mrb[0].mxu0 %v1160
        %v1233 = vpop.f32.mrb[0].mxu0
        %v1234 = vadd.f32 0.0, %v1233
        %v1235 = vpop.f32.mrb[0].mxu0
        %1236 = vdwg.mxu0
        %v1237 = vmul.f32 %v1229, %v1009
        %v1238 = vmul.f32 %v1234, %v1009
        %v1239 = vsel %vm885, %v1237, 0.0
        %1240 = vadd.xlane.f32.xlu0 %v1239
        %v1241 = vpop.xlane.xlu0 %1240
        %v1242 = vsel %vm885, %v1238, 0.0
        %1243 = vadd.xlane.f32.xlu0 %v1242
        %v1244 = vpop.xlane.xlu0 %1243
        %v1245 = vmul.f32 %v1241, %v983
        %v1246 = vmul.f32 %v1244, %v983
        %v1247 = vmul.f32 %v1237, %v1002
        %v1248 = vmul.f32 %v1238, %v1003
        %v1249 = vsel %vm885, %v1247, 0.0
        %1250 = vadd.xlane.f32.xlu0 %v1249
        %v1251 = vpop.xlane.xlu0 %1250
        %v1252 = vsel %vm885, %v1248, 0.0
        %1253 = vadd.xlane.f32.xlu0 %v1252
        %v1254 = vpop.xlane.xlu0 %1253
        %v1255 = vmul.f32 %v1251, %v983
        %v1256 = vmul.f32 %v1254, %v983
        %v1257 = vsub.f32 %v1237, %v1245
        %v1258 = vsub.f32 %v1238, %v1246
        %v1259 = vmul.f32 %v1002, %v1255
        %v1260 = vmul.f32 %v1003, %v1256
        %v1261 = vsub.f32 %v1257, %v1259
        %v1262 = vsub.f32 %v1258, %v1260
        %v1263 = vmul.f32 %v1000, %v1261
        %v1264 = vmul.f32 %v1001, %v1262
        %v1265 = vld [vmem:[#allocation5] sm:$0x1]
        %v1266 = vsel %vm885, %v1263, 0.0
        %v1267 = vsel %vm885, %v1264, 0.0
        %v1268 = vadd.f32 %v1266, %v1267
        %v1269 = vrot.slane %v1268, 4
        %v1270 = vadd.f32 %v1268, %v1269
        %v1271 = vrot.slane %v1270, 2
        %v1272 = vadd.f32 %v1270, %v1271
        %v1273 = vrot.slane %v1272, 1
        %v1274 = vadd.f32 %v1272, %v1273
        %v1275 = vadd.f32 %v1265, %v1274
        %vm1276 = vcmask 57344
        %1277 = vst.msk [vmem:[#allocation5] sm:$0x1] %vm1276, %v1275
        %v1278 = vld [vmem:[#allocation4] sm:$0xff]
        %1279 = vxpose.xlu0.b32.start [1/16] %v1263, 128
        %1280 = vxpose.xlu0.b32.cont [2/16] %v1264, 128
        %1281 = vxpose.xlu0.b32.cont [3/16] 0.0, 128
        %1282 = vxpose.xlu0.b32.cont [4/16] 0.0, 128
        %1283 = vxpose.xlu0.b32.cont [5/16] 0.0, 128
        %1284 = vxpose.xlu0.b32.cont [6/16] 0.0, 128
        %1285 = vxpose.xlu0.b32.cont [7/16] 0.0, 128
        %1286 = vxpose.xlu0.b32.cont [8/16] 0.0, 128
        %1287 = vxpose.xlu0.b32.cont [9/16] 0.0, 128
        %1288 = vxpose.xlu0.b32.cont [10/16] 0.0, 128
        %1289 = vxpose.xlu0.b32.cont [11/16] 0.0, 128
        %1290 = vxpose.xlu0.b32.cont [12/16] 0.0, 128
        %1291 = vxpose.xlu0.b32.cont [13/16] 0.0, 128
        %1292 = vxpose.xlu0.b32.cont [14/16] 0.0, 128
        %1293 = vxpose.xlu0.b32.cont [15/16] 0.0, 128
        %1294 = vxpose.xlu0.b32.end [16/16] 0.0, 128
        %v1295 = vpop.trf.xlu0
        %v1296 = vpop.trf.xlu0
        %v1297 = vpop.trf.xlu0
        %v1298 = vpop.trf.xlu0
        %v1299 = vpop.trf.xlu0
        %v1300 = vpop.trf.xlu0
        %v1301 = vpop.trf.xlu0
        %v1302 = vpop.trf.xlu0
        %v1303 = vpop.trf.xlu0
        %v1304 = vpop.trf.xlu0
        %v1305 = vpop.trf.xlu0
        %v1306 = vpop.trf.xlu0
        %v1307 = vpop.trf.xlu0
        %v1308 = vpop.trf.xlu0
        %v1309 = vpop.trf.xlu0
        %v1310 = vpop.trf.xlu0
        %v1312 = vsel %vm801, %v1295, 0
        %1314 = vmatprep.subr.mxu0 0.0
        %1315 = vmatpush1.msra.mxu0 %v883
        %1316 = vmatprep.subr.mxu0 0.0
        %1317 = vmatpush1.msra.mxu0 %v884
        %1318 = vmatprep.subr.mxu0 0.0
        %1319 = vmatpush1.msra.mxu0 0.0
        %1320 = vmatprep.subr.mxu0 0.0
        %1321 = vmatpush1.msra.mxu0 0.0
        %1322 = vmatprep.subr.mxu0 0.0
        %1323 = vmatpush1.msra.mxu0 0.0
        %1324 = vmatprep.subr.mxu0 0.0
        %1325 = vmatpush1.msra.mxu0 0.0
        %1326 = vmatprep.subr.mxu0 0.0
        %1327 = vmatpush1.msra.mxu0 0.0
        %1328 = vmatprep.subr.mxu0 0.0
        %1329 = vmatpush1.msra.mxu0 0.0
        %1330 = vmatprep.subr.mxu0 0.0
        %1331 = vmatpush1.msra.mxu0 0.0
        %1332 = vmatprep.subr.mxu0 0.0
        %1333 = vmatpush1.msra.mxu0 0.0
        %1334 = vmatprep.subr.mxu0 0.0
        %1335 = vmatpush1.msra.mxu0 0.0
        %1336 = vmatprep.subr.mxu0 0.0
        %1337 = vmatpush1.msra.mxu0 0.0
        %1338 = vmatprep.subr.mxu0 0.0
        %1339 = vmatpush1.msra.mxu0 0.0
        %1340 = vmatprep.subr.mxu0 0.0
        %1341 = vmatpush1.msra.mxu0 0.0
        %1342 = vmatprep.subr.mxu0 0.0
        %1343 = vmatpush1.msra.mxu0 0.0
        %1344 = vmatprep.subr.mxu0 0.0
        %1345 = vmatpush1.msra.mxu0 0.0
        %1346 = vmatprep.subr.mxu0 0.0
        %1347 = vmatpush1.msra.mxu0 0.0
        %1348 = vmatprep.subr.mxu0 0.0
        %1349 = vmatpush1.msra.mxu0 0.0
        %1350 = vmatprep.subr.mxu0 0.0
        %1351 = vmatpush1.msra.mxu0 0.0
        %1352 = vmatprep.subr.mxu0 0.0
        %1353 = vmatpush1.msra.mxu0 0.0
        %1354 = vmatprep.subr.mxu0 0.0
        %1355 = vmatpush1.msra.mxu0 0.0
        %1356 = vmatprep.subr.mxu0 0.0
        %1357 = vmatpush1.msra.mxu0 0.0
        %1358 = vmatprep.subr.mxu0 0.0
        %1359 = vmatpush1.msra.mxu0 0.0
        %1360 = vmatprep.subr.mxu0 0.0
        %1361 = vmatpush1.msra.mxu0 0.0
        %1362 = vmatprep.subr.mxu0 0.0
        %1363 = vmatpush1.msra.mxu0 0.0
        %1364 = vmatprep.subr.mxu0 0.0
        %1365 = vmatpush1.msra.mxu0 0.0
        %1366 = vmatprep.subr.mxu0 0.0
        %1367 = vmatpush1.msra.mxu0 0.0
        %1368 = vmatprep.subr.mxu0 0.0
        %1369 = vmatpush1.msra.mxu0 0.0
        %1370 = vmatprep.subr.mxu0 0.0
        %1371 = vmatpush1.msra.mxu0 0.0
        %1372 = vmatprep.subr.mxu0 0.0
        %1373 = vmatpush1.msra.mxu0 0.0
        %1374 = vmatprep.subr.mxu0 0.0
        %1375 = vmatpush1.msra.mxu0 0.0
        %1376 = vmatprep.subr.mxu0 0.0
        %1377 = vmatpush1.msra.mxu0 0.0
        %1378 = vmatprep.mubr.f32.mxu0 0.0
        %1379 = vmatmul.mubr.f32.gmra.mrb[0].mxu0 %v1312
        %v1380 = vpop.f32.mrb[0].mxu0
        %v1381 = vadd.f32 0.0, %v1380
        %v1382 = vpop.f32.mrb[0].mxu0
        %1383 = vdwg.mxu0
        %v1384 = vadd.f32 %v1278, %v1381
        %1385 = vst.msk [vmem:[#allocation4] sm:$0xff] %vm885, %v1384
        %v1386 = vld [vmem:[#allocation20] sm:$0xff]
        %v1388 = vsel %vm885, %v1263, 0
        %v1391 = vsel %vm885, %v1264, 0
        %1393 = vmatprep.subr.mxu0 0.0
        %1394 = vmatpush1.msra.mxu0 %v1386
        %1395 = vmatprep.subr.mxu0 0.0
        %1396 = vmatpush1.msra.mxu0 0.0
        %1397 = vmatprep.subr.mxu0 0.0
        %1398 = vmatpush1.msra.mxu0 0.0
        %1399 = vmatprep.subr.mxu0 0.0
        %1400 = vmatpush1.msra.mxu0 0.0
        %1401 = vmatprep.subr.mxu0 0.0
        %1402 = vmatpush1.msra.mxu0 0.0
        %1403 = vmatprep.subr.mxu0 0.0
        %1404 = vmatpush1.msra.mxu0 0.0
        %1405 = vmatprep.subr.mxu0 0.0
        %1406 = vmatpush1.msra.mxu0 0.0
        %1407 = vmatprep.subr.mxu0 0.0
        %1408 = vmatpush1.msra.mxu0 0.0
        %1409 = vmatprep.subr.mxu0 0.0
        %1410 = vmatpush1.msra.mxu0 0.0
        %1411 = vmatprep.subr.mxu0 0.0
        %1412 = vmatpush1.msra.mxu0 0.0
        %1413 = vmatprep.subr.mxu0 0.0
        %1414 = vmatpush1.msra.mxu0 0.0
        %1415 = vmatprep.subr.mxu0 0.0
        %1416 = vmatpush1.msra.mxu0 0.0
        %1417 = vmatprep.subr.mxu0 0.0
        %1418 = vmatpush1.msra.mxu0 0.0
        %1419 = vmatprep.subr.mxu0 0.0
        %1420 = vmatpush1.msra.mxu0 0.0
        %1421 = vmatprep.subr.mxu0 0.0
        %1422 = vmatpush1.msra.mxu0 0.0
        %1423 = vmatprep.subr.mxu0 0.0
        %1424 = vmatpush1.msra.mxu0 0.0
        %1425 = vmatprep.subr.mxu0 0.0
        %1426 = vmatpush1.msra.mxu0 0.0
        %1427 = vmatprep.subr.mxu0 0.0
        %1428 = vmatpush1.msra.mxu0 0.0
        %1429 = vmatprep.subr.mxu0 0.0
        %1430 = vmatpush1.msra.mxu0 0.0
        %1431 = vmatprep.subr.mxu0 0.0
        %1432 = vmatpush1.msra.mxu0 0.0
        %1433 = vmatprep.subr.mxu0 0.0
        %1434 = vmatpush1.msra.mxu0 0.0
        %1435 = vmatprep.subr.mxu0 0.0
        %1436 = vmatpush1.msra.mxu0 0.0
        %1437 = vmatprep.subr.mxu0 0.0
        %1438 = vmatpush1.msra.mxu0 0.0
        %1439 = vmatprep.subr.mxu0 0.0
        %1440 = vmatpush1.msra.mxu0 0.0
        %1441 = vmatprep.subr.mxu0 0.0
        %1442 = vmatpush1.msra.mxu0 0.0
        %1443 = vmatprep.subr.mxu0 0.0
        %1444 = vmatpush1.msra.mxu0 0.0
        %1445 = vmatprep.subr.mxu0 0.0
        %1446 = vmatpush1.msra.mxu0 0.0
        %1447 = vmatprep.subr.mxu0 0.0
        %1448 = vmatpush1.msra.mxu0 0.0
        %1449 = vmatprep.subr.mxu0 0.0
        %1450 = vmatpush1.msra.mxu0 0.0
        %1451 = vmatprep.subr.mxu0 0.0
        %1452 = vmatpush1.msra.mxu0 0.0
        %1453 = vmatprep.subr.mxu0 0.0
        %1454 = vmatpush1.msra.mxu0 0.0
        %1455 = vmatprep.subr.mxu0 0.0
        %1456 = vmatpush1.msra.mxu0 0.0
        %1457 = vmatprep.mubr.f32.mxu0 0.0
        %1458 = vmatmul.mubr.f32.gmra.mrb[0].mxu0 %v1388
        %v1459 = vpop.f32.mrb[0].mxu0
        %v1460 = vadd.f32 0.0, %v1459
        %v1461 = vpop.f32.mrb[0].mxu0
        %1462 = vmatprep.mubr.f32.mxu0 0.0
        %1463 = vmatmul.mubr.f32.gmra.mrb[0].mxu0 %v1391
        %v1464 = vpop.f32.mrb[0].mxu0
        %v1465 = vadd.f32 0.0, %v1464
        %v1466 = vpop.f32.mrb[0].mxu0
        %1467 = vdwg.mxu0
        %vm1468 = vcmp.gt.f32.partialorder %v875, 0.0
        %vm1469 = vcmp.gt.f32.partialorder %v880, 0.0
        %v1470 = vsel %vm1468, %v1460, 0.0
        %v1471 = vsel %vm1469, %v1465, 0.0
        %v1472 = vld [vmem:[#allocation3] sm:$0x1]
        %v1473 = vsel %vm885, %v1470, 0.0
        %v1474 = vsel %vm885, %v1471, 0.0
        %v1475 = vadd.f32 %v1473, %v1474
        %v1476 = vrot.slane %v1475, 4
        %v1477 = vadd.f32 %v1475, %v1476
        %v1478 = vrot.slane %v1477, 2
        %v1479 = vadd.f32 %v1477, %v1478
        %v1480 = vrot.slane %v1479, 1
        %v1481 = vadd.f32 %v1479, %v1480
        %v1482 = vadd.f32 %v1472, %v1481
        %1483 = vst.msk [vmem:[#allocation3] sm:$0x1] %vm1276, %v1482
        %v1484 = vld [vmem:[#allocation2] sm:$0xff]
        %1485 = vxpose.xlu0.b32.start [1/16] %v1470, 128
        %1486 = vxpose.xlu0.b32.cont [2/16] %v1471, 128
        %1487 = vxpose.xlu0.b32.cont [3/16] 0.0, 128
        %1488 = vxpose.xlu0.b32.cont [4/16] 0.0, 128
        %1489 = vxpose.xlu0.b32.cont [5/16] 0.0, 128
        %1490 = vxpose.xlu0.b32.cont [6/16] 0.0, 128
        %1491 = vxpose.xlu0.b32.cont [7/16] 0.0, 128
        %1492 = vxpose.xlu0.b32.cont [8/16] 0.0, 128
        %1493 = vxpose.xlu0.b32.cont [9/16] 0.0, 128
        %1494 = vxpose.xlu0.b32.cont [10/16] 0.0, 128
        %1495 = vxpose.xlu0.b32.cont [11/16] 0.0, 128
        %1496 = vxpose.xlu0.b32.cont [12/16] 0.0, 128
        %1497 = vxpose.xlu0.b32.cont [13/16] 0.0, 128
        %1498 = vxpose.xlu0.b32.cont [14/16] 0.0, 128
        %1499 = vxpose.xlu0.b32.cont [15/16] 0.0, 128
        %1500 = vxpose.xlu0.b32.end [16/16] 0.0, 128
        %v1501 = vpop.trf.xlu0
        %v1502 = vpop.trf.xlu0
        %v1503 = vpop.trf.xlu0
        %v1504 = vpop.trf.xlu0
        %v1505 = vpop.trf.xlu0
        %v1506 = vpop.trf.xlu0
        %v1507 = vpop.trf.xlu0
        %v1508 = vpop.trf.xlu0
        %v1509 = vpop.trf.xlu0
        %v1510 = vpop.trf.xlu0
        %v1511 = vpop.trf.xlu0
        %v1512 = vpop.trf.xlu0
        %v1513 = vpop.trf.xlu0
        %v1514 = vpop.trf.xlu0
        %v1515 = vpop.trf.xlu0
        %v1516 = vpop.trf.xlu0
        %v1518 = vsel %vm801, %v1501, 0
        %1520 = vmatprep.subr.mxu0 0.0
        %1521 = vmatpush1.msra.mxu0 %v790
        %1522 = vmatprep.subr.mxu0 0.0
        %1523 = vmatpush1.msra.mxu0 %v791
        %1524 = vmatprep.subr.mxu0 0.0
        %1525 = vmatpush1.msra.mxu0 0.0
        %1526 = vmatprep.subr.mxu0 0.0
        %1527 = vmatpush1.msra.mxu0 0.0
        %1528 = vmatprep.subr.mxu0 0.0
        %1529 = vmatpush1.msra.mxu0 0.0
        %1530 = vmatprep.subr.mxu0 0.0
        %1531 = vmatpush1.msra.mxu0 0.0
        %1532 = vmatprep.subr.mxu0 0.0
        %1533 = vmatpush1.msra.mxu0 0.0
        %1534 = vmatprep.subr.mxu0 0.0
        %1535 = vmatpush1.msra.mxu0 0.0
        %1536 = vmatprep.subr.mxu0 0.0
        %1537 = vmatpush1.msra.mxu0 0.0
        %1538 = vmatprep.subr.mxu0 0.0
        %1539 = vmatpush1.msra.mxu0 0.0
        %1540 = vmatprep.subr.mxu0 0.0
        %1541 = vmatpush1.msra.mxu0 0.0
        %1542 = vmatprep.subr.mxu0 0.0
        %1543 = vmatpush1.msra.mxu0 0.0
        %1544 = vmatprep.subr.mxu0 0.0
        %1545 = vmatpush1.msra.mxu0 0.0
        %1546 = vmatprep.subr.mxu0 0.0
        %1547 = vmatpush1.msra.mxu0 0.0
        %1548 = vmatprep.subr.mxu0 0.0
        %1549 = vmatpush1.msra.mxu0 0.0
        %1550 = vmatprep.subr.mxu0 0.0
        %1551 = vmatpush1.msra.mxu0 0.0
        %1552 = vmatprep.subr.mxu0 0.0
        %1553 = vmatpush1.msra.mxu0 0.0
        %1554 = vmatprep.subr.mxu0 0.0
        %1555 = vmatpush1.msra.mxu0 0.0
        %1556 = vmatprep.subr.mxu0 0.0
        %1557 = vmatpush1.msra.mxu0 0.0
        %1558 = vmatprep.subr.mxu0 0.0
        %1559 = vmatpush1.msra.mxu0 0.0
        %1560 = vmatprep.subr.mxu0 0.0
        %1561 = vmatpush1.msra.mxu0 0.0
        %1562 = vmatprep.subr.mxu0 0.0
        %1563 = vmatpush1.msra.mxu0 0.0
        %1564 = vmatprep.subr.mxu0 0.0
        %1565 = vmatpush1.msra.mxu0 0.0
        %1566 = vmatprep.subr.mxu0 0.0
        %1567 = vmatpush1.msra.mxu0 0.0
        %1568 = vmatprep.subr.mxu0 0.0
        %1569 = vmatpush1.msra.mxu0 0.0
        %1570 = vmatprep.subr.mxu0 0.0
        %1571 = vmatpush1.msra.mxu0 0.0
        %1572 = vmatprep.subr.mxu0 0.0
        %1573 = vmatpush1.msra.mxu0 0.0
        %1574 = vmatprep.subr.mxu0 0.0
        %1575 = vmatpush1.msra.mxu0 0.0
        %1576 = vmatprep.subr.mxu0 0.0
        %1577 = vmatpush1.msra.mxu0 0.0
        %1578 = vmatprep.subr.mxu0 0.0
        %1579 = vmatpush1.msra.mxu0 0.0
        %1580 = vmatprep.subr.mxu0 0.0
        %1581 = vmatpush1.msra.mxu0 0.0
        %1582 = vmatprep.subr.mxu0 0.0
        %1583 = vmatpush1.msra.mxu0 0.0
        %1584 = vmatprep.mubr.f32.mxu0 0.0
        %1585 = vmatmul.mubr.f32.gmra.mrb[0].mxu0 %v1518
        %v1586 = vpop.f32.mrb[0].mxu0
        %v1587 = vadd.f32 0.0, %v1586
        %v1588 = vpop.f32.mrb[0].mxu0
        %1589 = vdwg.mxu0
        %v1590 = vadd.f32 %v1484, %v1587
        %1591 = vst.msk [vmem:[#allocation2] sm:$0xff] %vm801, %v1590
        %p1592 = scmp.eq.s32.totalorder %s53, 3
        // Predicated region
        $region121: #{fast_weight_layer.2} parent=67 // pred_check
          %p1593 = pneg %p1592
        $region122: #{fast_weight_layer.2} parent=67 // pred_check_branch
          %1595 = sbr.rel (%p1593) target = $region124
        $region123: #{fast_weight_layer.2} parent=67 // pred_region
          %v1596 = vld [vmem:[#allocation2] sm:$0xff]
          %1597 = vst.msk [vmem:[%s750] sm:$0xff] %vm801, %v1596
          %v1598 = vld [vmem:[#allocation3] sm:$0x1]
          %1599 = vst.msk [vmem:[%s756] sm:$0x1] %vm1276, %v1598
          %v1600 = vld [vmem:[#allocation4] sm:$0xff]
          %1601 = vst.msk [vmem:[%s763] sm:$0xff] %vm885, %v1600
          %v1602 = vld [vmem:[#allocation5] sm:$0x1]
          %1603 = vst.msk [vmem:[%s769] sm:$0x1] %vm1276, %v1602
        $region124: #{fast_weight_layer.2} parent=67 // pred_fallthru
          _
        %s1604 = sand.u32 %s342, 1
        %s1605 = scalar_lea.sflag [#allocation8], %s1604
        %s1606 = sand.u32 %s342, 1
        %s1607 = smul.addr %s1606, 16
        %s1608 = scalar_lea.vmem [#allocation26], %s1607
        %s1609 = sand.u32 %s48, 1
        %s1610 = scalar_lea.sflag [#allocation28], %s1609
        %s1611 = sand.u32 %s368, 1
        %s1612 = smul.addr %s1611, 8
        %s1613 = scalar_lea.vmem [#allocation27], %s1612
        %s1614 = sand.u32 %s48, 1
        %s1615 = scalar_lea.sflag [#allocation28], %s1614
        %s1616 = sand.u32 %s394, 1
        %s1617 = scalar_lea.vmem [#allocation29], %s1616
        %s1618 = sand.u32 %s48, 1
        %s1619 = scalar_lea.sflag [#allocation31], %s1618
        %s1620 = sand.u32 %s420, 1
        %s1621 = smul.addr %s1620, 8
        %s1622 = scalar_lea.vmem [#allocation30], %s1621
        %s1623 = sand.u32 %s48, 1
        %s1624 = scalar_lea.sflag [#allocation31], %s1623
        %s1625 = sand.u32 %s446, 1
        %s1626 = scalar_lea.vmem [#allocation32], %s1625
        // Predicated region
        $region125: #{fast_weight_layer.2} parent=67 // pred_check
          %p1627 = pneg %p352
        $region126: #{fast_weight_layer.2} parent=67 // pred_check_branch
          %1629 = sbr.rel (%p1627) target = $region128
        $region127: #{fast_weight_layer.2} parent=67 // pred_region
          %s1630 = smul.u32 %s52, 4
          %s1631 = sadd.s32 %s1630, %s53
          %s1632 = smul.u32 2, %s1631
          %s1634 = ssub.s32 256, 256
          %1635 = vsyncadd %s1605, %s1634
          %s1636 = smul.addr %s1632, 128
          %s1637 = scalar_lea.hbm %s12, %s1636
          %s1638 = sshll.u32 %s1608, 4
          %s1639 = int_to_ptr.vmem [resolvable:$true] %s1638
          %1644 = dma.vmem_to_hbm [thread:$0]  %s1639, 256, %s1637, %s1605, 128, 128, 8
        $region128: #{fast_weight_layer.2} parent=67 // pred_fallthru
          _
        // Predicated region
        $region129: #{fast_weight_layer.2} parent=67 // pred_check
          %p1645 = pneg %p378
        $region130: #{fast_weight_layer.2} parent=67 // pred_check_branch
          %1647 = sbr.rel (%p1645) target = $region132
        $region131: #{fast_weight_layer.2} parent=67 // pred_region
          %s1649 = ssub.s32 128, 128
          %1650 = vsyncadd %s1610, %s1649
          %s1651 = smul.addr %s52, 128
          %s1652 = scalar_lea.hbm %s13, %s1651
          %s1654 = sshll.u32 %s1613, 4
          %s1655 = int_to_ptr.vmem [resolvable:$true] %s1654
          %1657 = dma.vmem_to_hbm [thread:$0]  %s1655, 128, %s1652, %s1610
        $region132: #{fast_weight_layer.2} parent=67 // pred_fallthru
          _
        // Predicated region
        $region133: #{fast_weight_layer.2} parent=67 // pred_check
          %p1658 = pneg %p404
        $region134: #{fast_weight_layer.2} parent=67 // pred_check_branch
          %1660 = sbr.rel (%p1658) target = $region136
        $region135: #{fast_weight_layer.2} parent=67 // pred_region
          %s1662 = ssub.s32 16, 16
          %1663 = vsyncadd %s1615, %s1662
          %s1664 = smul.addr %s52, 16
          %s1665 = scalar_lea.hbm %s14, %s1664
          %s1667 = sshll.u32 %s1617, 4
          %s1668 = int_to_ptr.vmem [resolvable:$true] %s1667
          %1670 = dma.vmem_to_hbm [thread:$0]  %s1668, 16, %s1665, %s1615
        $region136: #{fast_weight_layer.2} parent=67 // pred_fallthru
          _
        // Predicated region
        $region137: #{fast_weight_layer.2} parent=67 // pred_check
          %p1671 = pneg %p430
        $region138: #{fast_weight_layer.2} parent=67 // pred_check_branch
          %1673 = sbr.rel (%p1671) target = $region140
        $region139: #{fast_weight_layer.2} parent=67 // pred_region
          %s1675 = ssub.s32 128, 128
          %1676 = vsyncadd %s1619, %s1675
          %s1677 = smul.addr %s52, 128
          %s1678 = scalar_lea.hbm %s15, %s1677
          %s1680 = sshll.u32 %s1622, 4
          %s1681 = int_to_ptr.vmem [resolvable:$true] %s1680
          %1683 = dma.vmem_to_hbm [thread:$0]  %s1681, 128, %s1678, %s1619
        $region140: #{fast_weight_layer.2} parent=67 // pred_fallthru
          _
        // Predicated region
        $region141: #{fast_weight_layer.2} parent=67 // pred_check
          %p1684 = pneg %p456
        $region142: #{fast_weight_layer.2} parent=67 // pred_check_branch
          %1686 = sbr.rel (%p1684) target = $region144
        $region143: #{fast_weight_layer.2} parent=67 // pred_region
          %s1688 = ssub.s32 16, 16
          %1689 = vsyncadd %s1624, %s1688
          %s1690 = smul.addr %s52, 16
          %s1691 = scalar_lea.hbm %s16, %s1690
          %s1693 = sshll.u32 %s1626, 4
          %s1694 = int_to_ptr.vmem [resolvable:$true] %s1693
          %1696 = dma.vmem_to_hbm [thread:$0]  %s1694, 16, %s1691, %s1624
        $region144: #{fast_weight_layer.2} parent=67 // pred_fallthru
          _
      $region68: #{fast_weight_layer.2} parent=5 // pred_fallthru
        _
      %p1697 = scmp.le.s32.totalorder 2, %s43
      // Predicated region
      $region145: #{fast_weight_layer.2} parent=5 // pred_check
        %p1698 = pneg %p1697
      $region146: #{fast_weight_layer.2} parent=5 // pred_check_branch
        %1700 = sbr.rel (%p1698) target = $region148
      $region147: #{fast_weight_layer.2} parent=5 // pred_region
        %s1701 = ssub.s32 %s43, 2
        // Predicated region
        $region149: #{fast_weight_layer.2} parent=147 // pred_check
          %p1702 = pneg %p358
        $region150: #{fast_weight_layer.2} parent=147 // pred_check_branch
          %1704 = sbr.rel (%p1702) target = $region152
        $region151: #{fast_weight_layer.2} parent=147 // pred_region
          %s1705 = sand.u32 %s343, 1
          %s1706 = scalar_lea.sflag [#allocation8], %s1705
          %s1707 = sand.u32 %s343, 1
          %s1708 = smul.addr %s1707, 16
          %s1709 = scalar_lea.vmem [#allocation26], %s1708
          %1710 = dma.done %s1706, 256
        $region152: #{fast_weight_layer.2} parent=147 // pred_fallthru
          _
        // Predicated region
        $region153: #{fast_weight_layer.2} parent=147 // pred_check
          %p1711 = pneg %p384
        $region154: #{fast_weight_layer.2} parent=147 // pred_check_branch
          %1713 = sbr.rel (%p1711) target = $region156
        $region155: #{fast_weight_layer.2} parent=147 // pred_region
          %s1714 = sand.u32 %s49, 1
          %s1715 = scalar_lea.sflag [#allocation28], %s1714
          %s1716 = sand.u32 %s369, 1
          %s1717 = smul.addr %s1716, 8
          %s1718 = scalar_lea.vmem [#allocation27], %s1717
          %1719 = dma.done %s1715, 128
        $region156: #{fast_weight_layer.2} parent=147 // pred_fallthru
          _
        // Predicated region
        $region157: #{fast_weight_layer.2} parent=147 // pred_check
          %p1720 = pneg %p410
        $region158: #{fast_weight_layer.2} parent=147 // pred_check_branch
          %1722 = sbr.rel (%p1720) target = $region160
        $region159: #{fast_weight_layer.2} parent=147 // pred_region
          %s1723 = sand.u32 %s49, 1
          %s1724 = scalar_lea.sflag [#allocation28], %s1723
          %s1725 = sand.u32 %s395, 1
          %s1726 = scalar_lea.vmem [#allocation29], %s1725
          %1727 = dma.done %s1724, 16
        $region160: #{fast_weight_layer.2} parent=147 // pred_fallthru
          _
        // Predicated region
        $region161: #{fast_weight_layer.2} parent=147 // pred_check
          %p1728 = pneg %p436
        $region162: #{fast_weight_layer.2} parent=147 // pred_check_branch
          %1730 = sbr.rel (%p1728) target = $region164
        $region163: #{fast_weight_layer.2} parent=147 // pred_region
          %s1731 = sand.u32 %s49, 1
          %s1732 = scalar_lea.sflag [#allocation31], %s1731
          %s1733 = sand.u32 %s421, 1
          %s1734 = smul.addr %s1733, 8
          %s1735 = scalar_lea.vmem [#allocation30], %s1734
          %1736 = dma.done %s1732, 128
        $region164: #{fast_weight_layer.2} parent=147 // pred_fallthru
          _
        // Predicated region
        $region165: #{fast_weight_layer.2} parent=147 // pred_check
          %p1737 = pneg %p462
        $region166: #{fast_weight_layer.2} parent=147 // pred_check_branch
          %1739 = sbr.rel (%p1737) target = $region168
        $region167: #{fast_weight_layer.2} parent=147 // pred_region
          %s1740 = sand.u32 %s49, 1
          %s1741 = scalar_lea.sflag [#allocation31], %s1740
          %s1742 = sand.u32 %s447, 1
          %s1743 = scalar_lea.vmem [#allocation32], %s1742
          %1744 = dma.done %s1741, 16
        $region168: #{fast_weight_layer.2} parent=147 // pred_fallthru
          _
      $region148: #{fast_weight_layer.2} parent=5 // pred_fallthru
        _
    $region6: #{fast_weight_layer.2} parent=1 // loop_footer
      %s47 = sadd.s32 1, %s43
    $region7: #{fast_weight_layer.2} parent=1 // loop_footer_branch
      %42 = sbr.rel target = $region3
    $region8: #{fast_weight_layer.2} parent=1 // loop_exit
      _
    %1745 = vsyncpa [#allocation7], 1
    %s1746 = scalar_lea.sflag [#allocation7], 1
    %1747 = vsyncpa %s1746, 1
    %1748 = vsyncpa [#allocation10], 1
    %s1749 = scalar_lea.sflag [#allocation10], 1
    %1750 = vsyncpa %s1749, 1
    %1751 = vsyncpa [#allocation13], 1
    %1752 = vsyncpa [#allocation16], 1
    %1753 = vsyncpa [#allocation19], 1
    %1754 = vsyncpa [#allocation22], 1
    %1755 = vsyncpa [#allocation25], 1
    %1756 = vsyncpa [#allocation8], 1
    %s1757 = scalar_lea.sflag [#allocation8], 1
    %1758 = vsyncpa %s1757, 1
    %1759 = vsyncpa [#allocation28], 1
    %s1760 = scalar_lea.sflag [#allocation28], 1
    %1761 = vsyncpa %s1760, 1
    %1762 = vsyncpa [#allocation31], 1
    %s1763 = scalar_lea.sflag [#allocation31], 1
    %1764 = vsyncpa %s1763, 1

// kernel: fast_weight_layer.3
$region0: #{fast_weight_layer.3}
  #allocation0 [shape = 'u32[]', space=smem, size = 0x4, offset = 0x4, fixed_abs, tag = 'smem constant byte address 0x4 - core index']
  #allocation1 [shape = 'u32[144,128]{1,0:T(1,128)}', space=vmem, size = 0x12000, scoped, tag = 'internal scratch']
  %s0 = inlined_call_operand.hbm [shape: f32[16,8,8], index: 0, kind: input, shape index: {}]
  %s1 = inlined_call_operand.hbm [shape: s32[16,8,1], index: 1, kind: input, shape index: {}]
  %s2 = inlined_call_operand.hbm [shape: f32[8,32], index: 2, kind: input, shape index: {}]
  %s3 = inlined_call_operand.hbm [shape: f32[1,32], index: 3, kind: input, shape index: {}]
  %s4 = inlined_call_operand.hbm [shape: f32[8,8], index: 4, kind: input, shape index: {}]
  %s5 = inlined_call_operand.hbm [shape: f32[1,8], index: 5, kind: input, shape index: {}]
  %s6 = inlined_call_operand.hbm [shape: f32[1,8], index: 6, kind: input, shape index: {}]
  %s7 = inlined_call_operand.hbm [shape: f32[1,8], index: 7, kind: input, shape index: {}]
  %s8 = inlined_call_operand.hbm [shape: f32[8,8], index: 8, kind: input, shape index: {}]
  %s9 = inlined_call_operand.hbm [shape: f32[1,8], index: 9, kind: input, shape index: {}]
  %s10 = inlined_call_operand.hbm [shape: f32[8,8], index: 10, kind: input, shape index: {}]
  %s11 = inlined_call_operand.hbm [shape: f32[1,8], index: 11, kind: input, shape index: {}]
  %s12 = inlined_call_operand.hbm [shape: f32[16,8], index: 12, kind: output, shape index: {}]
  %s13 = sld [smem:[#allocation0]]
  $region129: #{fast_weight_layer.3} parent=0
    _
  %s15 = ssub.s32 1, %s13
  %s16 = scalar_select 0, %s15, %s13
  $region1: #{fast_weight_layer.3} parent=0
    #allocation2 [shape = 'u8[65536]{0}', space=vmem, size = 0x10000, scoped, tag = 'input window, operand 0']
    #allocation3 [shape = 's32[2]{0}', space=sflag, size = 0x8, scoped, tag = 'scoped memory for fast_weight_layer.3']
    #allocation4 [shape = 's32[2]{0}', space=sflag, size = 0x8, scoped, tag = 'scoped memory for fast_weight_layer.3']
    #allocation5 [shape = 'u8[65536]{0}', space=vmem, size = 0x10000, scoped, tag = 'input window, operand 1']
    #allocation6 [shape = 's32[2]{0}', space=sflag, size = 0x8, scoped, tag = 'scoped memory for fast_weight_layer.3']
    #allocation7 [shape = 'u8[4096]{0}', space=vmem, size = 0x1000, scoped, tag = 'input window, operand 2, single buffered']
    #allocation8 [shape = 'u8[512]{0}', space=vmem, size = 0x400, scoped, tag = 'input window, operand 3, single buffered']
    #allocation9 [shape = 's32[1]{0}', space=sflag, size = 0x4, scoped, tag = 'scoped memory for fast_weight_layer.3']
    #allocation10 [shape = 'u8[4096]{0}', space=vmem, size = 0x1000, scoped, tag = 'input window, operand 4, single buffered']
    #allocation11 [shape = 'u8[512]{0}', space=vmem, size = 0x400, scoped, tag = 'input window, operand 5, single buffered']
    #allocation12 [shape = 's32[1]{0}', space=sflag, size = 0x4, scoped, tag = 'scoped memory for fast_weight_layer.3']
    #allocation13 [shape = 'u8[512]{0}', space=vmem, size = 0x400, scoped, tag = 'input window, operand 6, single buffered']
    #allocation14 [shape = 'u8[512]{0}', space=vmem, size = 0x400, scoped, tag = 'input window, operand 7, single buffered']
    #allocation15 [shape = 's32[1]{0}', space=sflag, size = 0x4, scoped, tag = 'scoped memory for fast_weight_layer.3']
    #allocation16 [shape = 'u8[4096]{0}', space=vmem, size = 0x1000, scoped, tag = 'input window, operand 8, single buffered']
    #allocation17 [shape = 'u8[512]{0}', space=vmem, size = 0x400, scoped, tag = 'input window, operand 9, single buffered']
    #allocation18 [shape = 's32[1]{0}', space=sflag, size = 0x4, scoped, tag = 'scoped memory for fast_weight_layer.3']
    #allocation19 [shape = 'u8[4096]{0}', space=vmem, size = 0x1000, scoped, tag = 'input window, operand 10, single buffered']
    #allocation20 [shape = 'u8[512]{0}', space=vmem, size = 0x400, scoped, tag = 'input window, operand 11, single buffered']
    #allocation21 [shape = 's32[1]{0}', space=sflag, size = 0x4, scoped, tag = 'scoped memory for fast_weight_layer.3']
    #allocation22 [shape = 'u8[8192]{0}', space=vmem, size = 0x2000, scoped, tag = 'output window, operand 0']
    %17 = vsyncpa [#allocation3], 0
    %s18 = scalar_lea.sflag [#allocation3], 1
    %19 = vsyncpa %s18, 0
    %20 = vsyncpa [#allocation6], 0
    %s21 = scalar_lea.sflag [#allocation6], 1
    %22 = vsyncpa %s21, 0
    %23 = vsyncpa [#allocation9], 0
    %24 = vsyncpa [#allocation12], 0
    %25 = vsyncpa [#allocation15], 0
    %26 = vsyncpa [#allocation18], 0
    %27 = vsyncpa [#allocation21], 0
    %28 = vsyncpa [#allocation4], 0
    %s29 = scalar_lea.sflag [#allocation4], 1
    %30 = vsyncpa %s29, 0
    loop: start=0, step=1, limit=4
    $region2: #{fast_weight_layer.3} parent=1 // loop_pre_header
      _
    $region3: #{fast_weight_layer.3} parent=1 // loop_header
      %s32 = sphi 0, %s36
      %p33 = scmp.ge.s32.totalorder %s32, 4
      %s42 = sphi 0, %s44
      %s45 = sphi 0, %s42
      %s46 = sphi 0, %s45
      %s62 = sphi 0, %s46
      %s68 = sphi 0, %s70
      %s71 = sphi 0, %s68
      %s72 = sphi 0, %s71
      %s88 = sphi 0, %s72
      %s92 = sphi 0, %s92
      %s94 = sphi 0, %s92
      %s95 = sphi 0, %s94
      %s109 = sphi 0, %s95
      %s113 = sphi 0, %s113
      %s115 = sphi 0, %s113
      %s116 = sphi 0, %s115
      %s130 = sphi 0, %s116
      %s134 = sphi 0, %s134
      %s136 = sphi 0, %s134
      %s137 = sphi 0, %s136
      %s151 = sphi 0, %s137
      %s155 = sphi 0, %s155
      %s157 = sphi 0, %s155
      %s158 = sphi 0, %s157
      %s172 = sphi 0, %s158
      %s176 = sphi 0, %s176
      %s178 = sphi 0, %s176
      %s179 = sphi 0, %s178
      %s193 = sphi 0, %s179
      %s197 = sphi 0, %s197
      %s199 = sphi 0, %s197
      %s200 = sphi 0, %s199
      %s214 = sphi 0, %s200
      %s218 = sphi 0, %s218
      %s220 = sphi 0, %s218
      %s221 = sphi 0, %s220
      %s235 = sphi 0, %s221
      %s239 = sphi 0, %s239
      %s241 = sphi 0, %s239
      %s242 = sphi 0, %s241
      %s256 = sphi 0, %s242
      %s260 = sphi 0, %s260
      %s262 = sphi 0, %s260
      %s263 = sphi 0, %s262
      %s277 = sphi 0, %s263
      %s281 = sphi 0, %s281
      %s283 = sphi 0, %s281
      %s284 = sphi 0, %s283
      %s298 = sphi 0, %s284
      %s304 = sphi 0, %s306
      %s307 = sphi 0, %s304
      %s308 = sphi 0, %s307
      %s324 = sphi 0, %s308
    $region4: #{fast_weight_layer.3} parent=1 // loop_header_branch
      %35 = sbr.rel (%p33) target = $region8
    $region5: #{fast_weight_layer.3} parent=1 // loop_body
      %s37 = ssub.s32 %s32, 1
      %s38 = ssub.s32 %s32, 2
      %s39 = sadd.s32 %s32, 1
      %s40 = ssub.s32 %s32, %s39
      %p41 = scmp.eq.s32.totalorder %s40, 0
      %s43 = sadd.s32 %s42, 1
      %s44 = scalar_select %p41, %s42, %s43
      %p47 = pneg %p41
      %p48 = scmp.eq.s32.totalorder %s32, 1
      %p49 = por %p47, %p48
      %p50 = scmp.ne.s32.totalorder %s42, %s45
      %p51 = scmp.eq.s32.totalorder %s32, 0
      %p52 = por %p50, %p51
      %p53 = scmp.ne.s32.totalorder %s42, %s45
      %p54 = scmp.eq.s32.totalorder %s37, 1
      %p55 = por %p53, %p54
      %p56 = scmp.ne.s32.totalorder %s45, %s46
      %p57 = scmp.eq.s32.totalorder %s37, 0
      %p58 = por %p56, %p57
      %p59 = scmp.ne.s32.totalorder %s45, %s46
      %p60 = scmp.eq.s32.totalorder %s38, 1
      %p61 = por %p59, %p60
      %p63 = scmp.ne.s32.totalorder %s46, %s62
      %p64 = scmp.eq.s32.totalorder %s38, 0
      %p65 = por %p63, %p64
      %s66 = ssub.s32 %s32, %s39
      %p67 = scmp.eq.s32.totalorder %s66, 0
      %s69 = sadd.s32 %s68, 1
      %s70 = scalar_select %p67, %s68, %s69
      %p73 = pneg %p67
      %p74 = scmp.eq.s32.totalorder %s32, 1
      %p75 = por %p73, %p74
      %p76 = scmp.ne.s32.totalorder %s68, %s71
      %p77 = scmp.eq.s32.totalorder %s32, 0
      %p78 = por %p76, %p77
      %p79 = scmp.ne.s32.totalorder %s68, %s71
      %p80 = scmp.eq.s32.totalorder %s37, 1
      %p81 = por %p79, %p80
      %p82 = scmp.ne.s32.totalorder %s71, %s72
      %p83 = scmp.eq.s32.totalorder %s37, 0
      %p84 = por %p82, %p83
      %p85 = scmp.ne.s32.totalorder %s71, %s72
      %p86 = scmp.eq.s32.totalorder %s38, 1
      %p87 = por %p85, %p86
      %p89 = scmp.ne.s32.totalorder %s72, %s88
      %p90 = scmp.eq.s32.totalorder %s38, 0
      %p91 = por %p89, %p90
      %s93 = sadd.s32 %s92, 1
      %p96 = scmp.eq.s32.totalorder %s32, 1
      %p97 = scmp.ne.s32.totalorder %s92, %s94
      %p98 = scmp.eq.s32.totalorder %s32, 0
      %p99 = por %p97, %p98
      %p100 = scmp.ne.s32.totalorder %s92, %s94
      %p101 = scmp.eq.s32.totalorder %s37, 1
      %p102 = por %p100, %p101
      %p103 = scmp.ne.s32.totalorder %s94, %s95
      %p104 = scmp.eq.s32.totalorder %s37, 0
      %p105 = por %p103, %p104
      %p106 = scmp.ne.s32.totalorder %s94, %s95
      %p107 = scmp.eq.s32.totalorder %s38, 1
      %p108 = por %p106, %p107
      %p110 = scmp.ne.s32.totalorder %s95, %s109
      %p111 = scmp.eq.s32.totalorder %s38, 0
      %p112 = por %p110, %p111
      %s114 = sadd.s32 %s113, 1
      %p117 = scmp.eq.s32.totalorder %s32, 1
      %p118 = scmp.ne.s32.totalorder %s113, %s115
      %p119 = scmp.eq.s32.totalorder %s32, 0
      %p120 = por %p118, %p119
      %p121 = scmp.ne.s32.totalorder %s113, %s115
      %p122 = scmp.eq.s32.totalorder %s37, 1
      %p123 = por %p121, %p122
      %p124 = scmp.ne.s32.totalorder %s115, %s116
      %p125 = scmp.eq.s32.totalorder %s37, 0
      %p126 = por %p124, %p125
      %p127 = scmp.ne.s32.totalorder %s115, %s116
      %p128 = scmp.eq.s32.totalorder %s38, 1
      %p129 = por %p127, %p128
      %p131 = scmp.ne.s32.totalorder %s116, %s130
      %p132 = scmp.eq.s32.totalorder %s38, 0
      %p133 = por %p131, %p132
      %s135 = sadd.s32 %s134, 1
      %p138 = scmp.eq.s32.totalorder %s32, 1
      %p139 = scmp.ne.s32.totalorder %s134, %s136
      %p140 = scmp.eq.s32.totalorder %s32, 0
      %p141 = por %p139, %p140
      %p142 = scmp.ne.s32.totalorder %s134, %s136
      %p143 = scmp.eq.s32.totalorder %s37, 1
      %p144 = por %p142, %p143
      %p145 = scmp.ne.s32.totalorder %s136, %s137
      %p146 = scmp.eq.s32.totalorder %s37, 0
      %p147 = por %p145, %p146
      %p148 = scmp.ne.s32.totalorder %s136, %s137
      %p149 = scmp.eq.s32.totalorder %s38, 1
      %p150 = por %p148, %p149
      %p152 = scmp.ne.s32.totalorder %s137, %s151
      %p153 = scmp.eq.s32.totalorder %s38, 0
      %p154 = por %p152, %p153
      %s156 = sadd.s32 %s155, 1
      %p159 = scmp.eq.s32.totalorder %s32, 1
      %p160 = scmp.ne.s32.totalorder %s155, %s157
      %p161 = scmp.eq.s32.totalorder %s32, 0
      %p162 = por %p160, %p161
      %p163 = scmp.ne.s32.totalorder %s155, %s157
      %p164 = scmp.eq.s32.totalorder %s37, 1
      %p165 = por %p163, %p164
      %p166 = scmp.ne.s32.totalorder %s157, %s158
      %p167 = scmp.eq.s32.totalorder %s37, 0
      %p168 = por %p166, %p167
      %p169 = scmp.ne.s32.totalorder %s157, %s158
      %p170 = scmp.eq.s32.totalorder %s38, 1
      %p171 = por %p169, %p170
      %p173 = scmp.ne.s32.totalorder %s158, %s172
      %p174 = scmp.eq.s32.totalorder %s38, 0
      %p175 = por %p173, %p174
      %s177 = sadd.s32 %s176, 1
      %p180 = scmp.eq.s32.totalorder %s32, 1
      %p181 = scmp.ne.s32.totalorder %s176, %s178
      %p182 = scmp.eq.s32.totalorder %s32, 0
      %p183 = por %p181, %p182
      %p184 = scmp.ne.s32.totalorder %s176, %s178
      %p185 = scmp.eq.s32.totalorder %s37, 1
      %p186 = por %p184, %p185
      %p187 = scmp.ne.s32.totalorder %s178, %s179
      %p188 = scmp.eq.s32.totalorder %s37, 0
      %p189 = por %p187, %p188
      %p190 = scmp.ne.s32.totalorder %s178, %s179
      %p191 = scmp.eq.s32.totalorder %s38, 1
      %p192 = por %p190, %p191
      %p194 = scmp.ne.s32.totalorder %s179, %s193
      %p195 = scmp.eq.s32.totalorder %s38, 0
      %p196 = por %p194, %p195
      %s198 = sadd.s32 %s197, 1
      %p201 = scmp.eq.s32.totalorder %s32, 1
      %p202 = scmp.ne.s32.totalorder %s197, %s199
      %p203 = scmp.eq.s32.totalorder %s32, 0
      %p204 = por %p202, %p203
      %p205 = scmp.ne.s32.totalorder %s197, %s199
      %p206 = scmp.eq.s32.totalorder %s37, 1
      %p207 = por %p205, %p206
      %p208 = scmp.ne.s32.totalorder %s199, %s200
      %p209 = scmp.eq.s32.totalorder %s37, 0
      %p210 = por %p208, %p209
      %p211 = scmp.ne.s32.totalorder %s199, %s200
      %p212 = scmp.eq.s32.totalorder %s38, 1
      %p213 = por %p211, %p212
      %p215 = scmp.ne.s32.totalorder %s200, %s214
      %p216 = scmp.eq.s32.totalorder %s38, 0
      %p217 = por %p215, %p216
      %s219 = sadd.s32 %s218, 1
      %p222 = scmp.eq.s32.totalorder %s32, 1
      %p223 = scmp.ne.s32.totalorder %s218, %s220
      %p224 = scmp.eq.s32.totalorder %s32, 0
      %p225 = por %p223, %p224
      %p226 = scmp.ne.s32.totalorder %s218, %s220
      %p227 = scmp.eq.s32.totalorder %s37, 1
      %p228 = por %p226, %p227
      %p229 = scmp.ne.s32.totalorder %s220, %s221
      %p230 = scmp.eq.s32.totalorder %s37, 0
      %p231 = por %p229, %p230
      %p232 = scmp.ne.s32.totalorder %s220, %s221
      %p233 = scmp.eq.s32.totalorder %s38, 1
      %p234 = por %p232, %p233
      %p236 = scmp.ne.s32.totalorder %s221, %s235
      %p237 = scmp.eq.s32.totalorder %s38, 0
      %p238 = por %p236, %p237
      %s240 = sadd.s32 %s239, 1
      %p243 = scmp.eq.s32.totalorder %s32, 1
      %p244 = scmp.ne.s32.totalorder %s239, %s241
      %p245 = scmp.eq.s32.totalorder %s32, 0
      %p246 = por %p244, %p245
      %p247 = scmp.ne.s32.totalorder %s239, %s241
      %p248 = scmp.eq.s32.totalorder %s37, 1
      %p249 = por %p247, %p248
      %p250 = scmp.ne.s32.totalorder %s241, %s242
      %p251 = scmp.eq.s32.totalorder %s37, 0
      %p252 = por %p250, %p251
      %p253 = scmp.ne.s32.totalorder %s241, %s242
      %p254 = scmp.eq.s32.totalorder %s38, 1
      %p255 = por %p253, %p254
      %p257 = scmp.ne.s32.totalorder %s242, %s256
      %p258 = scmp.eq.s32.totalorder %s38, 0
      %p259 = por %p257, %p258
      %s261 = sadd.s32 %s260, 1
      %p264 = scmp.eq.s32.totalorder %s32, 1
      %p265 = scmp.ne.s32.totalorder %s260, %s262
      %p266 = scmp.eq.s32.totalorder %s32, 0
      %p267 = por %p265, %p266
      %p268 = scmp.ne.s32.totalorder %s260, %s262
      %p269 = scmp.eq.s32.totalorder %s37, 1
      %p270 = por %p268, %p269
      %p271 = scmp.ne.s32.totalorder %s262, %s263
      %p272 = scmp.eq.s32.totalorder %s37, 0
      %p273 = por %p271, %p272
      %p274 = scmp.ne.s32.totalorder %s262, %s263
      %p275 = scmp.eq.s32.totalorder %s38, 1
      %p276 = por %p274, %p275
      %p278 = scmp.ne.s32.totalorder %s263, %s277
      %p279 = scmp.eq.s32.totalorder %s38, 0
      %p280 = por %p278, %p279
      %s282 = sadd.s32 %s281, 1
      %p285 = scmp.eq.s32.totalorder %s32, 1
      %p286 = scmp.ne.s32.totalorder %s281, %s283
      %p287 = scmp.eq.s32.totalorder %s32, 0
      %p288 = por %p286, %p287
      %p289 = scmp.ne.s32.totalorder %s281, %s283
      %p290 = scmp.eq.s32.totalorder %s37, 1
      %p291 = por %p289, %p290
      %p292 = scmp.ne.s32.totalorder %s283, %s284
      %p293 = scmp.eq.s32.totalorder %s37, 0
      %p294 = por %p292, %p293
      %p295 = scmp.ne.s32.totalorder %s283, %s284
      %p296 = scmp.eq.s32.totalorder %s38, 1
      %p297 = por %p295, %p296
      %p299 = scmp.ne.s32.totalorder %s284, %s298
      %p300 = scmp.eq.s32.totalorder %s38, 0
      %p301 = por %p299, %p300
      %s302 = ssub.s32 %s32, %s39
      %p303 = scmp.eq.s32.totalorder %s302, 0
      %s305 = sadd.s32 %s304, 1
      %s306 = scalar_select %p303, %s304, %s305
      %p309 = pneg %p303
      %p310 = scmp.eq.s32.totalorder %s32, 1
      %p311 = por %p309, %p310
      %p312 = scmp.ne.s32.totalorder %s304, %s307
      %p313 = scmp.eq.s32.totalorder %s32, 0
      %p314 = por %p312, %p313
      %p315 = scmp.ne.s32.totalorder %s304, %s307
      %p316 = scmp.eq.s32.totalorder %s37, 1
      %p317 = por %p315, %p316
      %p318 = scmp.ne.s32.totalorder %s307, %s308
      %p319 = scmp.eq.s32.totalorder %s37, 0
      %p320 = por %p318, %p319
      %p321 = scmp.ne.s32.totalorder %s307, %s308
      %p322 = scmp.eq.s32.totalorder %s38, 1
      %p323 = por %p321, %p322
      %p325 = scmp.ne.s32.totalorder %s308, %s324
      %p326 = scmp.eq.s32.totalorder %s38, 0
      %p327 = por %p325, %p326
      %p328 = scmp.le.s32.totalorder 1, %s32
      %p329 = scmp.lt.s32.totalorder %s32, 3
      %p330 = pnand %p328, %p329
      %p331 = pneg %p330
      // Predicated region
      $region9: #{fast_weight_layer.3} parent=5 // pred_check
        _
      $region10: #{fast_weight_layer.3} parent=5 // pred_check_branch
        %333 = sbr.rel (%p330) target = $region12
      $region11: #{fast_weight_layer.3} parent=5 // pred_region
        %s334 = ssub.s32 %s32, 1
        // Predicated region
        $region13: #{fast_weight_layer.3} parent=11 // pred_check
          %p335 = pneg %p105
        $region14: #{fast_weight_layer.3} parent=11 // pred_check_branch
          %337 = sbr.rel (%p335) target = $region16
        $region15: #{fast_weight_layer.3} parent=11 // pred_region
          %s339 = ssub.s32 128, 128
          %340 = vsyncadd [#allocation6], %s339
          %s342 = sshll.u32 [#allocation7], 4
          %s343 = int_to_ptr.vmem [resolvable:$true] %s342
          %345 = dma.hbm_to_vmem [thread:$0]  %s2, 128, %s343, [#allocation6]
        $region16: #{fast_weight_layer.3} parent=11 // pred_fallthru
          _
        // Predicated region
        $region17: #{fast_weight_layer.3} parent=11 // pred_check
          %p346 = pneg %p126
        $region18: #{fast_weight_layer.3} parent=11 // pred_check_branch
          %348 = sbr.rel (%p346) target = $region20
        $region19: #{fast_weight_layer.3} parent=11 // pred_region
          %s350 = ssub.s32 16, 16
          %351 = vsyncadd [#allocation9], %s350
          %s353 = sshll.u32 [#allocation8], 4
          %s354 = int_to_ptr.vmem [resolvable:$true] %s353
          %356 = dma.hbm_to_vmem [thread:$0]  %s3, 16, %s354, [#allocation9]
        $region20: #{fast_weight_layer.3} parent=11 // pred_fallthru
          _
        // Predicated region
        $region21: #{fast_weight_layer.3} parent=11 // pred_check
          %p357 = pneg %p147
        $region22: #{fast_weight_layer.3} parent=11 // pred_check_branch
          %359 = sbr.rel (%p357) target = $region24
        $region23: #{fast_weight_layer.3} parent=11 // pred_region
          %s361 = ssub.s32 128, 128
          %362 = vsyncadd [#allocation9], %s361
          %s364 = sshll.u32 [#allocation10], 4
          %s365 = int_to_ptr.vmem [resolvable:$true] %s364
          %367 = dma.hbm_to_vmem [thread:$0]  %s4, 128, %s365, [#allocation9]
        $region24: #{fast_weight_layer.3} parent=11 // pred_fallthru
          _
        // Predicated region
        $region25: #{fast_weight_layer.3} parent=11 // pred_check
          %p368 = pneg %p168
        $region26: #{fast_weight_layer.3} parent=11 // pred_check_branch
          %370 = sbr.rel (%p368) target = $region28
        $region27: #{fast_weight_layer.3} parent=11 // pred_region
          %s372 = ssub.s32 16, 16
          %373 = vsyncadd [#allocation12], %s372
          %s375 = sshll.u32 [#allocation11], 4
          %s376 = int_to_ptr.vmem [resolvable:$true] %s375
          %378 = dma.hbm_to_vmem [thread:$0]  %s5, 16, %s376, [#allocation12]
        $region28: #{fast_weight_layer.3} parent=11 // pred_fallthru
          _
        // Predicated region
        $region29: #{fast_weight_layer.3} parent=11 // pred_check
          %p379 = pneg %p189
        $region30: #{fast_weight_layer.3} parent=11 // pred_check_branch
          %381 = sbr.rel (%p379) target = $region32
        $region31: #{fast_weight_layer.3} parent=11 // pred_region
          %s383 = ssub.s32 16, 16
          %384 = vsyncadd [#allocation12], %s383
          %s386 = sshll.u32 [#allocation13], 4
          %s387 = int_to_ptr.vmem [resolvable:$true] %s386
          %389 = dma.hbm_to_vmem [thread:$0]  %s6, 16, %s387, [#allocation12]
        $region32: #{fast_weight_layer.3} parent=11 // pred_fallthru
          _
        // Predicated region
        $region33: #{fast_weight_layer.3} parent=11 // pred_check
          %p390 = pneg %p210
        $region34: #{fast_weight_layer.3} parent=11 // pred_check_branch
          %392 = sbr.rel (%p390) target = $region36
        $region35: #{fast_weight_layer.3} parent=11 // pred_region
          %s394 = ssub.s32 16, 16
          %395 = vsyncadd [#allocation15], %s394
          %s397 = sshll.u32 [#allocation14], 4
          %s398 = int_to_ptr.vmem [resolvable:$true] %s397
          %400 = dma.hbm_to_vmem [thread:$0]  %s7, 16, %s398, [#allocation15]
        $region36: #{fast_weight_layer.3} parent=11 // pred_fallthru
          _
        // Predicated region
        $region37: #{fast_weight_layer.3} parent=11 // pred_check
          %p401 = pneg %p231
        $region38: #{fast_weight_layer.3} parent=11 // pred_check_branch
          %403 = sbr.rel (%p401) target = $region40
        $region39: #{fast_weight_layer.3} parent=11 // pred_region
          %s405 = ssub.s32 128, 128
          %406 = vsyncadd [#allocation15], %s405
          %s408 = sshll.u32 [#allocation16], 4
          %s409 = int_to_ptr.vmem [resolvable:$true] %s408
          %411 = dma.hbm_to_vmem [thread:$0]  %s8, 128, %s409, [#allocation15]
        $region40: #{fast_weight_layer.3} parent=11 // pred_fallthru
          _
        // Predicated region
        $region41: #{fast_weight_layer.3} parent=11 // pred_check
          %p412 = pneg %p252
        $region42: #{fast_weight_layer.3} parent=11 // pred_check_branch
          %414 = sbr.rel (%p412) target = $region44
        $region43: #{fast_weight_layer.3} parent=11 // pred_region
          %s416 = ssub.s32 16, 16
          %417 = vsyncadd [#allocation18], %s416
          %s419 = sshll.u32 [#allocation17], 4
          %s420 = int_to_ptr.vmem [resolvable:$true] %s419
          %422 = dma.hbm_to_vmem [thread:$0]  %s9, 16, %s420, [#allocation18]
        $region44: #{fast_weight_layer.3} parent=11 // pred_fallthru
          _
        // Predicated region
        $region45: #{fast_weight_layer.3} parent=11 // pred_check
          %p423 = pneg %p273
        $region46: #{fast_weight_layer.3} parent=11 // pred_check_branch
          %425 = sbr.rel (%p423) target = $region48
        $region47: #{fast_weight_layer.3} parent=11 // pred_region
          %s427 = ssub.s32 128, 128
          %428 = vsyncadd [#allocation18], %s427
          %s430 = sshll.u32 [#allocation19], 4
          %s431 = int_to_ptr.vmem [resolvable:$true] %s430
          %433 = dma.hbm_to_vmem [thread:$0]  %s10, 128, %s431, [#allocation18]
        $region48: #{fast_weight_layer.3} parent=11 // pred_fallthru
          _
        // Predicated region
        $region49: #{fast_weight_layer.3} parent=11 // pred_check
          %p434 = pneg %p294
        $region50: #{fast_weight_layer.3} parent=11 // pred_check_branch
          %436 = sbr.rel (%p434) target = $region52
        $region51: #{fast_weight_layer.3} parent=11 // pred_region
          %s438 = ssub.s32 16, 16
          %439 = vsyncadd [#allocation21], %s438
          %s441 = sshll.u32 [#allocation20], 4
          %s442 = int_to_ptr.vmem [resolvable:$true] %s441
          %444 = dma.hbm_to_vmem [thread:$0]  %s11, 16, %s442, [#allocation21]
        $region52: #{fast_weight_layer.3} parent=11 // pred_fallthru
          _
      $region12: #{fast_weight_layer.3} parent=5 // pred_fallthru
        _
      %p445 = scmp.lt.s32.totalorder %s32, 2
      // Predicated region
      $region53: #{fast_weight_layer.3} parent=5 // pred_check
        %p446 = pneg %p445
      $region54: #{fast_weight_layer.3} parent=5 // pred_check_branch
        %448 = sbr.rel (%p446) target = $region56
      $region55: #{fast_weight_layer.3} parent=5 // pred_region
        // Predicated region
        $region57: #{fast_weight_layer.3} parent=55 // pred_check
          %p449 = pneg %p52
        $region58: #{fast_weight_layer.3} parent=55 // pred_check_branch
          %451 = sbr.rel (%p449) target = $region60
        $region59: #{fast_weight_layer.3} parent=55 // pred_region
          %s452 = sand.u32 %s42, 1
          %s453 = scalar_lea.sflag [#allocation3], %s452
          %s454 = sand.u32 %s42, 1
          %s455 = smul.addr %s454, 64
          %s456 = scalar_lea.vmem [#allocation2], %s455
          %s457 = smul.u32 8, %s32
          %s459 = ssub.s32 1024, 1024
          %460 = vsyncadd %s453, %s459
          %s461 = smul.addr %s457, 128
          %s462 = scalar_lea.hbm %s0, %s461
          %s463 = sshll.u32 %s456, 4
          %s464 = int_to_ptr.vmem [resolvable:$true] %s463
          %469 = dma.hbm_to_vmem [thread:$0]  %s462, 1024, %s464, %s453, 128, 128, 8
        $region60: #{fast_weight_layer.3} parent=55 // pred_fallthru
          _
        // Predicated region
        $region61: #{fast_weight_layer.3} parent=55 // pred_check
          %p470 = pneg %p78
        $region62: #{fast_weight_layer.3} parent=55 // pred_check_branch
          %472 = sbr.rel (%p470) target = $region64
        $region63: #{fast_weight_layer.3} parent=55 // pred_region
          %s473 = sand.u32 %s32, 1
          %s474 = scalar_lea.sflag [#allocation6], %s473
          %s475 = sand.u32 %s68, 1
          %s476 = smul.addr %s475, 64
          %s477 = scalar_lea.vmem [#allocation5], %s476
          %s478 = smul.u32 8, %s32
          %s480 = ssub.s32 1024, 1024
          %481 = vsyncadd %s474, %s480
          %s482 = smul.addr %s478, 128
          %s483 = scalar_lea.hbm %s1, %s482
          %s484 = sshll.u32 %s477, 4
          %s485 = int_to_ptr.vmem [resolvable:$true] %s484
          %490 = dma.hbm_to_vmem [thread:$0]  %s483, 1024, %s485, %s474, 128, 128, 8
        $region64: #{fast_weight_layer.3} parent=55 // pred_fallthru
          _
      $region56: #{fast_weight_layer.3} parent=5 // pred_fallthru
        _
      %p491 = scmp.le.s32.totalorder 1, %s32
      %p492 = scmp.lt.s32.totalorder %s32, 3
      %p493 = pnand %p491, %p492
      %p494 = pneg %p493
      // Predicated region
      $region65: #{fast_weight_layer.3} parent=5 // pred_check
        _
      $region66: #{fast_weight_layer.3} parent=5 // pred_check_branch
        %496 = sbr.rel (%p493) target = $region68
      $region67: #{fast_weight_layer.3} parent=5 // pred_region
        %s497 = ssub.s32 %s32, 1
        %s498 = sand.u32 %s45, 1
        %s499 = scalar_lea.sflag [#allocation3], %s498
        %s500 = sand.u32 %s45, 1
        %s501 = smul.addr %s500, 64
        %s502 = scalar_lea.vmem [#allocation2], %s501
        // Predicated region
        $region69: #{fast_weight_layer.3} parent=67 // pred_check
          %p503 = pneg %p58
        $region70: #{fast_weight_layer.3} parent=67 // pred_check_branch
          %505 = sbr.rel (%p503) target = $region72
        $region71: #{fast_weight_layer.3} parent=67 // pred_region
          %506 = dma.done %s499, 1024
        $region72: #{fast_weight_layer.3} parent=67 // pred_fallthru
          _
        %s507 = sand.u32 %s37, 1
        %s508 = scalar_lea.sflag [#allocation6], %s507
        %s509 = sand.u32 %s71, 1
        %s510 = smul.addr %s509, 64
        %s511 = scalar_lea.vmem [#allocation5], %s510
        // Predicated region
        $region73: #{fast_weight_layer.3} parent=67 // pred_check
          %p512 = pneg %p84
        $region74: #{fast_weight_layer.3} parent=67 // pred_check_branch
          %514 = sbr.rel (%p512) target = $region76
        $region75: #{fast_weight_layer.3} parent=67 // pred_region
          %515 = dma.done %s508, 1024
        $region76: #{fast_weight_layer.3} parent=67 // pred_fallthru
          _
        // Predicated region
        $region77: #{fast_weight_layer.3} parent=67 // pred_check
          %p516 = pneg %p105
        $region78: #{fast_weight_layer.3} parent=67 // pred_check_branch
          %518 = sbr.rel (%p516) target = $region80
        $region79: #{fast_weight_layer.3} parent=67 // pred_region
          %519 = dma.done [#allocation6], 128
        $region80: #{fast_weight_layer.3} parent=67 // pred_fallthru
          _
        // Predicated region
        $region81: #{fast_weight_layer.3} parent=67 // pred_check
          %p520 = pneg %p126
        $region82: #{fast_weight_layer.3} parent=67 // pred_check_branch
          %522 = sbr.rel (%p520) target = $region84
        $region83: #{fast_weight_layer.3} parent=67 // pred_region
          %523 = dma.done [#allocation9], 16
        $region84: #{fast_weight_layer.3} parent=67 // pred_fallthru
          _
        // Predicated region
        $region85: #{fast_weight_layer.3} parent=67 // pred_check
          %p524 = pneg %p147
        $region86: #{fast_weight_layer.3} parent=67 // pred_check_branch
          %526 = sbr.rel (%p524) target = $region88
        $region87: #{fast_weight_layer.3} parent=67 // pred_region
          %527 = dma.done [#allocation9], 128
        $region88: #{fast_weight_layer.3} parent=67 // pred_fallthru
          _
        // Predicated region
        $region89: #{fast_weight_layer.3} parent=67 // pred_check
          %p528 = pneg %p168
        $region90: #{fast_weight_layer.3} parent=67 // pred_check_branch
          %530 = sbr.rel (%p528) target = $region92
        $region91: #{fast_weight_layer.3} parent=67 // pred_region
          %531 = dma.done [#allocation12], 16
        $region92: #{fast_weight_layer.3} parent=67 // pred_fallthru
          _
        // Predicated region
        $region93: #{fast_weight_layer.3} parent=67 // pred_check
          %p532 = pneg %p189
        $region94: #{fast_weight_layer.3} parent=67 // pred_check_branch
          %534 = sbr.rel (%p532) target = $region96
        $region95: #{fast_weight_layer.3} parent=67 // pred_region
          %535 = dma.done [#allocation12], 16
        $region96: #{fast_weight_layer.3} parent=67 // pred_fallthru
          _
        // Predicated region
        $region97: #{fast_weight_layer.3} parent=67 // pred_check
          %p536 = pneg %p210
        $region98: #{fast_weight_layer.3} parent=67 // pred_check_branch
          %538 = sbr.rel (%p536) target = $region100
        $region99: #{fast_weight_layer.3} parent=67 // pred_region
          %539 = dma.done [#allocation15], 16
        $region100: #{fast_weight_layer.3} parent=67 // pred_fallthru
          _
        // Predicated region
        $region101: #{fast_weight_layer.3} parent=67 // pred_check
          %p540 = pneg %p231
        $region102: #{fast_weight_layer.3} parent=67 // pred_check_branch
          %542 = sbr.rel (%p540) target = $region104
        $region103: #{fast_weight_layer.3} parent=67 // pred_region
          %543 = dma.done [#allocation15], 128
        $region104: #{fast_weight_layer.3} parent=67 // pred_fallthru
          _
        // Predicated region
        $region105: #{fast_weight_layer.3} parent=67 // pred_check
          %p544 = pneg %p252
        $region106: #{fast_weight_layer.3} parent=67 // pred_check_branch
          %546 = sbr.rel (%p544) target = $region108
        $region107: #{fast_weight_layer.3} parent=67 // pred_region
          %547 = dma.done [#allocation18], 16
        $region108: #{fast_weight_layer.3} parent=67 // pred_fallthru
          _
        // Predicated region
        $region109: #{fast_weight_layer.3} parent=67 // pred_check
          %p548 = pneg %p273
        $region110: #{fast_weight_layer.3} parent=67 // pred_check_branch
          %550 = sbr.rel (%p548) target = $region112
        $region111: #{fast_weight_layer.3} parent=67 // pred_region
          %551 = dma.done [#allocation18], 128
        $region112: #{fast_weight_layer.3} parent=67 // pred_fallthru
          _
        // Predicated region
        $region113: #{fast_weight_layer.3} parent=67 // pred_check
          %p552 = pneg %p294
        $region114: #{fast_weight_layer.3} parent=67 // pred_check_branch
          %554 = sbr.rel (%p552) target = $region116
        $region115: #{fast_weight_layer.3} parent=67 // pred_region
          %555 = dma.done [#allocation21], 16
        $region116: #{fast_weight_layer.3} parent=67 // pred_fallthru
          _
        %s556 = sand.u32 %s45, 1
        %s557 = scalar_lea.sflag [#allocation3], %s556
        %s558 = sand.u32 %s45, 1
        %s559 = smul.addr %s558, 64
        %s560 = scalar_lea.vmem [#allocation2], %s559
        %p561 = pneg %p58
        %p562 = pneg %p55
        %s563 = sand.u32 %s37, 1
        %s564 = scalar_lea.sflag [#allocation6], %s563
        %s565 = sand.u32 %s71, 1
        %s566 = smul.addr %s565, 64
        %s567 = scalar_lea.vmem [#allocation5], %s566
        %p568 = pneg %p84
        %p569 = pneg %p81
        %p570 = pneg %p105
        %p571 = pneg %p102
        %p572 = pneg %p126
        %p573 = pneg %p123
        %p574 = pneg %p147
        %p575 = pneg %p144
        %p576 = pneg %p168
        %p577 = pneg %p165
        %p578 = pneg %p189
        %p579 = pneg %p186
        %p580 = pneg %p210
        %p581 = pneg %p207
        %p582 = pneg %p231
        %p583 = pneg %p228
        %p584 = pneg %p252
        %p585 = pneg %p249
        %p586 = pneg %p273
        %p587 = pneg %p270
        %p588 = pneg %p294
        %p589 = pneg %p291
        %p590 = pneg %p320
        %p591 = pneg %p317
        %s592 = sand.u32 %s307, 1
        %s593 = scalar_lea.sflag [#allocation4], %s592
        %s594 = sand.u32 %s307, 1
        %s595 = smul.addr %s594, 8
        %s596 = scalar_lea.vmem [#allocation22], %s595
        %s597 = smul.u32 8, %s37
        %s598 = smul.u32 8, %s37
        %v599 = vld [vmem:[%s502] sm:$0xff]
        %v600 = vld [vmem:[%s502 + $0x8] sm:$0xff]
        %v601 = vld [vmem:[%s502 + $0x10] sm:$0xff]
        %v602 = vld [vmem:[%s502 + $0x18] sm:$0xff]
        %v603 = vld [vmem:[%s502 + $0x20] sm:$0xff]
        %v604 = vld [vmem:[%s502 + $0x28] sm:$0xff]
        %v605 = vld [vmem:[%s502 + $0x30] sm:$0xff]
        %v606 = vld [vmem:[%s502 + $0x38] sm:$0xff]
        %vm607 = vcmask 64512
        %v609 = vsel %vm607, %v599, 0
        %611 = vmatprep.subr.mxu0 0.0
        %612 = vmatpush1.xpose.msra.mxu0 %v609
        %613 = vmatprep.subr.mxu0 0.0
        %614 = vmatpush1.xpose.msra.mxu0 0.0
        %615 = vmatprep.subr.mxu0 0.0
        %616 = vmatpush1.xpose.msra.mxu0 0.0
        %617 = vmatprep.subr.mxu0 0.0
        %618 = vmatpush1.xpose.msra.mxu0 0.0
        %619 = vmatprep.subr.mxu0 0.0
        %620 = vmatpush1.xpose.msra.mxu0 0.0
        %621 = vmatprep.subr.mxu0 0.0
        %622 = vmatpush1.xpose.msra.mxu0 0.0
        %623 = vmatprep.subr.mxu0 0.0
        %624 = vmatpush1.xpose.msra.mxu0 0.0
        %625 = vmatprep.subr.mxu0 0.0
        %626 = vmatpush1.xpose.msra.mxu0 0.0
        %627 = vmatprep.subr.mxu0 0.0
        %628 = vmatpush1.xpose.msra.mxu0 0.0
        %629 = vmatprep.subr.mxu0 0.0
        %630 = vmatpush1.xpose.msra.mxu0 0.0
        %631 = vmatprep.subr.mxu0 0.0
        %632 = vmatpush1.xpose.msra.mxu0 0.0
        %633 = vmatprep.subr.mxu0 0.0
        %634 = vmatpush1.xpose.msra.mxu0 0.0
        %635 = vmatprep.subr.mxu0 0.0
        %636 = vmatpush1.xpose.msra.mxu0 0.0
        %637 = vmatprep.subr.mxu0 0.0
        %638 = vmatpush1.xpose.msra.mxu0 0.0
        %639 = vmatprep.subr.mxu0 0.0
        %640 = vmatpush1.xpose.msra.mxu0 0.0
        %641 = vmatprep.subr.mxu0 0.0
        %642 = vmatpush1.xpose.msra.mxu0 0.0
        %643 = vmatprep.subr.mxu0 0.0
        %644 = vmatpush1.xpose.msra.mxu0 0.0
        %645 = vmatprep.subr.mxu0 0.0
        %646 = vmatpush1.xpose.msra.mxu0 0.0
        %647 = vmatprep.subr.mxu0 0.0
        %648 = vmatpush1.xpose.msra.mxu0 0.0
        %649 = vmatprep.subr.mxu0 0.0
        %650 = vmatpush1.xpose.msra.mxu0 0.0
        %651 = vmatprep.subr.mxu0 0.0
        %652 = vmatpush1.xpose.msra.mxu0 0.0
        %653 = vmatprep.subr.mxu0 0.0
        %654 = vmatpush1.xpose.msra.mxu0 0.0
        %655 = vmatprep.subr.mxu0 0.0
        %656 = vmatpush1.xpose.msra.mxu0 0.0
        %657 = vmatprep.subr.mxu0 0.0
        %658 = vmatpush1.xpose.msra.mxu0 0.0
        %659 = vmatprep.subr.mxu0 0.0
        %660 = vmatpush1.xpose.msra.mxu0 0.0
        %661 = vmatprep.subr.mxu0 0.0
        %662 = vmatpush1.xpose.msra.mxu0 0.0
        %663 = vmatprep.subr.mxu0 0.0
        %664 = vmatpush1.xpose.msra.mxu0 0.0
        %665 = vmatprep.subr.mxu0 0.0
        %666 = vmatpush1.xpose.msra.mxu0 0.0
        %667 = vmatprep.subr.mxu0 0.0
        %668 = vmatpush1.xpose.msra.mxu0 0.0
        %669 = vmatprep.subr.mxu0 0.0
        %670 = vmatpush1.xpose.msra.mxu0 0.0
        %671 = vmatprep.subr.mxu0 0.0
        %672 = vmatpush1.xpose.msra.mxu0 0.0
        %673 = vmatprep.subr.mxu0 0.0
        %674 = vmatpush1.xpose.msra.mxu0 0.0
        %675 = vmatprep.mubr.f32.mxu0 0.0
        %676 = vmatmul.mubr.f32.gmra.mrb[0].mxu0 %v609
        %v677 = vpop.f32.mrb[0].mxu0
        %v678 = vadd.f32 0.0, %v677
        %v679 = vpop.f32.mrb[0].mxu0
        %680 = vdwg.mxu0
        %v682 = vsel %vm607, %v600, 0
        %684 = vmatprep.subr.mxu0 0.0
        %685 = vmatpush1.xpose.msra.mxu0 %v682
        %686 = vmatprep.subr.mxu0 0.0
        %687 = vmatpush1.xpose.msra.mxu0 0.0
        %688 = vmatprep.subr.mxu0 0.0
        %689 = vmatpush1.xpose.msra.mxu0 0.0
        %690 = vmatprep.subr.mxu0 0.0
        %691 = vmatpush1.xpose.msra.mxu0 0.0
        %692 = vmatprep.subr.mxu0 0.0
        %693 = vmatpush1.xpose.msra.mxu0 0.0
        %694 = vmatprep.subr.mxu0 0.0
        %695 = vmatpush1.xpose.msra.mxu0 0.0
        %696 = vmatprep.subr.mxu0 0.0
        %697 = vmatpush1.xpose.msra.mxu0 0.0
        %698 = vmatprep.subr.mxu0 0.0
        %699 = vmatpush1.xpose.msra.mxu0 0.0
        %700 = vmatprep.subr.mxu0 0.0
        %701 = vmatpush1.xpose.msra.mxu0 0.0
        %702 = vmatprep.subr.mxu0 0.0
        %703 = vmatpush1.xpose.msra.mxu0 0.0
        %704 = vmatprep.subr.mxu0 0.0
        %705 = vmatpush1.xpose.msra.mxu0 0.0
        %706 = vmatprep.subr.mxu0 0.0
        %707 = vmatpush1.xpose.msra.mxu0 0.0
        %708 = vmatprep.subr.mxu0 0.0
        %709 = vmatpush1.xpose.msra.mxu0 0.0
        %710 = vmatprep.subr.mxu0 0.0
        %711 = vmatpush1.xpose.msra.mxu0 0.0
        %712 = vmatprep.subr.mxu0 0.0
        %713 = vmatpush1.xpose.msra.mxu0 0.0
        %714 = vmatprep.subr.mxu0 0.0
        %715 = vmatpush1.xpose.msra.mxu0 0.0
        %716 = vmatprep.subr.mxu0 0.0
        %717 = vmatpush1.xpose.msra.mxu0 0.0
        %718 = vmatprep.subr.mxu0 0.0
        %719 = vmatpush1.xpose.msra.mxu0 0.0
        %720 = vmatprep.subr.mxu0 0.0
        %721 = vmatpush1.xpose.msra.mxu0 0.0
        %722 = vmatprep.subr.mxu0 0.0
        %723 = vmatpush1.xpose.msra.mxu0 0.0
        %724 = vmatprep.subr.mxu0 0.0
        %725 = vmatpush1.xpose.msra.mxu0 0.0
        %726 = vmatprep.subr.mxu0 0.0
        %727 = vmatpush1.xpose.msra.mxu0 0.0
        %728 = vmatprep.subr.mxu0 0.0
        %729 = vmatpush1.xpose.msra.mxu0 0.0
        %730 = vmatprep.subr.mxu0 0.0
        %731 = vmatpush1.xpose.msra.mxu0 0.0
        %732 = vmatprep.subr.mxu0 0.0
        %733 = vmatpush1.xpose.msra.mxu0 0.0
        %734 = vmatprep.subr.mxu0 0.0
        %735 = vmatpush1.xpose.msra.mxu0 0.0
        %736 = vmatprep.subr.mxu0 0.0
        %737 = vmatpush1.xpose.msra.mxu0 0.0
        %738 = vmatprep.subr.mxu0 0.0
        %739 = vmatpush1.xpose.msra.mxu0 0.0
        %740 = vmatprep.subr.mxu0 0.0
        %741 = vmatpush1.xpose.msra.mxu0 0.0
        %742 = vmatprep.subr.mxu0 0.0
        %743 = vmatpush1.xpose.msra.mxu0 0.0
        %744 = vmatprep.subr.mxu0 0.0
        %745 = vmatpush1.xpose.msra.mxu0 0.0
        %746 = vmatprep.subr.mxu0 0.0
        %747 = vmatpush1.xpose.msra.mxu0 0.0
        %748 = vmatprep.mubr.f32.mxu0 0.0
        %749 = vmatmul.mubr.f32.gmra.mrb[0].mxu0 %v682
        %v750 = vpop.f32.mrb[0].mxu0
        %v751 = vadd.f32 0.0, %v750
        %v752 = vpop.f32.mrb[0].mxu0
        %753 = vdwg.mxu0
        %v755 = vsel %vm607, %v601, 0
        %757 = vmatprep.subr.mxu0 0.0
        %758 = vmatpush1.xpose.msra.mxu0 %v755
        %759 = vmatprep.subr.mxu0 0.0
        %760 = vmatpush1.xpose.msra.mxu0 0.0
        %761 = vmatprep.subr.mxu0 0.0
        %762 = vmatpush1.xpose.msra.mxu0 0.0
        %763 = vmatprep.subr.mxu0 0.0
        %764 = vmatpush1.xpose.msra.mxu0 0.0
        %765 = vmatprep.subr.mxu0 0.0
        %766 = vmatpush1.xpose.msra.mxu0 0.0
        %767 = vmatprep.subr.mxu0 0.0
        %768 = vmatpush1.xpose.msra.mxu0 0.0
        %769 = vmatprep.subr.mxu0 0.0
        %770 = vmatpush1.xpose.msra.mxu0 0.0
        %771 = vmatprep.subr.mxu0 0.0
        %772 = vmatpush1.xpose.msra.mxu0 0.0
        %773 = vmatprep.subr.mxu0 0.0
        %774 = vmatpush1.xpose.msra.mxu0 0.0
        %775 = vmatprep.subr.mxu0 0.0
        %776 = vmatpush1.xpose.msra.mxu0 0.0
        %777 = vmatprep.subr.mxu0 0.0
        %778 = vmatpush1.xpose.msra.mxu0 0.0
        %779 = vmatprep.subr.mxu0 0.0
        %780 = vmatpush1.xpose.msra.mxu0 0.0
        %781 = vmatprep.subr.mxu0 0.0
        %782 = vmatpush1.xpose.msra.mxu0 0.0
        %783 = vmatprep.subr.mxu0 0.0
        %784 = vmatpush1.xpose.msra.mxu0 0.0
        %785 = vmatprep.subr.mxu0 0.0
        %786 = vmatpush1.xpose.msra.mxu0 0.0
        %787 = vmatprep.subr.mxu0 0.0
        %788 = vmatpush1.xpose.msra.mxu0 0.0
        %789 = vmatprep.subr.mxu0 0.0
        %790 = vmatpush1.xpose.msra.mxu0 0.0
        %791 = vmatprep.subr.mxu0 0.0
        %792 = vmatpush1.xpose.msra.mxu0 0.0
        %793 = vmatprep.subr.mxu0 0.0
        %794 = vmatpush1.xpose.msra.mxu0 0.0
        %795 = vmatprep.subr.mxu0 0.0
        %796 = vmatpush1.xpose.msra.mxu0 0.0
        %797 = vmatprep.subr.mxu0 0.0
        %798 = vmatpush1.xpose.msra.mxu0 0.0
        %799 = vmatprep.subr.mxu0 0.0
        %800 = vmatpush1.xpose.msra.mxu0 0.0
        %801 = vmatprep.subr.mxu0 0.0
        %802 = vmatpush1.xpose.msra.mxu0 0.0
        %803 = vmatprep.subr.mxu0 0.0
        %804 = vmatpush1.xpose.msra.mxu0 0.0
        %805 = vmatprep.subr.mxu0 0.0
        %806 = vmatpush1.xpose.msra.mxu0 0.0
        %807 = vmatprep.subr.mxu0 0.0
        %808 = vmatpush1.xpose.msra.mxu0 0.0
        %809 = vmatprep.subr.mxu0 0.0
        %810 = vmatpush1.xpose.msra.mxu0 0.0
        %811 = vmatprep.subr.mxu0 0.0
        %812 = vmatpush1.xpose.msra.mxu0 0.0
        %813 = vmatprep.subr.mxu0 0.0
        %814 = vmatpush1.xpose.msra.mxu0 0.0
        %815 = vmatprep.subr.mxu0 0.0
        %816 = vmatpush1.xpose.msra.mxu0 0.0
        %817 = vmatprep.subr.mxu0 0.0
        %818 = vmatpush1.xpose.msra.mxu0 0.0
        %819 = vmatprep.subr.mxu0 0.0
        %820 = vmatpush1.xpose.msra.mxu0 0.0
        %821 = vmatprep.mubr.f32.mxu0 0.0
        %822 = vmatmul.mubr.f32.gmra.mrb[0].mxu0 %v755
        %v823 = vpop.f32.mrb[0].mxu0
        %v824 = vadd.f32 0.0, %v823
        %v825 = vpop.f32.mrb[0].mxu0
        %826 = vdwg.mxu0
        %v828 = vsel %vm607, %v602, 0
        %830 = vmatprep.subr.mxu0 0.0
        %831 = vmatpush1.xpose.msra.mxu0 %v828
        %832 = vmatprep.subr.mxu0 0.0
        %833 = vmatpush1.xpose.msra.mxu0 0.0
        %834 = vmatprep.subr.mxu0 0.0
        %835 = vmatpush1.xpose.msra.mxu0 0.0
        %836 = vmatprep.subr.mxu0 0.0
        %837 = vmatpush1.xpose.msra.mxu0 0.0
        %838 = vmatprep.subr.mxu0 0.0
        %839 = vmatpush1.xpose.msra.mxu0 0.0
        %840 = vmatprep.subr.mxu0 0.0
        %841 = vmatpush1.xpose.msra.mxu0 0.0
        %842 = vmatprep.subr.mxu0 0.0
        %843 = vmatpush1.xpose.msra.mxu0 0.0
        %844 = vmatprep.subr.mxu0 0.0
        %845 = vmatpush1.xpose.msra.mxu0 0.0
        %846 = vmatprep.subr.mxu0 0.0
        %847 = vmatpush1.xpose.msra.mxu0 0.0
        %848 = vmatprep.subr.mxu0 0.0
        %849 = vmatpush1.xpose.msra.mxu0 0.0
        %850 = vmatprep.subr.mxu0 0.0
        %851 = vmatpush1.xpose.msra.mxu0 0.0
        %852 = vmatprep.subr.mxu0 0.0
        %853 = vmatpush1.xpose.msra.mxu0 0.0
        %854 = vmatprep.subr.mxu0 0.0
        %855 = vmatpush1.xpose.msra.mxu0 0.0
        %856 = vmatprep.subr.mxu0 0.0
        %857 = vmatpush1.xpose.msra.mxu0 0.0
        %858 = vmatprep.subr.mxu0 0.0
        %859 = vmatpush1.xpose.msra.mxu0 0.0
        %860 = vmatprep.subr.mxu0 0.0
        %861 = vmatpush1.xpose.msra.mxu0 0.0
        %862 = vmatprep.subr.mxu0 0.0
        %863 = vmatpush1.xpose.msra.mxu0 0.0
        %864 = vmatprep.subr.mxu0 0.0
        %865 = vmatpush1.xpose.msra.mxu0 0.0
        %866 = vmatprep.subr.mxu0 0.0
        %867 = vmatpush1.xpose.msra.mxu0 0.0
        %868 = vmatprep.subr.mxu0 0.0
        %869 = vmatpush1.xpose.msra.mxu0 0.0
        %870 = vmatprep.subr.mxu0 0.0
        %871 = vmatpush1.xpose.msra.mxu0 0.0
        %872 = vmatprep.subr.mxu0 0.0
        %873 = vmatpush1.xpose.msra.mxu0 0.0
        %874 = vmatprep.subr.mxu0 0.0
        %875 = vmatpush1.xpose.msra.mxu0 0.0
        %876 = vmatprep.subr.mxu0 0.0
        %877 = vmatpush1.xpose.msra.mxu0 0.0
        %878 = vmatprep.subr.mxu0 0.0
        %879 = vmatpush1.xpose.msra.mxu0 0.0
        %880 = vmatprep.subr.mxu0 0.0
        %881 = vmatpush1.xpose.msra.mxu0 0.0
        %882 = vmatprep.subr.mxu0 0.0
        %883 = vmatpush1.xpose.msra.mxu0 0.0
        %884 = vmatprep.subr.mxu0 0.0
        %885 = vmatpush1.xpose.msra.mxu0 0.0
        %886 = vmatprep.subr.mxu0 0.0
        %887 = vmatpush1.xpose.msra.mxu0 0.0
        %888 = vmatprep.subr.mxu0 0.0
        %889 = vmatpush1.xpose.msra.mxu0 0.0
        %890 = vmatprep.subr.mxu0 0.0
        %891 = vmatpush1.xpose.msra.mxu0 0.0
        %892 = vmatprep.subr.mxu0 0.0
        %893 = vmatpush1.xpose.msra.mxu0 0.0
        %894 = vmatprep.mubr.f32.mxu0 0.0
        %895 = vmatmul.mubr.f32.gmra.mrb[0].mxu0 %v828
        %v896 = vpop.f32.mrb[0].mxu0
        %v897 = vadd.f32 0.0, %v896
        %v898 = vpop.f32.mrb[0].mxu0
        %899 = vdwg.mxu0
        %v901 = vsel %vm607, %v603, 0
        %903 = vmatprep.subr.mxu0 0.0
        %904 = vmatpush1.xpose.msra.mxu0 %v901
        %905 = vmatprep.subr.mxu0 0.0
        %906 = vmatpush1.xpose.msra.mxu0 0.0
        %907 = vmatprep.subr.mxu0 0.0
        %908 = vmatpush1.xpose.msra.mxu0 0.0
        %909 = vmatprep.subr.mxu0 0.0
        %910 = vmatpush1.xpose.msra.mxu0 0.0
        %911 = vmatprep.subr.mxu0 0.0
        %912 = vmatpush1.xpose.msra.mxu0 0.0
        %913 = vmatprep.subr.mxu0 0.0
        %914 = vmatpush1.xpose.msra.mxu0 0.0
        %915 = vmatprep.subr.mxu0 0.0
        %916 = vmatpush1.xpose.msra.mxu0 0.0
        %917 = vmatprep.subr.mxu0 0.0
        %918 = vmatpush1.xpose.msra.mxu0 0.0
        %919 = vmatprep.subr.mxu0 0.0
        %920 = vmatpush1.xpose.msra.mxu0 0.0
        %921 = vmatprep.subr.mxu0 0.0
        %922 = vmatpush1.xpose.msra.mxu0 0.0
        %923 = vmatprep.subr.mxu0 0.0
        %924 = vmatpush1.xpose.msra.mxu0 0.0
        %925 = vmatprep.subr.mxu0 0.0
        %926 = vmatpush1.xpose.msra.mxu0 0.0
        %927 = vmatprep.subr.mxu0 0.0
        %928 = vmatpush1.xpose.msra.mxu0 0.0
        %929 = vmatprep.subr.mxu0 0.0
        %930 = vmatpush1.xpose.msra.mxu0 0.0
        %931 = vmatprep.subr.mxu0 0.0
        %932 = vmatpush1.xpose.msra.mxu0 0.0
        %933 = vmatprep.subr.mxu0 0.0
        %934 = vmatpush1.xpose.msra.mxu0 0.0
        %935 = vmatprep.subr.mxu0 0.0
        %936 = vmatpush1.xpose.msra.mxu0 0.0
        %937 = vmatprep.subr.mxu0 0.0
        %938 = vmatpush1.xpose.msra.mxu0 0.0
        %939 = vmatprep.subr.mxu0 0.0
        %940 = vmatpush1.xpose.msra.mxu0 0.0
        %941 = vmatprep.subr.mxu0 0.0
        %942 = vmatpush1.xpose.msra.mxu0 0.0
        %943 = vmatprep.subr.mxu0 0.0
        %944 = vmatpush1.xpose.msra.mxu0 0.0
        %945 = vmatprep.subr.mxu0 0.0
        %946 = vmatpush1.xpose.msra.mxu0 0.0
        %947 = vmatprep.subr.mxu0 0.0
        %948 = vmatpush1.xpose.msra.mxu0 0.0
        %949 = vmatprep.subr.mxu0 0.0
        %950 = vmatpush1.xpose.msra.mxu0 0.0
        %951 = vmatprep.subr.mxu0 0.0
        %952 = vmatpush1.xpose.msra.mxu0 0.0
        %953 = vmatprep.subr.mxu0 0.0
        %954 = vmatpush1.xpose.msra.mxu0 0.0
        %955 = vmatprep.subr.mxu0 0.0
        %956 = vmatpush1.xpose.msra.mxu0 0.0
        %957 = vmatprep.subr.mxu0 0.0
        %958 = vmatpush1.xpose.msra.mxu0 0.0
        %959 = vmatprep.subr.mxu0 0.0
        %960 = vmatpush1.xpose.msra.mxu0 0.0
        %961 = vmatprep.subr.mxu0 0.0
        %962 = vmatpush1.xpose.msra.mxu0 0.0
        %963 = vmatprep.subr.mxu0 0.0
        %964 = vmatpush1.xpose.msra.mxu0 0.0
        %965 = vmatprep.subr.mxu0 0.0
        %966 = vmatpush1.xpose.msra.mxu0 0.0
        %967 = vmatprep.mubr.f32.mxu0 0.0
        %968 = vmatmul.mubr.f32.gmra.mrb[0].mxu0 %v901
        %v969 = vpop.f32.mrb[0].mxu0
        %v970 = vadd.f32 0.0, %v969
        %v971 = vpop.f32.mrb[0].mxu0
        %972 = vdwg.mxu0
        %v974 = vsel %vm607, %v604, 0
        %976 = vmatprep.subr.mxu0 0.0
        %977 = vmatpush1.xpose.msra.mxu0 %v974
        %978 = vmatprep.subr.mxu0 0.0
        %979 = vmatpush1.xpose.msra.mxu0 0.0
        %980 = vmatprep.subr.mxu0 0.0
        %981 = vmatpush1.xpose.msra.mxu0 0.0
        %982 = vmatprep.subr.mxu0 0.0
        %983 = vmatpush1.xpose.msra.mxu0 0.0
        %984 = vmatprep.subr.mxu0 0.0
        %985 = vmatpush1.xpose.msra.mxu0 0.0
        %986 = vmatprep.subr.mxu0 0.0
        %987 = vmatpush1.xpose.msra.mxu0 0.0
        %988 = vmatprep.subr.mxu0 0.0
        %989 = vmatpush1.xpose.msra.mxu0 0.0
        %990 = vmatprep.subr.mxu0 0.0
        %991 = vmatpush1.xpose.msra.mxu0 0.0
        %992 = vmatprep.subr.mxu0 0.0
        %993 = vmatpush1.xpose.msra.mxu0 0.0
        %994 = vmatprep.subr.mxu0 0.0
        %995 = vmatpush1.xpose.msra.mxu0 0.0
        %996 = vmatprep.subr.mxu0 0.0
        %997 = vmatpush1.xpose.msra.mxu0 0.0
        %998 = vmatprep.subr.mxu0 0.0
        %999 = vmatpush1.xpose.msra.mxu0 0.0
        %1000 = vmatprep.subr.mxu0 0.0
        %1001 = vmatpush1.xpose.msra.mxu0 0.0
        %1002 = vmatprep.subr.mxu0 0.0
        %1003 = vmatpush1.xpose.msra.mxu0 0.0
        %1004 = vmatprep.subr.mxu0 0.0
        %1005 = vmatpush1.xpose.msra.mxu0 0.0
        %1006 = vmatprep.subr.mxu0 0.0
        %1007 = vmatpush1.xpose.msra.mxu0 0.0
        %1008 = vmatprep.subr.mxu0 0.0
        %1009 = vmatpush1.xpose.msra.mxu0 0.0
        %1010 = vmatprep.subr.mxu0 0.0
        %1011 = vmatpush1.xpose.msra.mxu0 0.0
        %1012 = vmatprep.subr.mxu0 0.0
        %1013 = vmatpush1.xpose.msra.mxu0 0.0
        %1014 = vmatprep.subr.mxu0 0.0
        %1015 = vmatpush1.xpose.msra.mxu0 0.0
        %1016 = vmatprep.subr.mxu0 0.0
        %1017 = vmatpush1.xpose.msra.mxu0 0.0
        %1018 = vmatprep.subr.mxu0 0.0
        %1019 = vmatpush1.xpose.msra.mxu0 0.0
        %1020 = vmatprep.subr.mxu0 0.0
        %1021 = vmatpush1.xpose.msra.mxu0 0.0
        %1022 = vmatprep.subr.mxu0 0.0
        %1023 = vmatpush1.xpose.msra.mxu0 0.0
        %1024 = vmatprep.subr.mxu0 0.0
        %1025 = vmatpush1.xpose.msra.mxu0 0.0
        %1026 = vmatprep.subr.mxu0 0.0
        %1027 = vmatpush1.xpose.msra.mxu0 0.0
        %1028 = vmatprep.subr.mxu0 0.0
        %1029 = vmatpush1.xpose.msra.mxu0 0.0
        %1030 = vmatprep.subr.mxu0 0.0
        %1031 = vmatpush1.xpose.msra.mxu0 0.0
        %1032 = vmatprep.subr.mxu0 0.0
        %1033 = vmatpush1.xpose.msra.mxu0 0.0
        %1034 = vmatprep.subr.mxu0 0.0
        %1035 = vmatpush1.xpose.msra.mxu0 0.0
        %1036 = vmatprep.subr.mxu0 0.0
        %1037 = vmatpush1.xpose.msra.mxu0 0.0
        %1038 = vmatprep.subr.mxu0 0.0
        %1039 = vmatpush1.xpose.msra.mxu0 0.0
        %1040 = vmatprep.mubr.f32.mxu0 0.0
        %1041 = vmatmul.mubr.f32.gmra.mrb[0].mxu0 %v974
        %v1042 = vpop.f32.mrb[0].mxu0
        %v1043 = vadd.f32 0.0, %v1042
        %v1044 = vpop.f32.mrb[0].mxu0
        %1045 = vdwg.mxu0
        %v1047 = vsel %vm607, %v605, 0
        %1049 = vmatprep.subr.mxu0 0.0
        %1050 = vmatpush1.xpose.msra.mxu0 %v1047
        %1051 = vmatprep.subr.mxu0 0.0
        %1052 = vmatpush1.xpose.msra.mxu0 0.0
        %1053 = vmatprep.subr.mxu0 0.0
        %1054 = vmatpush1.xpose.msra.mxu0 0.0
        %1055 = vmatprep.subr.mxu0 0.0
        %1056 = vmatpush1.xpose.msra.mxu0 0.0
        %1057 = vmatprep.subr.mxu0 0.0
        %1058 = vmatpush1.xpose.msra.mxu0 0.0
        %1059 = vmatprep.subr.mxu0 0.0
        %1060 = vmatpush1.xpose.msra.mxu0 0.0
        %1061 = vmatprep.subr.mxu0 0.0
        %1062 = vmatpush1.xpose.msra.mxu0 0.0
        %1063 = vmatprep.subr.mxu0 0.0
        %1064 = vmatpush1.xpose.msra.mxu0 0.0
        %1065 = vmatprep.subr.mxu0 0.0
        %1066 = vmatpush1.xpose.msra.mxu0 0.0
        %1067 = vmatprep.subr.mxu0 0.0
        %1068 = vmatpush1.xpose.msra.mxu0 0.0
        %1069 = vmatprep.subr.mxu0 0.0
        %1070 = vmatpush1.xpose.msra.mxu0 0.0
        %1071 = vmatprep.subr.mxu0 0.0
        %1072 = vmatpush1.xpose.msra.mxu0 0.0
        %1073 = vmatprep.subr.mxu0 0.0
        %1074 = vmatpush1.xpose.msra.mxu0 0.0
        %1075 = vmatprep.subr.mxu0 0.0
        %1076 = vmatpush1.xpose.msra.mxu0 0.0
        %1077 = vmatprep.subr.mxu0 0.0
        %1078 = vmatpush1.xpose.msra.mxu0 0.0
        %1079 = vmatprep.subr.mxu0 0.0
        %1080 = vmatpush1.xpose.msra.mxu0 0.0
        %1081 = vmatprep.subr.mxu0 0.0
        %1082 = vmatpush1.xpose.msra.mxu0 0.0
        %1083 = vmatprep.subr.mxu0 0.0
        %1084 = vmatpush1.xpose.msra.mxu0 0.0
        %1085 = vmatprep.subr.mxu0 0.0
        %1086 = vmatpush1.xpose.msra.mxu0 0.0
        %1087 = vmatprep.subr.mxu0 0.0
        %1088 = vmatpush1.xpose.msra.mxu0 0.0
        %1089 = vmatprep.subr.mxu0 0.0
        %1090 = vmatpush1.xpose.msra.mxu0 0.0
        %1091 = vmatprep.subr.mxu0 0.0
        %1092 = vmatpush1.xpose.msra.mxu0 0.0
        %1093 = vmatprep.subr.mxu0 0.0
        %1094 = vmatpush1.xpose.msra.mxu0 0.0
        %1095 = vmatprep.subr.mxu0 0.0
        %1096 = vmatpush1.xpose.msra.mxu0 0.0
        %1097 = vmatprep.subr.mxu0 0.0
        %1098 = vmatpush1.xpose.msra.mxu0 0.0
        %1099 = vmatprep.subr.mxu0 0.0
        %1100 = vmatpush1.xpose.msra.mxu0 0.0
        %1101 = vmatprep.subr.mxu0 0.0
        %1102 = vmatpush1.xpose.msra.mxu0 0.0
        %1103 = vmatprep.subr.mxu0 0.0
        %1104 = vmatpush1.xpose.msra.mxu0 0.0
        %1105 = vmatprep.subr.mxu0 0.0
        %1106 = vmatpush1.xpose.msra.mxu0 0.0
        %1107 = vmatprep.subr.mxu0 0.0
        %1108 = vmatpush1.xpose.msra.mxu0 0.0
        %1109 = vmatprep.subr.mxu0 0.0
        %1110 = vmatpush1.xpose.msra.mxu0 0.0
        %1111 = vmatprep.subr.mxu0 0.0
        %1112 = vmatpush1.xpose.msra.mxu0 0.0
        %1113 = vmatprep.mubr.f32.mxu0 0.0
        %1114 = vmatmul.mubr.f32.gmra.mrb[0].mxu0 %v1047
        %v1115 = vpop.f32.mrb[0].mxu0
        %v1116 = vadd.f32 0.0, %v1115
        %v1117 = vpop.f32.mrb[0].mxu0
        %1118 = vdwg.mxu0
        %v1120 = vsel %vm607, %v606, 0
        %1122 = vmatprep.subr.mxu0 0.0
        %1123 = vmatpush1.xpose.msra.mxu0 %v1120
        %1124 = vmatprep.subr.mxu0 0.0
        %1125 = vmatpush1.xpose.msra.mxu0 0.0
        %1126 = vmatprep.subr.mxu0 0.0
        %1127 = vmatpush1.xpose.msra.mxu0 0.0
        %1128 = vmatprep.subr.mxu0 0.0
        %1129 = vmatpush1.xpose.msra.mxu0 0.0
        %1130 = vmatprep.subr.mxu0 0.0
        %1131 = vmatpush1.xpose.msra.mxu0 0.0
        %1132 = vmatprep.subr.mxu0 0.0
        %1133 = vmatpush1.xpose.msra.mxu0 0.0
        %1134 = vmatprep.subr.mxu0 0.0
        %1135 = vmatpush1.xpose.msra.mxu0 0.0
        %1136 = vmatprep.subr.mxu0 0.0
        %1137 = vmatpush1.xpose.msra.mxu0 0.0
        %1138 = vmatprep.subr.mxu0 0.0
        %1139 = vmatpush1.xpose.msra.mxu0 0.0
        %1140 = vmatprep.subr.mxu0 0.0
        %1141 = vmatpush1.xpose.msra.mxu0 0.0
        %1142 = vmatprep.subr.mxu0 0.0
        %1143 = vmatpush1.xpose.msra.mxu0 0.0
        %1144 = vmatprep.subr.mxu0 0.0
        %1145 = vmatpush1.xpose.msra.mxu0 0.0
        %1146 = vmatprep.subr.mxu0 0.0
        %1147 = vmatpush1.xpose.msra.mxu0 0.0
        %1148 = vmatprep.subr.mxu0 0.0
        %1149 = vmatpush1.xpose.msra.mxu0 0.0
        %1150 = vmatprep.subr.mxu0 0.0
        %1151 = vmatpush1.xpose.msra.mxu0 0.0
        %1152 = vmatprep.subr.mxu0 0.0
        %1153 = vmatpush1.xpose.msra.mxu0 0.0
        %1154 = vmatprep.subr.mxu0 0.0
        %1155 = vmatpush1.xpose.msra.mxu0 0.0
        %1156 = vmatprep.subr.mxu0 0.0
        %1157 = vmatpush1.xpose.msra.mxu0 0.0
        %1158 = vmatprep.subr.mxu0 0.0
        %1159 = vmatpush1.xpose.msra.mxu0 0.0
        %1160 = vmatprep.subr.mxu0 0.0
        %1161 = vmatpush1.xpose.msra.mxu0 0.0
        %1162 = vmatprep.subr.mxu0 0.0
        %1163 = vmatpush1.xpose.msra.mxu0 0.0
        %1164 = vmatprep.subr.mxu0 0.0
        %1165 = vmatpush1.xpose.msra.mxu0 0.0
        %1166 = vmatprep.subr.mxu0 0.0
        %1167 = vmatpush1.xpose.msra.mxu0 0.0
        %1168 = vmatprep.subr.mxu0 0.0
        %1169 = vmatpush1.xpose.msra.mxu0 0.0
        %1170 = vmatprep.subr.mxu0 0.0
        %1171 = vmatpush1.xpose.msra.mxu0 0.0
        %1172 = vmatprep.subr.mxu0 0.0
        %1173 = vmatpush1.xpose.msra.mxu0 0.0
        %1174 = vmatprep.subr.mxu0 0.0
        %1175 = vmatpush1.xpose.msra.mxu0 0.0
        %1176 = vmatprep.subr.mxu0 0.0
        %1177 = vmatpush1.xpose.msra.mxu0 0.0
        %1178 = vmatprep.subr.mxu0 0.0
        %1179 = vmatpush1.xpose.msra.mxu0 0.0
        %1180 = vmatprep.subr.mxu0 0.0
        %1181 = vmatpush1.xpose.msra.mxu0 0.0
        %1182 = vmatprep.subr.mxu0 0.0
        %1183 = vmatpush1.xpose.msra.mxu0 0.0
        %1184 = vmatprep.subr.mxu0 0.0
        %1185 = vmatpush1.xpose.msra.mxu0 0.0
        %1186 = vmatprep.mubr.f32.mxu0 0.0
        %1187 = vmatmul.mubr.f32.gmra.mrb[0].mxu0 %v1120
        %v1188 = vpop.f32.mrb[0].mxu0
        %v1189 = vadd.f32 0.0, %v1188
        %v1190 = vpop.f32.mrb[0].mxu0
        %1191 = vdwg.mxu0
        %v1192 = vld [vmem:[#allocation19] sm:$0xff]
        %v1194 = vsel %vm607, %v678, 0
        %v1197 = vsel %vm607, %v751, 0
        %v1200 = vsel %vm607, %v824, 0
        %v1203 = vsel %vm607, %v897, 0
        %v1206 = vsel %vm607, %v970, 0
        %v1209 = vsel %vm607, %v1043, 0
        %v1212 = vsel %vm607, %v1116, 0
        %v1215 = vsel %vm607, %v1189, 0
        %1217 = vmatprep.subr.mxu0 0.0
        %1218 = vmatpush1.msra.mxu0 %v1192
        %1219 = vmatprep.subr.mxu0 0.0
        %1220 = vmatpush1.msra.mxu0 0.0
        %1221 = vmatprep.subr.mxu0 0.0
        %1222 = vmatpush1.msra.mxu0 0.0
        %1223 = vmatprep.subr.mxu0 0.0
        %1224 = vmatpush1.msra.mxu0 0.0
        %1225 = vmatprep.subr.mxu0 0.0
        %1226 = vmatpush1.msra.mxu0 0.0
        %1227 = vmatprep.subr.mxu0 0.0
        %1228 = vmatpush1.msra.mxu0 0.0
        %1229 = vmatprep.subr.mxu0 0.0
        %1230 = vmatpush1.msra.mxu0 0.0
        %1231 = vmatprep.subr.mxu0 0.0
        %1232 = vmatpush1.msra.mxu0 0.0
        %1233 = vmatprep.subr.mxu0 0.0
        %1234 = vmatpush1.msra.mxu0 0.0
        %1235 = vmatprep.subr.mxu0 0.0
        %1236 = vmatpush1.msra.mxu0 0.0
        %1237 = vmatprep.subr.mxu0 0.0
        %1238 = vmatpush1.msra.mxu0 0.0
        %1239 = vmatprep.subr.mxu0 0.0
        %1240 = vmatpush1.msra.mxu0 0.0
        %1241 = vmatprep.subr.mxu0 0.0
        %1242 = vmatpush1.msra.mxu0 0.0
        %1243 = vmatprep.subr.mxu0 0.0
        %1244 = vmatpush1.msra.mxu0 0.0
        %1245 = vmatprep.subr.mxu0 0.0
        %1246 = vmatpush1.msra.mxu0 0.0
        %1247 = vmatprep.subr.mxu0 0.0
        %1248 = vmatpush1.msra.mxu0 0.0
        %1249 = vmatprep.subr.mxu0 0.0
        %1250 = vmatpush1.msra.mxu0 0.0
        %1251 = vmatprep.subr.mxu0 0.0
        %1252 = vmatpush1.msra.mxu0 0.0
        %1253 = vmatprep.subr.mxu0 0.0
        %1254 = vmatpush1.msra.mxu0 0.0
        %1255 = vmatprep.subr.mxu0 0.0
        %1256 = vmatpush1.msra.mxu0 0.0
        %1257 = vmatprep.subr.mxu0 0.0
        %1258 = vmatpush1.msra.mxu0 0.0
        %1259 = vmatprep.subr.mxu0 0.0
        %1260 = vmatpush1.msra.mxu0 0.0
        %1261 = vmatprep.subr.mxu0 0.0
        %1262 = vmatpush1.msra.mxu0 0.0
        %1263 = vmatprep.subr.mxu0 0.0
        %1264 = vmatpush1.msra.mxu0 0.0
        %1265 = vmatprep.subr.mxu0 0.0
        %1266 = vmatpush1.msra.mxu0 0.0
        %1267 = vmatprep.subr.mxu0 0.0
        %1268 = vmatpush1.msra.mxu0 0.0
        %1269 = vmatprep.subr.mxu0 0.0
        %1270 = vmatpush1.msra.mxu0 0.0
        %1271 = vmatprep.subr.mxu0 0.0
        %1272 = vmatpush1.msra.mxu0 0.0
        %1273 = vmatprep.subr.mxu0 0.0
        %1274 = vmatpush1.msra.mxu0 0.0
        %1275 = vmatprep.subr.mxu0 0.0
        %1276 = vmatpush1.msra.mxu0 0.0
        %1277 = vmatprep.subr.mxu0 0.0
        %1278 = vmatpush1.msra.mxu0 0.0
        %1279 = vmatprep.subr.mxu0 0.0
        %1280 = vmatpush1.msra.mxu0 0.0
        %1281 = vmatprep.mubr.f32.mxu0 0.0
        %1282 = vmatmul.mubr.f32.gmra.mrb[0].mxu0 %v1194
        %v1283 = vpop.f32.mrb[0].mxu0
        %v1284 = vadd.f32 0.0, %v1283
        %v1285 = vpop.f32.mrb[0].mxu0
        %1286 = vmatprep.mubr.f32.mxu0 0.0
        %1287 = vmatmul.mubr.f32.gmra.mrb[0].mxu0 %v1197
        %v1288 = vpop.f32.mrb[0].mxu0
        %v1289 = vadd.f32 0.0, %v1288
        %v1290 = vpop.f32.mrb[0].mxu0
        %1291 = vmatprep.mubr.f32.mxu0 0.0
        %1292 = vmatmul.mubr.f32.gmra.mrb[0].mxu0 %v1200
        %v1293 = vpop.f32.mrb[0].mxu0
        %v1294 = vadd.f32 0.0, %v1293
        %v1295 = vpop.f32.mrb[0].mxu0
        %1296 = vmatprep.mubr.f32.mxu0 0.0
        %1297 = vmatmul.mubr.f32.gmra.mrb[0].mxu0 %v1203
        %v1298 = vpop.f32.mrb[0].mxu0
        %v1299 = vadd.f32 0.0, %v1298
        %v1300 = vpop.f32.mrb[0].mxu0
        %1301 = vmatprep.mubr.f32.mxu0 0.0
        %1302 = vmatmul.mubr.f32.gmra.mrb[0].mxu0 %v1206
        %v1303 = vpop.f32.mrb[0].mxu0
        %v1304 = vadd.f32 0.0, %v1303
        %v1305 = vpop.f32.mrb[0].mxu0
        %1306 = vmatprep.mubr.f32.mxu0 0.0
        %1307 = vmatmul.mubr.f32.gmra.mrb[0].mxu0 %v1209
        %v1308 = vpop.f32.mrb[0].mxu0
        %v1309 = vadd.f32 0.0, %v1308
        %v1310 = vpop.f32.mrb[0].mxu0
        %1311 = vmatprep.mubr.f32.mxu0 0.0
        %1312 = vmatmul.mubr.f32.gmra.mrb[0].mxu0 %v1212
        %v1313 = vpop.f32.mrb[0].mxu0
        %v1314 = vadd.f32 0.0, %v1313
        %v1315 = vpop.f32.mrb[0].mxu0
        %1316 = vmatprep.mubr.f32.mxu0 0.0
        %1317 = vmatmul.mubr.f32.gmra.mrb[0].mxu0 %v1215
        %v1318 = vpop.f32.mrb[0].mxu0
        %v1319 = vadd.f32 0.0, %v1318
        %v1320 = vpop.f32.mrb[0].mxu0
        %1321 = vdwg.mxu0
        %v1322 = vld [vmem:[#allocation10] sm:$0xff]
        %v1323 = vld [vmem:[#allocation16] sm:$0xff]
        %v1324 = vmul.f32 %v1323, %v1284
        %v1325 = vmul.f32 %v1323, %v1289
        %v1326 = vmul.f32 %v1323, %v1294
        %v1327 = vmul.f32 %v1323, %v1299
        %v1328 = vmul.f32 %v1323, %v1304
        %v1329 = vmul.f32 %v1323, %v1309
        %v1330 = vmul.f32 %v1323, %v1314
        %v1331 = vmul.f32 %v1323, %v1319
        %v1332 = vsub.f32 %v1322, %v1324
        %v1333 = vsub.f32 %v1322, %v1325
        %v1334 = vsub.f32 %v1322, %v1326
        %v1335 = vsub.f32 %v1322, %v1327
        %v1336 = vsub.f32 %v1322, %v1328
        %v1337 = vsub.f32 %v1322, %v1329
        %v1338 = vsub.f32 %v1322, %v1330
        %v1339 = vsub.f32 %v1322, %v1331
        %v1340 = vld [vmem:[#allocation20] sm:$0x1]
        %v1342 = vsel %vm607, %v1340, 0
        %1344 = vmatprep.subr.mxu0 0.0
        %1345 = vmatpush1.msra.mxu0 %v678
        %1346 = vmatprep.subr.mxu0 0.0
        %1347 = vmatpush1.msra.mxu0 0.0
        %1348 = vmatprep.subr.mxu0 0.0
        %1349 = vmatpush1.msra.mxu0 0.0
        %1350 = vmatprep.subr.mxu0 0.0
        %1351 = vmatpush1.msra.mxu0 0.0
        %1352 = vmatprep.subr.mxu0 0.0
        %1353 = vmatpush1.msra.mxu0 0.0
        %1354 = vmatprep.subr.mxu0 0.0
        %1355 = vmatpush1.msra.mxu0 0.0
        %1356 = vmatprep.subr.mxu0 0.0
        %1357 = vmatpush1.msra.mxu0 0.0
        %1358 = vmatprep.subr.mxu0 0.0
        %1359 = vmatpush1.msra.mxu0 0.0
        %1360 = vmatprep.subr.mxu0 0.0
        %1361 = vmatpush1.msra.mxu0 0.0
        %1362 = vmatprep.subr.mxu0 0.0
        %1363 = vmatpush1.msra.mxu0 0.0
        %1364 = vmatprep.subr.mxu0 0.0
        %1365 = vmatpush1.msra.mxu0 0.0
        %1366 = vmatprep.subr.mxu0 0.0
        %1367 = vmatpush1.msra.mxu0 0.0
        %1368 = vmatprep.subr.mxu0 0.0
        %1369 = vmatpush1.msra.mxu0 0.0
        %1370 = vmatprep.subr.mxu0 0.0
        %1371 = vmatpush1.msra.mxu0 0.0
        %1372 = vmatprep.subr.mxu0 0.0
        %1373 = vmatpush1.msra.mxu0 0.0
        %1374 = vmatprep.subr.mxu0 0.0
        %1375 = vmatpush1.msra.mxu0 0.0
        %1376 = vmatprep.subr.mxu0 0.0
        %1377 = vmatpush1.msra.mxu0 0.0
        %1378 = vmatprep.subr.mxu0 0.0
        %1379 = vmatpush1.msra.mxu0 0.0
        %1380 = vmatprep.subr.mxu0 0.0
        %1381 = vmatpush1.msra.mxu0 0.0
        %1382 = vmatprep.subr.mxu0 0.0
        %1383 = vmatpush1.msra.mxu0 0.0
        %1384 = vmatprep.subr.mxu0 0.0
        %1385 = vmatpush1.msra.mxu0 0.0
        %1386 = vmatprep.subr.mxu0 0.0
        %1387 = vmatpush1.msra.mxu0 0.0
        %1388 = vmatprep.subr.mxu0 0.0
        %1389 = vmatpush1.msra.mxu0 0.0
        %1390 = vmatprep.subr.mxu0 0.0
        %1391 = vmatpush1.msra.mxu0 0.0
        %1392 = vmatprep.subr.mxu0 0.0
        %1393 = vmatpush1.msra.mxu0 0.0
        %1394 = vmatprep.subr.mxu0 0.0
        %1395 = vmatpush1.msra.mxu0 0.0
        %1396 = vmatprep.subr.mxu0 0.0
        %1397 = vmatpush1.msra.mxu0 0.0
        %1398 = vmatprep.subr.mxu0 0.0
        %1399 = vmatpush1.msra.mxu0 0.0
        %1400 = vmatprep.subr.mxu0 0.0
        %1401 = vmatpush1.msra.mxu0 0.0
        %1402 = vmatprep.subr.mxu0 0.0
        %1403 = vmatpush1.msra.mxu0 0.0
        %1404 = vmatprep.subr.mxu0 0.0
        %1405 = vmatpush1.msra.mxu0 0.0
        %1406 = vmatprep.subr.mxu0 0.0
        %1407 = vmatpush1.msra.mxu0 0.0
        %1408 = vmatprep.mubr.f32.mxu0 0.0
        %1409 = vmatmul.mubr.f32.gmra.mrb[0].mxu0 %v1342
        %v1410 = vpop.f32.mrb[0].mxu0
        %v1411 = vadd.f32 0.0, %v1410
        %v1412 = vpop.f32.mrb[0].mxu0
        %1413 = vdwg.mxu0
        %1414 = vmatprep.subr.mxu0 0.0
        %1415 = vmatpush1.msra.mxu0 %v751
        %1416 = vmatprep.subr.mxu0 0.0
        %1417 = vmatpush1.msra.mxu0 0.0
        %1418 = vmatprep.subr.mxu0 0.0
        %1419 = vmatpush1.msra.mxu0 0.0
        %1420 = vmatprep.subr.mxu0 0.0
        %1421 = vmatpush1.msra.mxu0 0.0
        %1422 = vmatprep.subr.mxu0 0.0
        %1423 = vmatpush1.msra.mxu0 0.0
        %1424 = vmatprep.subr.mxu0 0.0
        %1425 = vmatpush1.msra.mxu0 0.0
        %1426 = vmatprep.subr.mxu0 0.0
        %1427 = vmatpush1.msra.mxu0 0.0
        %1428 = vmatprep.subr.mxu0 0.0
        %1429 = vmatpush1.msra.mxu0 0.0
        %1430 = vmatprep.subr.mxu0 0.0
        %1431 = vmatpush1.msra.mxu0 0.0
        %1432 = vmatprep.subr.mxu0 0.0
        %1433 = vmatpush1.msra.mxu0 0.0
        %1434 = vmatprep.subr.mxu0 0.0
        %1435 = vmatpush1.msra.mxu0 0.0
        %1436 = vmatprep.subr.mxu0 0.0
        %1437 = vmatpush1.msra.mxu0 0.0
        %1438 = vmatprep.subr.mxu0 0.0
        %1439 = vmatpush1.msra.mxu0 0.0
        %1440 = vmatprep.subr.mxu0 0.0
        %1441 = vmatpush1.msra.mxu0 0.0
        %1442 = vmatprep.subr.mxu0 0.0
        %1443 = vmatpush1.msra.mxu0 0.0
        %1444 = vmatprep.subr.mxu0 0.0
        %1445 = vmatpush1.msra.mxu0 0.0
        %1446 = vmatprep.subr.mxu0 0.0
        %1447 = vmatpush1.msra.mxu0 0.0
        %1448 = vmatprep.subr.mxu0 0.0
        %1449 = vmatpush1.msra.mxu0 0.0
        %1450 = vmatprep.subr.mxu0 0.0
        %1451 = vmatpush1.msra.mxu0 0.0
        %1452 = vmatprep.subr.mxu0 0.0
        %1453 = vmatpush1.msra.mxu0 0.0
        %1454 = vmatprep.subr.mxu0 0.0
        %1455 = vmatpush1.msra.mxu0 0.0
        %1456 = vmatprep.subr.mxu0 0.0
        %1457 = vmatpush1.msra.mxu0 0.0
        %1458 = vmatprep.subr.mxu0 0.0
        %1459 = vmatpush1.msra.mxu0 0.0
        %1460 = vmatprep.subr.mxu0 0.0
        %1461 = vmatpush1.msra.mxu0 0.0
        %1462 = vmatprep.subr.mxu0 0.0
        %1463 = vmatpush1.msra.mxu0 0.0
        %1464 = vmatprep.subr.mxu0 0.0
        %1465 = vmatpush1.msra.mxu0 0.0
        %1466 = vmatprep.subr.mxu0 0.0
        %1467 = vmatpush1.msra.mxu0 0.0
        %1468 = vmatprep.subr.mxu0 0.0
        %1469 = vmatpush1.msra.mxu0 0.0
        %1470 = vmatprep.subr.mxu0 0.0
        %1471 = vmatpush1.msra.mxu0 0.0
        %1472 = vmatprep.subr.mxu0 0.0
        %1473 = vmatpush1.msra.mxu0 0.0
        %1474 = vmatprep.subr.mxu0 0.0
        %1475 = vmatpush1.msra.mxu0 0.0
        %1476 = vmatprep.subr.mxu0 0.0
        %1477 = vmatpush1.msra.mxu0 0.0
        %1478 = vmatprep.mubr.f32.mxu0 0.0
        %1479 = vmatmul.mubr.f32.gmra.mrb[0].mxu0 %v1342
        %v1480 = vpop.f32.mrb[0].mxu0
        %v1481 = vadd.f32 0.0, %v1480
        %v1482 = vpop.f32.mrb[0].mxu0
        %1483 = vdwg.mxu0
        %1484 = vmatprep.subr.mxu0 0.0
        %1485 = vmatpush1.msra.mxu0 %v824
        %1486 = vmatprep.subr.mxu0 0.0
        %1487 = vmatpush1.msra.mxu0 0.0
        %1488 = vmatprep.subr.mxu0 0.0
        %1489 = vmatpush1.msra.mxu0 0.0
        %1490 = vmatprep.subr.mxu0 0.0
        %1491 = vmatpush1.msra.mxu0 0.0
        %1492 = vmatprep.subr.mxu0 0.0
        %1493 = vmatpush1.msra.mxu0 0.0
        %1494 = vmatprep.subr.mxu0 0.0
        %1495 = vmatpush1.msra.mxu0 0.0
        %1496 = vmatprep.subr.mxu0 0.0
        %1497 = vmatpush1.msra.mxu0 0.0
        %1498 = vmatprep.subr.mxu0 0.0
        %1499 = vmatpush1.msra.mxu0 0.0
        %1500 = vmatprep.subr.mxu0 0.0
        %1501 = vmatpush1.msra.mxu0 0.0
        %1502 = vmatprep.subr.mxu0 0.0
        %1503 = vmatpush1.msra.mxu0 0.0
        %1504 = vmatprep.subr.mxu0 0.0
        %1505 = vmatpush1.msra.mxu0 0.0
        %1506 = vmatprep.subr.mxu0 0.0
        %1507 = vmatpush1.msra.mxu0 0.0
        %1508 = vmatprep.subr.mxu0 0.0
        %1509 = vmatpush1.msra.mxu0 0.0
        %1510 = vmatprep.subr.mxu0 0.0
        %1511 = vmatpush1.msra.mxu0 0.0
        %1512 = vmatprep.subr.mxu0 0.0
        %1513 = vmatpush1.msra.mxu0 0.0
        %1514 = vmatprep.subr.mxu0 0.0
        %1515 = vmatpush1.msra.mxu0 0.0
        %1516 = vmatprep.subr.mxu0 0.0
        %1517 = vmatpush1.msra.mxu0 0.0
        %1518 = vmatprep.subr.mxu0 0.0
        %1519 = vmatpush1.msra.mxu0 0.0
        %1520 = vmatprep.subr.mxu0 0.0
        %1521 = vmatpush1.msra.mxu0 0.0
        %1522 = vmatprep.subr.mxu0 0.0
        %1523 = vmatpush1.msra.mxu0 0.0
        %1524 = vmatprep.subr.mxu0 0.0
        %1525 = vmatpush1.msra.mxu0 0.0
        %1526 = vmatprep.subr.mxu0 0.0
        %1527 = vmatpush1.msra.mxu0 0.0
        %1528 = vmatprep.subr.mxu0 0.0
        %1529 = vmatpush1.msra.mxu0 0.0
        %1530 = vmatprep.subr.mxu0 0.0
        %1531 = vmatpush1.msra.mxu0 0.0
        %1532 = vmatprep.subr.mxu0 0.0
        %1533 = vmatpush1.msra.mxu0 0.0
        %1534 = vmatprep.subr.mxu0 0.0
        %1535 = vmatpush1.msra.mxu0 0.0
        %1536 = vmatprep.subr.mxu0 0.0
        %1537 = vmatpush1.msra.mxu0 0.0
        %1538 = vmatprep.subr.mxu0 0.0
        %1539 = vmatpush1.msra.mxu0 0.0
        %1540 = vmatprep.subr.mxu0 0.0
        %1541 = vmatpush1.msra.mxu0 0.0
        %1542 = vmatprep.subr.mxu0 0.0
        %1543 = vmatpush1.msra.mxu0 0.0
        %1544 = vmatprep.subr.mxu0 0.0
        %1545 = vmatpush1.msra.mxu0 0.0
        %1546 = vmatprep.subr.mxu0 0.0
        %1547 = vmatpush1.msra.mxu0 0.0
        %1548 = vmatprep.mubr.f32.mxu0 0.0
        %1549 = vmatmul.mubr.f32.gmra.mrb[0].mxu0 %v1342
        %v1550 = vpop.f32.mrb[0].mxu0
        %v1551 = vadd.f32 0.0, %v1550
        %v1552 = vpop.f32.mrb[0].mxu0
        %1553 = vdwg.mxu0
        %1554 = vmatprep.subr.mxu0 0.0
        %1555 = vmatpush1.msra.mxu0 %v897
        %1556 = vmatprep.subr.mxu0 0.0
        %1557 = vmatpush1.msra.mxu0 0.0
        %1558 = vmatprep.subr.mxu0 0.0
        %1559 = vmatpush1.msra.mxu0 0.0
        %1560 = vmatprep.subr.mxu0 0.0
        %1561 = vmatpush1.msra.mxu0 0.0
        %1562 = vmatprep.subr.mxu0 0.0
        %1563 = vmatpush1.msra.mxu0 0.0
        %1564 = vmatprep.subr.mxu0 0.0
        %1565 = vmatpush1.msra.mxu0 0.0
        %1566 = vmatprep.subr.mxu0 0.0
        %1567 = vmatpush1.msra.mxu0 0.0
        %1568 = vmatprep.subr.mxu0 0.0
        %1569 = vmatpush1.msra.mxu0 0.0
        %1570 = vmatprep.subr.mxu0 0.0
        %1571 = vmatpush1.msra.mxu0 0.0
        %1572 = vmatprep.subr.mxu0 0.0
        %1573 = vmatpush1.msra.mxu0 0.0
        %1574 = vmatprep.subr.mxu0 0.0
        %1575 = vmatpush1.msra.mxu0 0.0
        %1576 = vmatprep.subr.mxu0 0.0
        %1577 = vmatpush1.msra.mxu0 0.0
        %1578 = vmatprep.subr.mxu0 0.0
        %1579 = vmatpush1.msra.mxu0 0.0
        %1580 = vmatprep.subr.mxu0 0.0
        %1581 = vmatpush1.msra.mxu0 0.0
        %1582 = vmatprep.subr.mxu0 0.0
        %1583 = vmatpush1.msra.mxu0 0.0
        %1584 = vmatprep.subr.mxu0 0.0
        %1585 = vmatpush1.msra.mxu0 0.0
        %1586 = vmatprep.subr.mxu0 0.0
        %1587 = vmatpush1.msra.mxu0 0.0
        %1588 = vmatprep.subr.mxu0 0.0
        %1589 = vmatpush1.msra.mxu0 0.0
        %1590 = vmatprep.subr.mxu0 0.0
        %1591 = vmatpush1.msra.mxu0 0.0
        %1592 = vmatprep.subr.mxu0 0.0
        %1593 = vmatpush1.msra.mxu0 0.0
        %1594 = vmatprep.subr.mxu0 0.0
        %1595 = vmatpush1.msra.mxu0 0.0
        %1596 = vmatprep.subr.mxu0 0.0
        %1597 = vmatpush1.msra.mxu0 0.0
        %1598 = vmatprep.subr.mxu0 0.0
        %1599 = vmatpush1.msra.mxu0 0.0
        %1600 = vmatprep.subr.mxu0 0.0
        %1601 = vmatpush1.msra.mxu0 0.0
        %1602 = vmatprep.subr.mxu0 0.0
        %1603 = vmatpush1.msra.mxu0 0.0
        %1604 = vmatprep.subr.mxu0 0.0
        %1605 = vmatpush1.msra.mxu0 0.0
        %1606 = vmatprep.subr.mxu0 0.0
        %1607 = vmatpush1.msra.mxu0 0.0
        %1608 = vmatprep.subr.mxu0 0.0
        %1609 = vmatpush1.msra.mxu0 0.0
        %1610 = vmatprep.subr.mxu0 0.0
        %1611 = vmatpush1.msra.mxu0 0.0
        %1612 = vmatprep.subr.mxu0 0.0
        %1613 = vmatpush1.msra.mxu0 0.0
        %1614 = vmatprep.subr.mxu0 0.0
        %1615 = vmatpush1.msra.mxu0 0.0
        %1616 = vmatprep.subr.mxu0 0.0
        %1617 = vmatpush1.msra.mxu0 0.0
        %1618 = vmatprep.mubr.f32.mxu0 0.0
        %1619 = vmatmul.mubr.f32.gmra.mrb[0].mxu0 %v1342
        %v1620 = vpop.f32.mrb[0].mxu0
        %v1621 = vadd.f32 0.0, %v1620
        %v1622 = vpop.f32.mrb[0].mxu0
        %1623 = vdwg.mxu0
        %1624 = vmatprep.subr.mxu0 0.0
        %1625 = vmatpush1.msra.mxu0 %v970
        %1626 = vmatprep.subr.mxu0 0.0
        %1627 = vmatpush1.msra.mxu0 0.0
        %1628 = vmatprep.subr.mxu0 0.0
        %1629 = vmatpush1.msra.mxu0 0.0
        %1630 = vmatprep.subr.mxu0 0.0
        %1631 = vmatpush1.msra.mxu0 0.0
        %1632 = vmatprep.subr.mxu0 0.0
        %1633 = vmatpush1.msra.mxu0 0.0
        %1634 = vmatprep.subr.mxu0 0.0
        %1635 = vmatpush1.msra.mxu0 0.0
        %1636 = vmatprep.subr.mxu0 0.0
        %1637 = vmatpush1.msra.mxu0 0.0
        %1638 = vmatprep.subr.mxu0 0.0
        %1639 = vmatpush1.msra.mxu0 0.0
        %1640 = vmatprep.subr.mxu0 0.0
        %1641 = vmatpush1.msra.mxu0 0.0
        %1642 = vmatprep.subr.mxu0 0.0
        %1643 = vmatpush1.msra.mxu0 0.0
        %1644 = vmatprep.subr.mxu0 0.0
        %1645 = vmatpush1.msra.mxu0 0.0
        %1646 = vmatprep.subr.mxu0 0.0
        %1647 = vmatpush1.msra.mxu0 0.0
        %1648 = vmatprep.subr.mxu0 0.0
        %1649 = vmatpush1.msra.mxu0 0.0
        %1650 = vmatprep.subr.mxu0 0.0
        %1651 = vmatpush1.msra.mxu0 0.0
        %1652 = vmatprep.subr.mxu0 0.0
        %1653 = vmatpush1.msra.mxu0 0.0
        %1654 = vmatprep.subr.mxu0 0.0
        %1655 = vmatpush1.msra.mxu0 0.0
        %1656 = vmatprep.subr.mxu0 0.0
        %1657 = vmatpush1.msra.mxu0 0.0
        %1658 = vmatprep.subr.mxu0 0.0
        %1659 = vmatpush1.msra.mxu0 0.0
        %1660 = vmatprep.subr.mxu0 0.0
        %1661 = vmatpush1.msra.mxu0 0.0
        %1662 = vmatprep.subr.mxu0 0.0
        %1663 = vmatpush1.msra.mxu0 0.0
        %1664 = vmatprep.subr.mxu0 0.0
        %1665 = vmatpush1.msra.mxu0 0.0
        %1666 = vmatprep.subr.mxu0 0.0
        %1667 = vmatpush1.msra.mxu0 0.0
        %1668 = vmatprep.subr.mxu0 0.0
        %1669 = vmatpush1.msra.mxu0 0.0
        %1670 = vmatprep.subr.mxu0 0.0
        %1671 = vmatpush1.msra.mxu0 0.0
        %1672 = vmatprep.subr.mxu0 0.0
        %1673 = vmatpush1.msra.mxu0 0.0
        %1674 = vmatprep.subr.mxu0 0.0
        %1675 = vmatpush1.msra.mxu0 0.0
        %1676 = vmatprep.subr.mxu0 0.0
        %1677 = vmatpush1.msra.mxu0 0.0
        %1678 = vmatprep.subr.mxu0 0.0
        %1679 = vmatpush1.msra.mxu0 0.0
        %1680 = vmatprep.subr.mxu0 0.0
        %1681 = vmatpush1.msra.mxu0 0.0
        %1682 = vmatprep.subr.mxu0 0.0
        %1683 = vmatpush1.msra.mxu0 0.0
        %1684 = vmatprep.subr.mxu0 0.0
        %1685 = vmatpush1.msra.mxu0 0.0
        %1686 = vmatprep.subr.mxu0 0.0
        %1687 = vmatpush1.msra.mxu0 0.0
        %1688 = vmatprep.mubr.f32.mxu0 0.0
        %1689 = vmatmul.mubr.f32.gmra.mrb[0].mxu0 %v1342
        %v1690 = vpop.f32.mrb[0].mxu0
        %v1691 = vadd.f32 0.0, %v1690
        %v1692 = vpop.f32.mrb[0].mxu0
        %1693 = vdwg.mxu0
        %1694 = vmatprep.subr.mxu0 0.0
        %1695 = vmatpush1.msra.mxu0 %v1043
        %1696 = vmatprep.subr.mxu0 0.0
        %1697 = vmatpush1.msra.mxu0 0.0
        %1698 = vmatprep.subr.mxu0 0.0
        %1699 = vmatpush1.msra.mxu0 0.0
        %1700 = vmatprep.subr.mxu0 0.0
        %1701 = vmatpush1.msra.mxu0 0.0
        %1702 = vmatprep.subr.mxu0 0.0
        %1703 = vmatpush1.msra.mxu0 0.0
        %1704 = vmatprep.subr.mxu0 0.0
        %1705 = vmatpush1.msra.mxu0 0.0
        %1706 = vmatprep.subr.mxu0 0.0
        %1707 = vmatpush1.msra.mxu0 0.0
        %1708 = vmatprep.subr.mxu0 0.0
        %1709 = vmatpush1.msra.mxu0 0.0
        %1710 = vmatprep.subr.mxu0 0.0
        %1711 = vmatpush1.msra.mxu0 0.0
        %1712 = vmatprep.subr.mxu0 0.0
        %1713 = vmatpush1.msra.mxu0 0.0
        %1714 = vmatprep.subr.mxu0 0.0
        %1715 = vmatpush1.msra.mxu0 0.0
        %1716 = vmatprep.subr.mxu0 0.0
        %1717 = vmatpush1.msra.mxu0 0.0
        %1718 = vmatprep.subr.mxu0 0.0
        %1719 = vmatpush1.msra.mxu0 0.0
        %1720 = vmatprep.subr.mxu0 0.0
        %1721 = vmatpush1.msra.mxu0 0.0
        %1722 = vmatprep.subr.mxu0 0.0
        %1723 = vmatpush1.msra.mxu0 0.0
        %1724 = vmatprep.subr.mxu0 0.0
        %1725 = vmatpush1.msra.mxu0 0.0
        %1726 = vmatprep.subr.mxu0 0.0
        %1727 = vmatpush1.msra.mxu0 0.0
        %1728 = vmatprep.subr.mxu0 0.0
        %1729 = vmatpush1.msra.mxu0 0.0
        %1730 = vmatprep.subr.mxu0 0.0
        %1731 = vmatpush1.msra.mxu0 0.0
        %1732 = vmatprep.subr.mxu0 0.0
        %1733 = vmatpush1.msra.mxu0 0.0
        %1734 = vmatprep.subr.mxu0 0.0
        %1735 = vmatpush1.msra.mxu0 0.0
        %1736 = vmatprep.subr.mxu0 0.0
        %1737 = vmatpush1.msra.mxu0 0.0
        %1738 = vmatprep.subr.mxu0 0.0
        %1739 = vmatpush1.msra.mxu0 0.0
        %1740 = vmatprep.subr.mxu0 0.0
        %1741 = vmatpush1.msra.mxu0 0.0
        %1742 = vmatprep.subr.mxu0 0.0
        %1743 = vmatpush1.msra.mxu0 0.0
        %1744 = vmatprep.subr.mxu0 0.0
        %1745 = vmatpush1.msra.mxu0 0.0
        %1746 = vmatprep.subr.mxu0 0.0
        %1747 = vmatpush1.msra.mxu0 0.0
        %1748 = vmatprep.subr.mxu0 0.0
        %1749 = vmatpush1.msra.mxu0 0.0
        %1750 = vmatprep.subr.mxu0 0.0
        %1751 = vmatpush1.msra.mxu0 0.0
        %1752 = vmatprep.subr.mxu0 0.0
        %1753 = vmatpush1.msra.mxu0 0.0
        %1754 = vmatprep.subr.mxu0 0.0
        %1755 = vmatpush1.msra.mxu0 0.0
        %1756 = vmatprep.subr.mxu0 0.0
        %1757 = vmatpush1.msra.mxu0 0.0
        %1758 = vmatprep.mubr.f32.mxu0 0.0
        %1759 = vmatmul.mubr.f32.gmra.mrb[0].mxu0 %v1342
        %v1760 = vpop.f32.mrb[0].mxu0
        %v1761 = vadd.f32 0.0, %v1760
        %v1762 = vpop.f32.mrb[0].mxu0
        %1763 = vdwg.mxu0
        %1764 = vmatprep.subr.mxu0 0.0
        %1765 = vmatpush1.msra.mxu0 %v1116
        %1766 = vmatprep.subr.mxu0 0.0
        %1767 = vmatpush1.msra.mxu0 0.0
        %1768 = vmatprep.subr.mxu0 0.0
        %1769 = vmatpush1.msra.mxu0 0.0
        %1770 = vmatprep.subr.mxu0 0.0
        %1771 = vmatpush1.msra.mxu0 0.0
        %1772 = vmatprep.subr.mxu0 0.0
        %1773 = vmatpush1.msra.mxu0 0.0
        %1774 = vmatprep.subr.mxu0 0.0
        %1775 = vmatpush1.msra.mxu0 0.0
        %1776 = vmatprep.subr.mxu0 0.0
        %1777 = vmatpush1.msra.mxu0 0.0
        %1778 = vmatprep.subr.mxu0 0.0
        %1779 = vmatpush1.msra.mxu0 0.0
        %1780 = vmatprep.subr.mxu0 0.0
        %1781 = vmatpush1.msra.mxu0 0.0
        %1782 = vmatprep.subr.mxu0 0.0
        %1783 = vmatpush1.msra.mxu0 0.0
        %1784 = vmatprep.subr.mxu0 0.0
        %1785 = vmatpush1.msra.mxu0 0.0
        %1786 = vmatprep.subr.mxu0 0.0
        %1787 = vmatpush1.msra.mxu0 0.0
        %1788 = vmatprep.subr.mxu0 0.0
        %1789 = vmatpush1.msra.mxu0 0.0
        %1790 = vmatprep.subr.mxu0 0.0
        %1791 = vmatpush1.msra.mxu0 0.0
        %1792 = vmatprep.subr.mxu0 0.0
        %1793 = vmatpush1.msra.mxu0 0.0
        %1794 = vmatprep.subr.mxu0 0.0
        %1795 = vmatpush1.msra.mxu0 0.0
        %1796 = vmatprep.subr.mxu0 0.0
        %1797 = vmatpush1.msra.mxu0 0.0
        %1798 = vmatprep.subr.mxu0 0.0
        %1799 = vmatpush1.msra.mxu0 0.0
        %1800 = vmatprep.subr.mxu0 0.0
        %1801 = vmatpush1.msra.mxu0 0.0
        %1802 = vmatprep.subr.mxu0 0.0
        %1803 = vmatpush1.msra.mxu0 0.0
        %1804 = vmatprep.subr.mxu0 0.0
        %1805 = vmatpush1.msra.mxu0 0.0
        %1806 = vmatprep.subr.mxu0 0.0
        %1807 = vmatpush1.msra.mxu0 0.0
        %1808 = vmatprep.subr.mxu0 0.0
        %1809 = vmatpush1.msra.mxu0 0.0
        %1810 = vmatprep.subr.mxu0 0.0
        %1811 = vmatpush1.msra.mxu0 0.0
        %1812 = vmatprep.subr.mxu0 0.0
        %1813 = vmatpush1.msra.mxu0 0.0
        %1814 = vmatprep.subr.mxu0 0.0
        %1815 = vmatpush1.msra.mxu0 0.0
        %1816 = vmatprep.subr.mxu0 0.0
        %1817 = vmatpush1.msra.mxu0 0.0
        %1818 = vmatprep.subr.mxu0 0.0
        %1819 = vmatpush1.msra.mxu0 0.0
        %1820 = vmatprep.subr.mxu0 0.0
        %1821 = vmatpush1.msra.mxu0 0.0
        %1822 = vmatprep.subr.mxu0 0.0
        %1823 = vmatpush1.msra.mxu0 0.0
        %1824 = vmatprep.subr.mxu0 0.0
        %1825 = vmatpush1.msra.mxu0 0.0
        %1826 = vmatprep.subr.mxu0 0.0
        %1827 = vmatpush1.msra.mxu0 0.0
        %1828 = vmatprep.mubr.f32.mxu0 0.0
        %1829 = vmatmul.mubr.f32.gmra.mrb[0].mxu0 %v1342
        %v1830 = vpop.f32.mrb[0].mxu0
        %v1831 = vadd.f32 0.0, %v1830
        %v1832 = vpop.f32.mrb[0].mxu0
        %1833 = vdwg.mxu0
        %1834 = vmatprep.subr.mxu0 0.0
        %1835 = vmatpush1.msra.mxu0 %v1189
        %1836 = vmatprep.subr.mxu0 0.0
        %1837 = vmatpush1.msra.mxu0 0.0
        %1838 = vmatprep.subr.mxu0 0.0
        %1839 = vmatpush1.msra.mxu0 0.0
        %1840 = vmatprep.subr.mxu0 0.0
        %1841 = vmatpush1.msra.mxu0 0.0
        %1842 = vmatprep.subr.mxu0 0.0
        %1843 = vmatpush1.msra.mxu0 0.0
        %1844 = vmatprep.subr.mxu0 0.0
        %1845 = vmatpush1.msra.mxu0 0.0
        %1846 = vmatprep.subr.mxu0 0.0
        %1847 = vmatpush1.msra.mxu0 0.0
        %1848 = vmatprep.subr.mxu0 0.0
        %1849 = vmatpush1.msra.mxu0 0.0
        %1850 = vmatprep.subr.mxu0 0.0
        %1851 = vmatpush1.msra.mxu0 0.0
        %1852 = vmatprep.subr.mxu0 0.0
        %1853 = vmatpush1.msra.mxu0 0.0
        %1854 = vmatprep.subr.mxu0 0.0
        %1855 = vmatpush1.msra.mxu0 0.0
        %1856 = vmatprep.subr.mxu0 0.0
        %1857 = vmatpush1.msra.mxu0 0.0
        %1858 = vmatprep.subr.mxu0 0.0
        %1859 = vmatpush1.msra.mxu0 0.0
        %1860 = vmatprep.subr.mxu0 0.0
        %1861 = vmatpush1.msra.mxu0 0.0
        %1862 = vmatprep.subr.mxu0 0.0
        %1863 = vmatpush1.msra.mxu0 0.0
        %1864 = vmatprep.subr.mxu0 0.0
        %1865 = vmatpush1.msra.mxu0 0.0
        %1866 = vmatprep.subr.mxu0 0.0
        %1867 = vmatpush1.msra.mxu0 0.0
        %1868 = vmatprep.subr.mxu0 0.0
        %1869 = vmatpush1.msra.mxu0 0.0
        %1870 = vmatprep.subr.mxu0 0.0
        %1871 = vmatpush1.msra.mxu0 0.0
        %1872 = vmatprep.subr.mxu0 0.0
        %1873 = vmatpush1.msra.mxu0 0.0
        %1874 = vmatprep.subr.mxu0 0.0
        %1875 = vmatpush1.msra.mxu0 0.0
        %1876 = vmatprep.subr.mxu0 0.0
        %1877 = vmatpush1.msra.mxu0 0.0
        %1878 = vmatprep.subr.mxu0 0.0
        %1879 = vmatpush1.msra.mxu0 0.0
        %1880 = vmatprep.subr.mxu0 0.0
        %1881 = vmatpush1.msra.mxu0 0.0
        %1882 = vmatprep.subr.mxu0 0.0
        %1883 = vmatpush1.msra.mxu0 0.0
        %1884 = vmatprep.subr.mxu0 0.0
        %1885 = vmatpush1.msra.mxu0 0.0
        %1886 = vmatprep.subr.mxu0 0.0
        %1887 = vmatpush1.msra.mxu0 0.0
        %1888 = vmatprep.subr.mxu0 0.0
        %1889 = vmatpush1.msra.mxu0 0.0
        %1890 = vmatprep.subr.mxu0 0.0
        %1891 = vmatpush1.msra.mxu0 0.0
        %1892 = vmatprep.subr.mxu0 0.0
        %1893 = vmatpush1.msra.mxu0 0.0
        %1894 = vmatprep.subr.mxu0 0.0
        %1895 = vmatpush1.msra.mxu0 0.0
        %1896 = vmatprep.subr.mxu0 0.0
        %1897 = vmatpush1.msra.mxu0 0.0
        %1898 = vmatprep.mubr.f32.mxu0 0.0
        %1899 = vmatmul.mubr.f32.gmra.mrb[0].mxu0 %v1342
        %v1900 = vpop.f32.mrb[0].mxu0
        %v1901 = vadd.f32 0.0, %v1900
        %v1902 = vpop.f32.mrb[0].mxu0
        %1903 = vdwg.mxu0
        %v1904 = vld [vmem:[#allocation11] sm:$0x1]
        %v1905 = vld [vmem:[#allocation17] sm:$0x1]
        %v1906 = vmul.f32 %v1905, %v1411
        %v1907 = vmul.f32 %v1905, %v1481
        %v1908 = vmul.f32 %v1905, %v1551
        %v1909 = vmul.f32 %v1905, %v1621
        %v1910 = vmul.f32 %v1905, %v1691
        %v1911 = vmul.f32 %v1905, %v1761
        %v1912 = vmul.f32 %v1905, %v1831
        %v1913 = vmul.f32 %v1905, %v1901
        %v1914 = vsub.f32 %v1904, %v1906
        %v1915 = vsub.f32 %v1904, %v1907
        %v1916 = vsub.f32 %v1904, %v1908
        %v1917 = vsub.f32 %v1904, %v1909
        %v1918 = vsub.f32 %v1904, %v1910
        %v1919 = vsub.f32 %v1904, %v1911
        %v1920 = vsub.f32 %v1904, %v1912
        %v1921 = vsub.f32 %v1904, %v1913
        %v1930 = vlaneseq
        %v1931 = vshrl.u32 %v1930, 7
        %v1932 = vsub.s32 0, %v1931
        %v1933 = vrot.slane %v1914, %v1932
        %v1934 = vlaneseq
        %v1935 = vshrl.u32 %v1934, 7
        %v1936 = vsub.s32 0, %v1935
        %v1937 = vrot.slane %v1915, %v1936
        %v1938 = vlaneseq
        %v1939 = vshrl.u32 %v1938, 7
        %v1940 = vsub.s32 0, %v1939
        %v1941 = vrot.slane %v1916, %v1940
        %v1942 = vlaneseq
        %v1943 = vshrl.u32 %v1942, 7
        %v1944 = vsub.s32 0, %v1943
        %v1945 = vrot.slane %v1917, %v1944
        %v1946 = vlaneseq
        %v1947 = vshrl.u32 %v1946, 7
        %v1948 = vsub.s32 0, %v1947
        %v1949 = vrot.slane %v1918, %v1948
        %v1950 = vlaneseq
        %v1951 = vshrl.u32 %v1950, 7
        %v1952 = vsub.s32 0, %v1951
        %v1953 = vrot.slane %v1919, %v1952
        %v1954 = vlaneseq
        %v1955 = vshrl.u32 %v1954, 7
        %v1956 = vsub.s32 0, %v1955
        %v1957 = vrot.slane %v1920, %v1956
        %v1958 = vlaneseq
        %v1959 = vshrl.u32 %v1958, 7
        %v1960 = vsub.s32 0, %v1959
        %v1961 = vrot.slane %v1921, %v1960
        %v1971 = vsel %vm607, %v1332, 0
        %1973 = vmatprep.subr.mxu0 0.0
        %1974 = vmatpush1.xpose.msra.mxu0 %v1971
        %1975 = vmatprep.subr.mxu0 0.0
        %1976 = vmatpush1.xpose.msra.mxu0 0.0
        %1977 = vmatprep.subr.mxu0 0.0
        %1978 = vmatpush1.xpose.msra.mxu0 0.0
        %1979 = vmatprep.subr.mxu0 0.0
        %1980 = vmatpush1.xpose.msra.mxu0 0.0
        %1981 = vmatprep.subr.mxu0 0.0
        %1982 = vmatpush1.xpose.msra.mxu0 0.0
        %1983 = vmatprep.subr.mxu0 0.0
        %1984 = vmatpush1.xpose.msra.mxu0 0.0
        %1985 = vmatprep.subr.mxu0 0.0
        %1986 = vmatpush1.xpose.msra.mxu0 0.0
        %1987 = vmatprep.subr.mxu0 0.0
        %1988 = vmatpush1.xpose.msra.mxu0 0.0
        %1989 = vmatprep.subr.mxu0 0.0
        %1990 = vmatpush1.xpose.msra.mxu0 0.0
        %1991 = vmatprep.subr.mxu0 0.0
        %1992 = vmatpush1.xpose.msra.mxu0 0.0
        %1993 = vmatprep.subr.mxu0 0.0
        %1994 = vmatpush1.xpose.msra.mxu0 0.0
        %1995 = vmatprep.subr.mxu0 0.0
        %1996 = vmatpush1.xpose.msra.mxu0 0.0
        %1997 = vmatprep.subr.mxu0 0.0
        %1998 = vmatpush1.xpose.msra.mxu0 0.0
        %1999 = vmatprep.subr.mxu0 0.0
        %2000 = vmatpush1.xpose.msra.mxu0 0.0
        %2001 = vmatprep.subr.mxu0 0.0
        %2002 = vmatpush1.xpose.msra.mxu0 0.0
        %2003 = vmatprep.subr.mxu0 0.0
        %2004 = vmatpush1.xpose.msra.mxu0 0.0
        %2005 = vmatprep.subr.mxu0 0.0
        %2006 = vmatpush1.xpose.msra.mxu0 0.0
        %2007 = vmatprep.subr.mxu0 0.0
        %2008 = vmatpush1.xpose.msra.mxu0 0.0
        %2009 = vmatprep.subr.mxu0 0.0
        %2010 = vmatpush1.xpose.msra.mxu0 0.0
        %2011 = vmatprep.subr.mxu0 0.0
        %2012 = vmatpush1.xpose.msra.mxu0 0.0
        %2013 = vmatprep.subr.mxu0 0.0
        %2014 = vmatpush1.xpose.msra.mxu0 0.0
        %2015 = vmatprep.subr.mxu0 0.0
        %2016 = vmatpush1.xpose.msra.mxu0 0.0
        %2017 = vmatprep.subr.mxu0 0.0
        %2018 = vmatpush1.xpose.msra.mxu0 0.0
        %2019 = vmatprep.subr.mxu0 0.0
        %2020 = vmatpush1.xpose.msra.mxu0 0.0
        %2021 = vmatprep.subr.mxu0 0.0
        %2022 = vmatpush1.xpose.msra.mxu0 0.0
        %2023 = vmatprep.subr.mxu0 0.0
        %2024 = vmatpush1.xpose.msra.mxu0 0.0
        %2025 = vmatprep.subr.mxu0 0.0
        %2026 = vmatpush1.xpose.msra.mxu0 0.0
        %2027 = vmatprep.subr.mxu0 0.0
        %2028 = vmatpush1.xpose.msra.mxu0 0.0
        %2029 = vmatprep.subr.mxu0 0.0
        %2030 = vmatpush1.xpose.msra.mxu0 0.0
        %2031 = vmatprep.subr.mxu0 0.0
        %2032 = vmatpush1.xpose.msra.mxu0 0.0
        %2033 = vmatprep.subr.mxu0 0.0
        %2034 = vmatpush1.xpose.msra.mxu0 0.0
        %2035 = vmatprep.subr.mxu0 0.0
        %2036 = vmatpush1.xpose.msra.mxu0 0.0
        %2037 = vmatprep.mubr.f32.mxu0 0.0
        %2038 = vmatmul.mubr.f32.gmra.mrb[0].mxu0 %v609
        %v2039 = vpop.f32.mrb[0].mxu0
        %v2040 = vadd.f32 %v1933, %v2039
        %v2041 = vpop.f32.mrb[0].mxu0
        %2042 = vdwg.mxu0
        %v2044 = vsel %vm607, %v1333, 0
        %2046 = vmatprep.subr.mxu0 0.0
        %2047 = vmatpush1.xpose.msra.mxu0 %v2044
        %2048 = vmatprep.subr.mxu0 0.0
        %2049 = vmatpush1.xpose.msra.mxu0 0.0
        %2050 = vmatprep.subr.mxu0 0.0
        %2051 = vmatpush1.xpose.msra.mxu0 0.0
        %2052 = vmatprep.subr.mxu0 0.0
        %2053 = vmatpush1.xpose.msra.mxu0 0.0
        %2054 = vmatprep.subr.mxu0 0.0
        %2055 = vmatpush1.xpose.msra.mxu0 0.0
        %2056 = vmatprep.subr.mxu0 0.0
        %2057 = vmatpush1.xpose.msra.mxu0 0.0
        %2058 = vmatprep.subr.mxu0 0.0
        %2059 = vmatpush1.xpose.msra.mxu0 0.0
        %2060 = vmatprep.subr.mxu0 0.0
        %2061 = vmatpush1.xpose.msra.mxu0 0.0
        %2062 = vmatprep.subr.mxu0 0.0
        %2063 = vmatpush1.xpose.msra.mxu0 0.0
        %2064 = vmatprep.subr.mxu0 0.0
        %2065 = vmatpush1.xpose.msra.mxu0 0.0
        %2066 = vmatprep.subr.mxu0 0.0
        %2067 = vmatpush1.xpose.msra.mxu0 0.0
        %2068 = vmatprep.subr.mxu0 0.0
        %2069 = vmatpush1.xpose.msra.mxu0 0.0
        %2070 = vmatprep.subr.mxu0 0.0
        %2071 = vmatpush1.xpose.msra.mxu0 0.0
        %2072 = vmatprep.subr.mxu0 0.0
        %2073 = vmatpush1.xpose.msra.mxu0 0.0
        %2074 = vmatprep.subr.mxu0 0.0
        %2075 = vmatpush1.xpose.msra.mxu0 0.0
        %2076 = vmatprep.subr.mxu0 0.0
        %2077 = vmatpush1.xpose.msra.mxu0 0.0
        %2078 = vmatprep.subr.mxu0 0.0
        %2079 = vmatpush1.xpose.msra.mxu0 0.0
        %2080 = vmatprep.subr.mxu0 0.0
        %2081 = vmatpush1.xpose.msra.mxu0 0.0
        %2082 = vmatprep.subr.mxu0 0.0
        %2083 = vmatpush1.xpose.msra.mxu0 0.0
        %2084 = vmatprep.subr.mxu0 0.0
        %2085 = vmatpush1.xpose.msra.mxu0 0.0
        %2086 = vmatprep.subr.mxu0 0.0
        %2087 = vmatpush1.xpose.msra.mxu0 0.0
        %2088 = vmatprep.subr.mxu0 0.0
        %2089 = vmatpush1.xpose.msra.mxu0 0.0
        %2090 = vmatprep.subr.mxu0 0.0
        %2091 = vmatpush1.xpose.msra.mxu0 0.0
        %2092 = vmatprep.subr.mxu0 0.0
        %2093 = vmatpush1.xpose.msra.mxu0 0.0
        %2094 = vmatprep.subr.mxu0 0.0
        %2095 = vmatpush1.xpose.msra.mxu0 0.0
        %2096 = vmatprep.subr.mxu0 0.0
        %2097 = vmatpush1.xpose.msra.mxu0 0.0
        %2098 = vmatprep.subr.mxu0 0.0
        %2099 = vmatpush1.xpose.msra.mxu0 0.0
        %2100 = vmatprep.subr.mxu0 0.0
        %2101 = vmatpush1.xpose.msra.mxu0 0.0
        %2102 = vmatprep.subr.mxu0 0.0
        %2103 = vmatpush1.xpose.msra.mxu0 0.0
        %2104 = vmatprep.subr.mxu0 0.0
        %2105 = vmatpush1.xpose.msra.mxu0 0.0
        %2106 = vmatprep.subr.mxu0 0.0
        %2107 = vmatpush1.xpose.msra.mxu0 0.0
        %2108 = vmatprep.subr.mxu0 0.0
        %2109 = vmatpush1.xpose.msra.mxu0 0.0
        %2110 = vmatprep.mubr.f32.mxu0 0.0
        %2111 = vmatmul.mubr.f32.gmra.mrb[0].mxu0 %v682
        %v2112 = vpop.f32.mrb[0].mxu0
        %v2113 = vadd.f32 %v1937, %v2112
        %v2114 = vpop.f32.mrb[0].mxu0
        %2115 = vdwg.mxu0
        %v2117 = vsel %vm607, %v1334, 0
        %2119 = vmatprep.subr.mxu0 0.0
        %2120 = vmatpush1.xpose.msra.mxu0 %v2117
        %2121 = vmatprep.subr.mxu0 0.0
        %2122 = vmatpush1.xpose.msra.mxu0 0.0
        %2123 = vmatprep.subr.mxu0 0.0
        %2124 = vmatpush1.xpose.msra.mxu0 0.0
        %2125 = vmatprep.subr.mxu0 0.0
        %2126 = vmatpush1.xpose.msra.mxu0 0.0
        %2127 = vmatprep.subr.mxu0 0.0
        %2128 = vmatpush1.xpose.msra.mxu0 0.0
        %2129 = vmatprep.subr.mxu0 0.0
        %2130 = vmatpush1.xpose.msra.mxu0 0.0
        %2131 = vmatprep.subr.mxu0 0.0
        %2132 = vmatpush1.xpose.msra.mxu0 0.0
        %2133 = vmatprep.subr.mxu0 0.0
        %2134 = vmatpush1.xpose.msra.mxu0 0.0
        %2135 = vmatprep.subr.mxu0 0.0
        %2136 = vmatpush1.xpose.msra.mxu0 0.0
        %2137 = vmatprep.subr.mxu0 0.0
        %2138 = vmatpush1.xpose.msra.mxu0 0.0
        %2139 = vmatprep.subr.mxu0 0.0
        %2140 = vmatpush1.xpose.msra.mxu0 0.0
        %2141 = vmatprep.subr.mxu0 0.0
        %2142 = vmatpush1.xpose.msra.mxu0 0.0
        %2143 = vmatprep.subr.mxu0 0.0
        %2144 = vmatpush1.xpose.msra.mxu0 0.0
        %2145 = vmatprep.subr.mxu0 0.0
        %2146 = vmatpush1.xpose.msra.mxu0 0.0
        %2147 = vmatprep.subr.mxu0 0.0
        %2148 = vmatpush1.xpose.msra.mxu0 0.0
        %2149 = vmatprep.subr.mxu0 0.0
        %2150 = vmatpush1.xpose.msra.mxu0 0.0
        %2151 = vmatprep.subr.mxu0 0.0
        %2152 = vmatpush1.xpose.msra.mxu0 0.0
        %2153 = vmatprep.subr.mxu0 0.0
        %2154 = vmatpush1.xpose.msra.mxu0 0.0
        %2155 = vmatprep.subr.mxu0 0.0
        %2156 = vmatpush1.xpose.msra.mxu0 0.0
        %2157 = vmatprep.subr.mxu0 0.0
        %2158 = vmatpush1.xpose.msra.mxu0 0.0
        %2159 = vmatprep.subr.mxu0 0.0
        %2160 = vmatpush1.xpose.msra.mxu0 0.0
        %2161 = vmatprep.subr.mxu0 0.0
        %2162 = vmatpush1.xpose.msra.mxu0 0.0
        %2163 = vmatprep.subr.mxu0 0.0
        %2164 = vmatpush1.xpose.msra.mxu0 0.0
        %2165 = vmatprep.subr.mxu0 0.0
        %2166 = vmatpush1.xpose.msra.mxu0 0.0
        %2167 = vmatprep.subr.mxu0 0.0
        %2168 = vmatpush1.xpose.msra.mxu0 0.0
        %2169 = vmatprep.subr.mxu0 0.0
        %2170 = vmatpush1.xpose.msra.mxu0 0.0
        %2171 = vmatprep.subr.mxu0 0.0
        %2172 = vmatpush1.xpose.msra.mxu0 0.0
        %2173 = vmatprep.subr.mxu0 0.0
        %2174 = vmatpush1.xpose.msra.mxu0 0.0
        %2175 = vmatprep.subr.mxu0 0.0
        %2176 = vmatpush1.xpose.msra.mxu0 0.0
        %2177 = vmatprep.subr.mxu0 0.0
        %2178 = vmatpush1.xpose.msra.mxu0 0.0
        %2179 = vmatprep.subr.mxu0 0.0
        %2180 = vmatpush1.xpose.msra.mxu0 0.0
        %2181 = vmatprep.subr.mxu0 0.0
        %2182 = vmatpush1.xpose.msra.mxu0 0.0
        %2183 = vmatprep.mubr.f32.mxu0 0.0
        %2184 = vmatmul.mubr.f32.gmra.mrb[0].mxu0 %v755
        %v2185 = vpop.f32.mrb[0].mxu0
        %v2186 = vadd.f32 %v1941, %v2185
        %v2187 = vpop.f32.mrb[0].mxu0
        %2188 = vdwg.mxu0
        %v2190 = vsel %vm607, %v1335, 0
        %2192 = vmatprep.subr.mxu0 0.0
        %2193 = vmatpush1.xpose.msra.mxu0 %v2190
        %2194 = vmatprep.subr.mxu0 0.0
        %2195 = vmatpush1.xpose.msra.mxu0 0.0
        %2196 = vmatprep.subr.mxu0 0.0
        %2197 = vmatpush1.xpose.msra.mxu0 0.0
        %2198 = vmatprep.subr.mxu0 0.0
        %2199 = vmatpush1.xpose.msra.mxu0 0.0
        %2200 = vmatprep.subr.mxu0 0.0
        %2201 = vmatpush1.xpose.msra.mxu0 0.0
        %2202 = vmatprep.subr.mxu0 0.0
        %2203 = vmatpush1.xpose.msra.mxu0 0.0
        %2204 = vmatprep.subr.mxu0 0.0
        %2205 = vmatpush1.xpose.msra.mxu0 0.0
        %2206 = vmatprep.subr.mxu0 0.0
        %2207 = vmatpush1.xpose.msra.mxu0 0.0
        %2208 = vmatprep.subr.mxu0 0.0
        %2209 = vmatpush1.xpose.msra.mxu0 0.0
        %2210 = vmatprep.subr.mxu0 0.0
        %2211 = vmatpush1.xpose.msra.mxu0 0.0
        %2212 = vmatprep.subr.mxu0 0.0
        %2213 = vmatpush1.xpose.msra.mxu0 0.0
        %2214 = vmatprep.subr.mxu0 0.0
        %2215 = vmatpush1.xpose.msra.mxu0 0.0
        %2216 = vmatprep.subr.mxu0 0.0
        %2217 = vmatpush1.xpose.msra.mxu0 0.0
        %2218 = vmatprep.subr.mxu0 0.0
        %2219 = vmatpush1.xpose.msra.mxu0 0.0
        %2220 = vmatprep.subr.mxu0 0.0
        %2221 = vmatpush1.xpose.msra.mxu0 0.0
        %2222 = vmatprep.subr.mxu0 0.0
        %2223 = vmatpush1.xpose.msra.mxu0 0.0
        %2224 = vmatprep.subr.mxu0 0.0
        %2225 = vmatpush1.xpose.msra.mxu0 0.0
        %2226 = vmatprep.subr.mxu0 0.0
        %2227 = vmatpush1.xpose.msra.mxu0 0.0
        %2228 = vmatprep.subr.mxu0 0.0
        %2229 = vmatpush1.xpose.msra.mxu0 0.0
        %2230 = vmatprep.subr.mxu0 0.0
        %2231 = vmatpush1.xpose.msra.mxu0 0.0
        %2232 = vmatprep.subr.mxu0 0.0
        %2233 = vmatpush1.xpose.msra.mxu0 0.0
        %2234 = vmatprep.subr.mxu0 0.0
        %2235 = vmatpush1.xpose.msra.mxu0 0.0
        %2236 = vmatprep.subr.mxu0 0.0
        %2237 = vmatpush1.xpose.msra.mxu0 0.0
        %2238 = vmatprep.subr.mxu0 0.0
        %2239 = vmatpush1.xpose.msra.mxu0 0.0
        %2240 = vmatprep.subr.mxu0 0.0
        %2241 = vmatpush1.xpose.msra.mxu0 0.0
        %2242 = vmatprep.subr.mxu0 0.0
        %2243 = vmatpush1.xpose.msra.mxu0 0.0
        %2244 = vmatprep.subr.mxu0 0.0
        %2245 = vmatpush1.xpose.msra.mxu0 0.0
        %2246 = vmatprep.subr.mxu0 0.0
        %2247 = vmatpush1.xpose.msra.mxu0 0.0
        %2248 = vmatprep.subr.mxu0 0.0
        %2249 = vmatpush1.xpose.msra.mxu0 0.0
        %2250 = vmatprep.subr.mxu0 0.0
        %2251 = vmatpush1.xpose.msra.mxu0 0.0
        %2252 = vmatprep.subr.mxu0 0.0
        %2253 = vmatpush1.xpose.msra.mxu0 0.0
        %2254 = vmatprep.subr.mxu0 0.0
        %2255 = vmatpush1.xpose.msra.mxu0 0.0
        %2256 = vmatprep.mubr.f32.mxu0 0.0
        %2257 = vmatmul.mubr.f32.gmra.mrb[0].mxu0 %v828
        %v2258 = vpop.f32.mrb[0].mxu0
        %v2259 = vadd.f32 %v1945, %v2258
        %v2260 = vpop.f32.mrb[0].mxu0
        %2261 = vdwg.mxu0
        %v2263 = vsel %vm607, %v1336, 0
        %2265 = vmatprep.subr.mxu0 0.0
        %2266 = vmatpush1.xpose.msra.mxu0 %v2263
        %2267 = vmatprep.subr.mxu0 0.0
        %2268 = vmatpush1.xpose.msra.mxu0 0.0
        %2269 = vmatprep.subr.mxu0 0.0
        %2270 = vmatpush1.xpose.msra.mxu0 0.0
        %2271 = vmatprep.subr.mxu0 0.0
        %2272 = vmatpush1.xpose.msra.mxu0 0.0
        %2273 = vmatprep.subr.mxu0 0.0
        %2274 = vmatpush1.xpose.msra.mxu0 0.0
        %2275 = vmatprep.subr.mxu0 0.0
        %2276 = vmatpush1.xpose.msra.mxu0 0.0
        %2277 = vmatprep.subr.mxu0 0.0
        %2278 = vmatpush1.xpose.msra.mxu0 0.0
        %2279 = vmatprep.subr.mxu0 0.0
        %2280 = vmatpush1.xpose.msra.mxu0 0.0
        %2281 = vmatprep.subr.mxu0 0.0
        %2282 = vmatpush1.xpose.msra.mxu0 0.0
        %2283 = vmatprep.subr.mxu0 0.0
        %2284 = vmatpush1.xpose.msra.mxu0 0.0
        %2285 = vmatprep.subr.mxu0 0.0
        %2286 = vmatpush1.xpose.msra.mxu0 0.0
        %2287 = vmatprep.subr.mxu0 0.0
        %2288 = vmatpush1.xpose.msra.mxu0 0.0
        %2289 = vmatprep.subr.mxu0 0.0
        %2290 = vmatpush1.xpose.msra.mxu0 0.0
        %2291 = vmatprep.subr.mxu0 0.0
        %2292 = vmatpush1.xpose.msra.mxu0 0.0
        %2293 = vmatprep.subr.mxu0 0.0
        %2294 = vmatpush1.xpose.msra.mxu0 0.0
        %2295 = vmatprep.subr.mxu0 0.0
        %2296 = vmatpush1.xpose.msra.mxu0 0.0
        %2297 = vmatprep.subr.mxu0 0.0
        %2298 = vmatpush1.xpose.msra.mxu0 0.0
        %2299 = vmatprep.subr.mxu0 0.0
        %2300 = vmatpush1.xpose.msra.mxu0 0.0
        %2301 = vmatprep.subr.mxu0 0.0
        %2302 = vmatpush1.xpose.msra.mxu0 0.0
        %2303 = vmatprep.subr.mxu0 0.0
        %2304 = vmatpush1.xpose.msra.mxu0 0.0
        %2305 = vmatprep.subr.mxu0 0.0
        %2306 = vmatpush1.xpose.msra.mxu0 0.0
        %2307 = vmatprep.subr.mxu0 0.0
        %2308 = vmatpush1.xpose.msra.mxu0 0.0
        %2309 = vmatprep.subr.mxu0 0.0
        %2310 = vmatpush1.xpose.msra.mxu0 0.0
        %2311 = vmatprep.subr.mxu0 0.0
        %2312 = vmatpush1.xpose.msra.mxu0 0.0
        %2313 = vmatprep.subr.mxu0 0.0
        %2314 = vmatpush1.xpose.msra.mxu0 0.0
        %2315 = vmatprep.subr.mxu0 0.0
        %2316 = vmatpush1.xpose.msra.mxu0 0.0
        %2317 = vmatprep.subr.mxu0 0.0
        %2318 = vmatpush1.xpose.msra.mxu0 0.0
        %2319 = vmatprep.subr.mxu0 0.0
        %2320 = vmatpush1.xpose.msra.mxu0 0.0
        %2321 = vmatprep.subr.mxu0 0.0
        %2322 = vmatpush1.xpose.msra.mxu0 0.0
        %2323 = vmatprep.subr.mxu0 0.0
        %2324 = vmatpush1.xpose.msra.mxu0 0.0
        %2325 = vmatprep.subr.mxu0 0.0
        %2326 = vmatpush1.xpose.msra.mxu0 0.0
        %2327 = vmatprep.subr.mxu0 0.0
        %2328 = vmatpush1.xpose.msra.mxu0 0.0
        %2329 = vmatprep.mubr.f32.mxu0 0.0
        %2330 = vmatmul.mubr.f32.gmra.mrb[0].mxu0 %v901
        %v2331 = vpop.f32.mrb[0].mxu0
        %v2332 = vadd.f32 %v1949, %v2331
        %v2333 = vpop.f32.mrb[0].mxu0
        %2334 = vdwg.mxu0
        %v2336 = vsel %vm607, %v1337, 0
        %2338 = vmatprep.subr.mxu0 0.0
        %2339 = vmatpush1.xpose.msra.mxu0 %v2336
        %2340 = vmatprep.subr.mxu0 0.0
        %2341 = vmatpush1.xpose.msra.mxu0 0.0
        %2342 = vmatprep.subr.mxu0 0.0
        %2343 = vmatpush1.xpose.msra.mxu0 0.0
        %2344 = vmatprep.subr.mxu0 0.0
        %2345 = vmatpush1.xpose.msra.mxu0 0.0
        %2346 = vmatprep.subr.mxu0 0.0
        %2347 = vmatpush1.xpose.msra.mxu0 0.0
        %2348 = vmatprep.subr.mxu0 0.0
        %2349 = vmatpush1.xpose.msra.mxu0 0.0
        %2350 = vmatprep.subr.mxu0 0.0
        %2351 = vmatpush1.xpose.msra.mxu0 0.0
        %2352 = vmatprep.subr.mxu0 0.0
        %2353 = vmatpush1.xpose.msra.mxu0 0.0
        %2354 = vmatprep.subr.mxu0 0.0
        %2355 = vmatpush1.xpose.msra.mxu0 0.0
        %2356 = vmatprep.subr.mxu0 0.0
        %2357 = vmatpush1.xpose.msra.mxu0 0.0
        %2358 = vmatprep.subr.mxu0 0.0
        %2359 = vmatpush1.xpose.msra.mxu0 0.0
        %2360 = vmatprep.subr.mxu0 0.0
        %2361 = vmatpush1.xpose.msra.mxu0 0.0
        %2362 = vmatprep.subr.mxu0 0.0
        %2363 = vmatpush1.xpose.msra.mxu0 0.0
        %2364 = vmatprep.subr.mxu0 0.0
        %2365 = vmatpush1.xpose.msra.mxu0 0.0
        %2366 = vmatprep.subr.mxu0 0.0
        %2367 = vmatpush1.xpose.msra.mxu0 0.0
        %2368 = vmatprep.subr.mxu0 0.0
        %2369 = vmatpush1.xpose.msra.mxu0 0.0
        %2370 = vmatprep.subr.mxu0 0.0
        %2371 = vmatpush1.xpose.msra.mxu0 0.0
        %2372 = vmatprep.subr.mxu0 0.0
        %2373 = vmatpush1.xpose.msra.mxu0 0.0
        %2374 = vmatprep.subr.mxu0 0.0
        %2375 = vmatpush1.xpose.msra.mxu0 0.0
        %2376 = vmatprep.subr.mxu0 0.0
        %2377 = vmatpush1.xpose.msra.mxu0 0.0
        %2378 = vmatprep.subr.mxu0 0.0
        %2379 = vmatpush1.xpose.msra.mxu0 0.0
        %2380 = vmatprep.subr.mxu0 0.0
        %2381 = vmatpush1.xpose.msra.mxu0 0.0
        %2382 = vmatprep.subr.mxu0 0.0
        %2383 = vmatpush1.xpose.msra.mxu0 0.0
        %2384 = vmatprep.subr.mxu0 0.0
        %2385 = vmatpush1.xpose.msra.mxu0 0.0
        %2386 = vmatprep.subr.mxu0 0.0
        %2387 = vmatpush1.xpose.msra.mxu0 0.0
        %2388 = vmatprep.subr.mxu0 0.0
        %2389 = vmatpush1.xpose.msra.mxu0 0.0
        %2390 = vmatprep.subr.mxu0 0.0
        %2391 = vmatpush1.xpose.msra.mxu0 0.0
        %2392 = vmatprep.subr.mxu0 0.0
        %2393 = vmatpush1.xpose.msra.mxu0 0.0
        %2394 = vmatprep.subr.mxu0 0.0
        %2395 = vmatpush1.xpose.msra.mxu0 0.0
        %2396 = vmatprep.subr.mxu0 0.0
        %2397 = vmatpush1.xpose.msra.mxu0 0.0
        %2398 = vmatprep.subr.mxu0 0.0
        %2399 = vmatpush1.xpose.msra.mxu0 0.0
        %2400 = vmatprep.subr.mxu0 0.0
        %2401 = vmatpush1.xpose.msra.mxu0 0.0
        %2402 = vmatprep.mubr.f32.mxu0 0.0
        %2403 = vmatmul.mubr.f32.gmra.mrb[0].mxu0 %v974
        %v2404 = vpop.f32.mrb[0].mxu0
        %v2405 = vadd.f32 %v1953, %v2404
        %v2406 = vpop.f32.mrb[0].mxu0
        %2407 = vdwg.mxu0
        %v2409 = vsel %vm607, %v1338, 0
        %2411 = vmatprep.subr.mxu0 0.0
        %2412 = vmatpush1.xpose.msra.mxu0 %v2409
        %2413 = vmatprep.subr.mxu0 0.0
        %2414 = vmatpush1.xpose.msra.mxu0 0.0
        %2415 = vmatprep.subr.mxu0 0.0
        %2416 = vmatpush1.xpose.msra.mxu0 0.0
        %2417 = vmatprep.subr.mxu0 0.0
        %2418 = vmatpush1.xpose.msra.mxu0 0.0
        %2419 = vmatprep.subr.mxu0 0.0
        %2420 = vmatpush1.xpose.msra.mxu0 0.0
        %2421 = vmatprep.subr.mxu0 0.0
        %2422 = vmatpush1.xpose.msra.mxu0 0.0
        %2423 = vmatprep.subr.mxu0 0.0
        %2424 = vmatpush1.xpose.msra.mxu0 0.0
        %2425 = vmatprep.subr.mxu0 0.0
        %2426 = vmatpush1.xpose.msra.mxu0 0.0
        %2427 = vmatprep.subr.mxu0 0.0
        %2428 = vmatpush1.xpose.msra.mxu0 0.0
        %2429 = vmatprep.subr.mxu0 0.0
        %2430 = vmatpush1.xpose.msra.mxu0 0.0
        %2431 = vmatprep.subr.mxu0 0.0
        %2432 = vmatpush1.xpose.msra.mxu0 0.0
        %2433 = vmatprep.subr.mxu0 0.0
        %2434 = vmatpush1.xpose.msra.mxu0 0.0
        %2435 = vmatprep.subr.mxu0 0.0
        %2436 = vmatpush1.xpose.msra.mxu0 0.0
        %2437 = vmatprep.subr.mxu0 0.0
        %2438 = vmatpush1.xpose.msra.mxu0 0.0
        %2439 = vmatprep.subr.mxu0 0.0
        %2440 = vmatpush1.xpose.msra.mxu0 0.0
        %2441 = vmatprep.subr.mxu0 0.0
        %2442 = vmatpush1.xpose.msra.mxu0 0.0
        %2443 = vmatprep.subr.mxu0 0.0
        %2444 = vmatpush1.xpose.msra.mxu0 0.0
        %2445 = vmatprep.subr.mxu0 0.0
        %2446 = vmatpush1.xpose.msra.mxu0 0.0
        %2447 = vmatprep.subr.mxu0 0.0
        %2448 = vmatpush1.xpose.msra.mxu0 0.0
        %2449 = vmatprep.subr.mxu0 0.0
        %2450 = vmatpush1.xpose.msra.mxu0 0.0
        %2451 = vmatprep.subr.mxu0 0.0
        %2452 = vmatpush1.xpose.msra.mxu0 0.0
        %2453 = vmatprep.subr.mxu0 0.0
        %2454 = vmatpush1.xpose.msra.mxu0 0.0
        %2455 = vmatprep.subr.mxu0 0.0
        %2456 = vmatpush1.xpose.msra.mxu0 0.0
        %2457 = vmatprep.subr.mxu0 0.0
        %2458 = vmatpush1.xpose.msra.mxu0 0.0
        %2459 = vmatprep.subr.mxu0 0.0
        %2460 = vmatpush1.xpose.msra.mxu0 0.0
        %2461 = vmatprep.subr.mxu0 0.0
        %2462 = vmatpush1.xpose.msra.mxu0 0.0
        %2463 = vmatprep.subr.mxu0 0.0
        %2464 = vmatpush1.xpose.msra.mxu0 0.0
        %2465 = vmatprep.subr.mxu0 0.0
        %2466 = vmatpush1.xpose.msra.mxu0 0.0
        %2467 = vmatprep.subr.mxu0 0.0
        %2468 = vmatpush1.xpose.msra.mxu0 0.0
        %2469 = vmatprep.subr.mxu0 0.0
        %2470 = vmatpush1.xpose.msra.mxu0 0.0
        %2471 = vmatprep.subr.mxu0 0.0
        %2472 = vmatpush1.xpose.msra.mxu0 0.0
        %2473 = vmatprep.subr.mxu0 0.0
        %2474 = vmatpush1.xpose.msra.mxu0 0.0
        %2475 = vmatprep.mubr.f32.mxu0 0.0
        %2476 = vmatmul.mubr.f32.gmra.mrb[0].mxu0 %v1047
        %v2477 = vpop.f32.mrb[0].mxu0
        %v2478 = vadd.f32 %v1957, %v2477
        %v2479 = vpop.f32.mrb[0].mxu0
        %2480 = vdwg.mxu0
        %v2482 = vsel %vm607, %v1339, 0
        %2484 = vmatprep.subr.mxu0 0.0
        %2485 = vmatpush1.xpose.msra.mxu0 %v2482
        %2486 = vmatprep.subr.mxu0 0.0
        %2487 = vmatpush1.xpose.msra.mxu0 0.0
        %2488 = vmatprep.subr.mxu0 0.0
        %2489 = vmatpush1.xpose.msra.mxu0 0.0
        %2490 = vmatprep.subr.mxu0 0.0
        %2491 = vmatpush1.xpose.msra.mxu0 0.0
        %2492 = vmatprep.subr.mxu0 0.0
        %2493 = vmatpush1.xpose.msra.mxu0 0.0
        %2494 = vmatprep.subr.mxu0 0.0
        %2495 = vmatpush1.xpose.msra.mxu0 0.0
        %2496 = vmatprep.subr.mxu0 0.0
        %2497 = vmatpush1.xpose.msra.mxu0 0.0
        %2498 = vmatprep.subr.mxu0 0.0
        %2499 = vmatpush1.xpose.msra.mxu0 0.0
        %2500 = vmatprep.subr.mxu0 0.0
        %2501 = vmatpush1.xpose.msra.mxu0 0.0
        %2502 = vmatprep.subr.mxu0 0.0
        %2503 = vmatpush1.xpose.msra.mxu0 0.0
        %2504 = vmatprep.subr.mxu0 0.0
        %2505 = vmatpush1.xpose.msra.mxu0 0.0
        %2506 = vmatprep.subr.mxu0 0.0
        %2507 = vmatpush1.xpose.msra.mxu0 0.0
        %2508 = vmatprep.subr.mxu0 0.0
        %2509 = vmatpush1.xpose.msra.mxu0 0.0
        %2510 = vmatprep.subr.mxu0 0.0
        %2511 = vmatpush1.xpose.msra.mxu0 0.0
        %2512 = vmatprep.subr.mxu0 0.0
        %2513 = vmatpush1.xpose.msra.mxu0 0.0
        %2514 = vmatprep.subr.mxu0 0.0
        %2515 = vmatpush1.xpose.msra.mxu0 0.0
        %2516 = vmatprep.subr.mxu0 0.0
        %2517 = vmatpush1.xpose.msra.mxu0 0.0
        %2518 = vmatprep.subr.mxu0 0.0
        %2519 = vmatpush1.xpose.msra.mxu0 0.0
        %2520 = vmatprep.subr.mxu0 0.0
        %2521 = vmatpush1.xpose.msra.mxu0 0.0
        %2522 = vmatprep.subr.mxu0 0.0
        %2523 = vmatpush1.xpose.msra.mxu0 0.0
        %2524 = vmatprep.subr.mxu0 0.0
        %2525 = vmatpush1.xpose.msra.mxu0 0.0
        %2526 = vmatprep.subr.mxu0 0.0
        %2527 = vmatpush1.xpose.msra.mxu0 0.0
        %2528 = vmatprep.subr.mxu0 0.0
        %2529 = vmatpush1.xpose.msra.mxu0 0.0
        %2530 = vmatprep.subr.mxu0 0.0
        %2531 = vmatpush1.xpose.msra.mxu0 0.0
        %2532 = vmatprep.subr.mxu0 0.0
        %2533 = vmatpush1.xpose.msra.mxu0 0.0
        %2534 = vmatprep.subr.mxu0 0.0
        %2535 = vmatpush1.xpose.msra.mxu0 0.0
        %2536 = vmatprep.subr.mxu0 0.0
        %2537 = vmatpush1.xpose.msra.mxu0 0.0
        %2538 = vmatprep.subr.mxu0 0.0
        %2539 = vmatpush1.xpose.msra.mxu0 0.0
        %2540 = vmatprep.subr.mxu0 0.0
        %2541 = vmatpush1.xpose.msra.mxu0 0.0
        %2542 = vmatprep.subr.mxu0 0.0
        %2543 = vmatpush1.xpose.msra.mxu0 0.0
        %2544 = vmatprep.subr.mxu0 0.0
        %2545 = vmatpush1.xpose.msra.mxu0 0.0
        %2546 = vmatprep.subr.mxu0 0.0
        %2547 = vmatpush1.xpose.msra.mxu0 0.0
        %2548 = vmatprep.mubr.f32.mxu0 0.0
        %2549 = vmatmul.mubr.f32.gmra.mrb[0].mxu0 %v1120
        %v2550 = vpop.f32.mrb[0].mxu0
        %v2551 = vadd.f32 %v1961, %v2550
        %v2552 = vpop.f32.mrb[0].mxu0
        %2553 = vdwg.mxu0
        %v2554 = vsel %vm607, %v2040, 0.0
        %2555 = vadd.xlane.f32.xlu0 %v2554
        %v2556 = vpop.xlane.xlu0 %2555
        %v2557 = vsel %vm607, %v2113, 0.0
        %2558 = vadd.xlane.f32.xlu0 %v2557
        %v2559 = vpop.xlane.xlu0 %2558
        %v2560 = vsel %vm607, %v2186, 0.0
        %2561 = vadd.xlane.f32.xlu0 %v2560
        %v2562 = vpop.xlane.xlu0 %2561
        %v2563 = vsel %vm607, %v2259, 0.0
        %2564 = vadd.xlane.f32.xlu0 %v2563
        %v2565 = vpop.xlane.xlu0 %2564
        %v2566 = vsel %vm607, %v2332, 0.0
        %2567 = vadd.xlane.f32.xlu0 %v2566
        %v2568 = vpop.xlane.xlu0 %2567
        %v2569 = vsel %vm607, %v2405, 0.0
        %2570 = vadd.xlane.f32.xlu0 %v2569
        %v2571 = vpop.xlane.xlu0 %2570
        %v2572 = vsel %vm607, %v2478, 0.0
        %2573 = vadd.xlane.f32.xlu0 %v2572
        %v2574 = vpop.xlane.xlu0 %2573
        %v2575 = vsel %vm607, %v2551, 0.0
        %2576 = vadd.xlane.f32.xlu0 %v2575
        %v2577 = vpop.xlane.xlu0 %2576
        %v2578 = vrcp.pop 8.0
        %v2579 = vmul.f32 %v2556, %v2578
        %v2580 = vmul.f32 %v2559, %v2578
        %v2581 = vmul.f32 %v2562, %v2578
        %v2582 = vmul.f32 %v2565, %v2578
        %v2583 = vmul.f32 %v2568, %v2578
        %v2584 = vmul.f32 %v2571, %v2578
        %v2585 = vmul.f32 %v2574, %v2578
        %v2586 = vmul.f32 %v2577, %v2578
        %v2587 = vsub.f32 %v2040, %v2579
        %v2588 = vsub.f32 %v2113, %v2580
        %v2589 = vsub.f32 %v2186, %v2581
        %v2590 = vsub.f32 %v2259, %v2582
        %v2591 = vsub.f32 %v2332, %v2583
        %v2592 = vsub.f32 %v2405, %v2584
        %v2593 = vsub.f32 %v2478, %v2585
        %v2594 = vsub.f32 %v2551, %v2586
        %v2595 = vmul.f32 %v2587, %v2587
        %v2596 = vmul.f32 %v2588, %v2588
        %v2597 = vmul.f32 %v2589, %v2589
        %v2598 = vmul.f32 %v2590, %v2590
        %v2599 = vmul.f32 %v2591, %v2591
        %v2600 = vmul.f32 %v2592, %v2592
        %v2601 = vmul.f32 %v2593, %v2593
        %v2602 = vmul.f32 %v2594, %v2594
        %v2603 = vsel %vm607, %v2595, 0.0
        %2604 = vadd.xlane.f32.xlu0 %v2603
        %v2605 = vpop.xlane.xlu0 %2604
        %v2606 = vsel %vm607, %v2596, 0.0
        %2607 = vadd.xlane.f32.xlu0 %v2606
        %v2608 = vpop.xlane.xlu0 %2607
        %v2609 = vsel %vm607, %v2597, 0.0
        %2610 = vadd.xlane.f32.xlu0 %v2609
        %v2611 = vpop.xlane.xlu0 %2610
        %v2612 = vsel %vm607, %v2598, 0.0
        %2613 = vadd.xlane.f32.xlu0 %v2612
        %v2614 = vpop.xlane.xlu0 %2613
        %v2615 = vsel %vm607, %v2599, 0.0
        %2616 = vadd.xlane.f32.xlu0 %v2615
        %v2617 = vpop.xlane.xlu0 %2616
        %v2618 = vsel %vm607, %v2600, 0.0
        %2619 = vadd.xlane.f32.xlu0 %v2618
        %v2620 = vpop.xlane.xlu0 %2619
        %v2621 = vsel %vm607, %v2601, 0.0
        %2622 = vadd.xlane.f32.xlu0 %v2621
        %v2623 = vpop.xlane.xlu0 %2622
        %v2624 = vsel %vm607, %v2602, 0.0
        %2625 = vadd.xlane.f32.xlu0 %v2624
        %v2626 = vpop.xlane.xlu0 %2625
        %v2627 = vmul.f32 %v2605, %v2578
        %v2628 = vmul.f32 %v2608, %v2578
        %v2629 = vmul.f32 %v2611, %v2578
        %v2630 = vmul.f32 %v2614, %v2578
        %v2631 = vmul.f32 %v2617, %v2578
        %v2632 = vmul.f32 %v2620, %v2578
        %v2633 = vmul.f32 %v2623, %v2578
        %v2634 = vmul.f32 %v2626, %v2578
        %v2635 = vadd.f32 %v2627, 1e-05
        %v2636 = vadd.f32 %v2628, 1e-05
        %v2637 = vadd.f32 %v2629, 1e-05
        %v2638 = vadd.f32 %v2630, 1e-05
        %v2639 = vadd.f32 %v2631, 1e-05
        %v2640 = vadd.f32 %v2632, 1e-05
        %v2641 = vadd.f32 %v2633, 1e-05
        %v2642 = vadd.f32 %v2634, 1e-05
        %v2643 = vrsqrt.pop %v2635
        %v2644 = vrsqrt.pop %v2636
        %v2645 = vrsqrt.pop %v2637
        %v2646 = vrsqrt.pop %v2638
        %v2647 = vrsqrt.pop %v2639
        %v2648 = vrsqrt.pop %v2640
        %v2649 = vrsqrt.pop %v2641
        %v2650 = vrsqrt.pop %v2642
        %v2651 = vmul.f32 %v2587, %v2643
        %v2652 = vmul.f32 %v2588, %v2644
        %v2653 = vmul.f32 %v2589, %v2645
        %v2654 = vmul.f32 %v2590, %v2646
        %v2655 = vmul.f32 %v2591, %v2647
        %v2656 = vmul.f32 %v2592, %v2648
        %v2657 = vmul.f32 %v2593, %v2649
        %v2658 = vmul.f32 %v2594, %v2650
        %v2659 = vld [vmem:[#allocation13] sm:$0x1]
        %v2661 = vlaneseq
        %v2662 = vshrl.u32 %v2661, 7
        %v2663 = vsub.s32 0, %v2662
        %v2664 = vrot.slane %v2659, %v2663
        %v2666 = vmul.f32 %v2651, %v2664
        %v2667 = vmul.f32 %v2652, %v2664
        %v2668 = vmul.f32 %v2653, %v2664
        %v2669 = vmul.f32 %v2654, %v2664
        %v2670 = vmul.f32 %v2655, %v2664
        %v2671 = vmul.f32 %v2656, %v2664
        %v2672 = vmul.f32 %v2657, %v2664
        %v2673 = vmul.f32 %v2658, %v2664
        %v2674 = vld [vmem:[#allocation14] sm:$0x1]
        %v2676 = vlaneseq
        %v2677 = vshrl.u32 %v2676, 7
        %v2678 = vsub.s32 0, %v2677
        %v2679 = vrot.slane %v2674, %v2678
        %v2681 = vadd.f32 %v2666, %v2679
        %v2682 = vadd.f32 %v2667, %v2679
        %v2683 = vadd.f32 %v2668, %v2679
        %v2684 = vadd.f32 %v2669, %v2679
        %v2685 = vadd.f32 %v2670, %v2679
        %v2686 = vadd.f32 %v2671, %v2679
        %v2687 = vadd.f32 %v2672, %v2679
        %v2688 = vadd.f32 %v2673, %v2679
        %v2689 = vld [vmem:[#allocation7] sm:$0xff]
        %v2690 = vld [vmem:[#allocation8] sm:$0x1]
        %v2692 = vlaneseq
        %v2693 = vshrl.u32 %v2692, 7
        %v2694 = vsub.s32 0, %v2693
        %v2695 = vrot.slane %v2690, %v2694
        %v2698 = vsel %vm607, %v2681, 0
        %v2701 = vsel %vm607, %v2682, 0
        %v2704 = vsel %vm607, %v2683, 0
        %v2707 = vsel %vm607, %v2684, 0
        %v2710 = vsel %vm607, %v2685, 0
        %v2713 = vsel %vm607, %v2686, 0
        %v2716 = vsel %vm607, %v2687, 0
        %v2719 = vsel %vm607, %v2688, 0
        %2721 = vmatprep.subr.mxu0 0.0
        %2722 = vmatpush1.msra.mxu0 %v2689
        %2723 = vmatprep.subr.mxu0 0.0
        %2724 = vmatpush1.msra.mxu0 0.0
        %2725 = vmatprep.subr.mxu0 0.0
        %2726 = vmatpush1.msra.mxu0 0.0
        %2727 = vmatprep.subr.mxu0 0.0
        %2728 = vmatpush1.msra.mxu0 0.0
        %2729 = vmatprep.subr.mxu0 0.0
        %2730 = vmatpush1.msra.mxu0 0.0
        %2731 = vmatprep.subr.mxu0 0.0
        %2732 = vmatpush1.msra.mxu0 0.0
        %2733 = vmatprep.subr.mxu0 0.0
        %2734 = vmatpush1.msra.mxu0 0.0
        %2735 = vmatprep.subr.mxu0 0.0
        %2736 = vmatpush1.msra.mxu0 0.0
        %2737 = vmatprep.subr.mxu0 0.0
        %2738 = vmatpush1.msra.mxu0 0.0
        %2739 = vmatprep.subr.mxu0 0.0
        %2740 = vmatpush1.msra.mxu0 0.0
        %2741 = vmatprep.subr.mxu0 0.0
        %2742 = vmatpush1.msra.mxu0 0.0
        %2743 = vmatprep.subr.mxu0 0.0
        %2744 = vmatpush1.msra.mxu0 0.0
        %2745 = vmatprep.subr.mxu0 0.0
        %2746 = vmatpush1.msra.mxu0 0.0
        %2747 = vmatprep.subr.mxu0 0.0
        %2748 = vmatpush1.msra.mxu0 0.0
        %2749 = vmatprep.subr.mxu0 0.0
        %2750 = vmatpush1.msra.mxu0 0.0
        %2751 = vmatprep.subr.mxu0 0.0
        %2752 = vmatpush1.msra.mxu0 0.0
        %2753 = vmatprep.subr.mxu0 0.0
        %2754 = vmatpush1.msra.mxu0 0.0
        %2755 = vmatprep.subr.mxu0 0.0
        %2756 = vmatpush1.msra.mxu0 0.0
        %2757 = vmatprep.subr.mxu0 0.0
        %2758 = vmatpush1.msra.mxu0 0.0
        %2759 = vmatprep.subr.mxu0 0.0
        %2760 = vmatpush1.msra.mxu0 0.0
        %2761 = vmatprep.subr.mxu0 0.0
        %2762 = vmatpush1.msra.mxu0 0.0
        %2763 = vmatprep.subr.mxu0 0.0
        %2764 = vmatpush1.msra.mxu0 0.0
        %2765 = vmatprep.subr.mxu0 0.0
        %2766 = vmatpush1.msra.mxu0 0.0
        %2767 = vmatprep.subr.mxu0 0.0
        %2768 = vmatpush1.msra.mxu0 0.0
        %2769 = vmatprep.subr.mxu0 0.0
        %2770 = vmatpush1.msra.mxu0 0.0
        %2771 = vmatprep.subr.mxu0 0.0
        %2772 = vmatpush1.msra.mxu0 0.0
        %2773 = vmatprep.subr.mxu0 0.0
        %2774 = vmatpush1.msra.mxu0 0.0
        %2775 = vmatprep.subr.mxu0 0.0
        %2776 = vmatpush1.msra.mxu0 0.0
        %2777 = vmatprep.subr.mxu0 0.0
        %2778 = vmatpush1.msra.mxu0 0.0
        %2779 = vmatprep.subr.mxu0 0.0
        %2780 = vmatpush1.msra.mxu0 0.0
        %2781 = vmatprep.subr.mxu0 0.0
        %2782 = vmatpush1.msra.mxu0 0.0
        %2783 = vmatprep.subr.mxu0 0.0
        %2784 = vmatpush1.msra.mxu0 0.0
        %2785 = vmatprep.mubr.f32.mxu0 0.0
        %2786 = vmatmul.mubr.f32.gmra.mrb[0].mxu0 %v2698
        %v2787 = vpop.f32.mrb[0].mxu0
        %v2788 = vadd.f32 %v2695, %v2787
        %v2789 = vpop.f32.mrb[0].mxu0
        %2790 = vmatprep.mubr.f32.mxu0 0.0
        %2791 = vmatmul.mubr.f32.gmra.mrb[0].mxu0 %v2701
        %v2792 = vpop.f32.mrb[0].mxu0
        %v2793 = vadd.f32 %v2695, %v2792
        %v2794 = vpop.f32.mrb[0].mxu0
        %2795 = vmatprep.mubr.f32.mxu0 0.0
        %2796 = vmatmul.mubr.f32.gmra.mrb[0].mxu0 %v2704
        %v2797 = vpop.f32.mrb[0].mxu0
        %v2798 = vadd.f32 %v2695, %v2797
        %v2799 = vpop.f32.mrb[0].mxu0
        %2800 = vmatprep.mubr.f32.mxu0 0.0
        %2801 = vmatmul.mubr.f32.gmra.mrb[0].mxu0 %v2707
        %v2802 = vpop.f32.mrb[0].mxu0
        %v2803 = vadd.f32 %v2695, %v2802
        %v2804 = vpop.f32.mrb[0].mxu0
        %2805 = vmatprep.mubr.f32.mxu0 0.0
        %2806 = vmatmul.mubr.f32.gmra.mrb[0].mxu0 %v2710
        %v2807 = vpop.f32.mrb[0].mxu0
        %v2808 = vadd.f32 %v2695, %v2807
        %v2809 = vpop.f32.mrb[0].mxu0
        %2810 = vmatprep.mubr.f32.mxu0 0.0
        %2811 = vmatmul.mubr.f32.gmra.mrb[0].mxu0 %v2713
        %v2812 = vpop.f32.mrb[0].mxu0
        %v2813 = vadd.f32 %v2695, %v2812
        %v2814 = vpop.f32.mrb[0].mxu0
        %2815 = vmatprep.mubr.f32.mxu0 0.0
        %2816 = vmatmul.mubr.f32.gmra.mrb[0].mxu0 %v2716
        %v2817 = vpop.f32.mrb[0].mxu0
        %v2818 = vadd.f32 %v2695, %v2817
        %v2819 = vpop.f32.mrb[0].mxu0
        %2820 = vmatprep.mubr.f32.mxu0 0.0
        %2821 = vmatmul.mubr.f32.gmra.mrb[0].mxu0 %v2719
        %v2822 = vpop.f32.mrb[0].mxu0
        %v2823 = vadd.f32 %v2695, %v2822
        %v2824 = vpop.f32.mrb[0].mxu0
        %2825 = vdwg.mxu0
        %vm2826 = vcmask 261120
        %v2827 = vsel %vm2826, %v2788, -inf
        %2828 = vmax.xlane.f32.xlu0 %v2827
        %v2829 = vpop.xlane.xlu0 %2828
        %v2830 = vsel %vm2826, %v2793, -inf
        %2831 = vmax.xlane.f32.xlu0 %v2830
        %v2832 = vpop.xlane.xlu0 %2831
        %v2833 = vsel %vm2826, %v2798, -inf
        %2834 = vmax.xlane.f32.xlu0 %v2833
        %v2835 = vpop.xlane.xlu0 %2834
        %v2836 = vsel %vm2826, %v2803, -inf
        %2837 = vmax.xlane.f32.xlu0 %v2836
        %v2838 = vpop.xlane.xlu0 %2837
        %v2839 = vsel %vm2826, %v2808, -inf
        %2840 = vmax.xlane.f32.xlu0 %v2839
        %v2841 = vpop.xlane.xlu0 %2840
        %v2842 = vsel %vm2826, %v2813, -inf
        %2843 = vmax.xlane.f32.xlu0 %v2842
        %v2844 = vpop.xlane.xlu0 %2843
        %v2845 = vsel %vm2826, %v2818, -inf
        %2846 = vmax.xlane.f32.xlu0 %v2845
        %v2847 = vpop.xlane.xlu0 %2846
        %v2848 = vsel %vm2826, %v2823, -inf
        %2849 = vmax.xlane.f32.xlu0 %v2848
        %v2850 = vpop.xlane.xlu0 %2849
        %v2851 = vsub.f32 %v2788, %v2829
        %v2852 = vsub.f32 %v2793, %v2832
        %v2853 = vsub.f32 %v2798, %v2835
        %v2854 = vsub.f32 %v2803, %v2838
        %v2855 = vsub.f32 %v2808, %v2841
        %v2856 = vsub.f32 %v2813, %v2844
        %v2857 = vsub.f32 %v2818, %v2847
        %v2858 = vsub.f32 %v2823, %v2850
        %v2859 = vmul.f32 %v2851, 1.442695
        %v2860 = vpow.pop %v2859
        %v2861 = vmul.f32 %v2852, 1.442695
        %v2862 = vpow.pop %v2861
        %v2863 = vmul.f32 %v2853, 1.442695
        %v2864 = vpow.pop %v2863
        %v2865 = vmul.f32 %v2854, 1.442695
        %v2866 = vpow.pop %v2865
        %v2867 = vmul.f32 %v2855, 1.442695
        %v2868 = vpow.pop %v2867
        %v2869 = vmul.f32 %v2856, 1.442695
        %v2870 = vpow.pop %v2869
        %v2871 = vmul.f32 %v2857, 1.442695
        %v2872 = vpow.pop %v2871
        %v2873 = vmul.f32 %v2858, 1.442695
        %v2874 = vpow.pop %v2873
        %v2875 = vsel %vm2826, %v2860, 0.0
        %2876 = vadd.xlane.f32.xlu0 %v2875
        %v2877 = vpop.xlane.xlu0 %2876
        %v2878 = vsel %vm2826, %v2862, 0.0
        %2879 = vadd.xlane.f32.xlu0 %v2878
        %v2880 = vpop.xlane.xlu0 %2879
        %v2881 = vsel %vm2826, %v2864, 0.0
        %2882 = vadd.xlane.f32.xlu0 %v2881
        %v2883 = vpop.xlane.xlu0 %2882
        %v2884 = vsel %vm2826, %v2866, 0.0
        %2885 = vadd.xlane.f32.xlu0 %v2884
        %v2886 = vpop.xlane.xlu0 %2885
        %v2887 = vsel %vm2826, %v2868, 0.0
        %2888 = vadd.xlane.f32.xlu0 %v2887
        %v2889 = vpop.xlane.xlu0 %2888
        %v2890 = vsel %vm2826, %v2870, 0.0
        %2891 = vadd.xlane.f32.xlu0 %v2890
        %v2892 = vpop.xlane.xlu0 %2891
        %v2893 = vsel %vm2826, %v2872, 0.0
        %2894 = vadd.xlane.f32.xlu0 %v2893
        %v2895 = vpop.xlane.xlu0 %2894
        %v2896 = vsel %vm2826, %v2874, 0.0
        %2897 = vadd.xlane.f32.xlu0 %v2896
        %v2898 = vpop.xlane.xlu0 %2897
        %v2899 = vlaneseq
        %v2900 = vand.u32 %v2899, 127
        %v2901 = vld [vmem:[%s511] sm:$0xff]
        %v2902 = vld [vmem:[%s511 + $0x8] sm:$0xff]
        %v2903 = vld [vmem:[%s511 + $0x10] sm:$0xff]
        %v2904 = vld [vmem:[%s511 + $0x18] sm:$0xff]
        %v2905 = vld [vmem:[%s511 + $0x20] sm:$0xff]
        %v2906 = vld [vmem:[%s511 + $0x28] sm:$0xff]
        %v2907 = vld [vmem:[%s511 + $0x30] sm:$0xff]
        %v2908 = vld [vmem:[%s511 + $0x38] sm:$0xff]
        %2909 = vset.pattern.permute.xlu0 0
        %2910 = vperm.xlu0 %2909, %v2901
        %v2911 = vpop.permute.xlu0 %2910
        %2912 = vset.pattern.permute.xlu0 0
        %2913 = vperm.xlu0 %2912, %v2902
        %v2914 = vpop.permute.xlu0 %2913
        %2915 = vset.pattern.permute.xlu0 0
        %2916 = vperm.xlu0 %2915, %v2903
        %v2917 = vpop.permute.xlu0 %2916
        %2918 = vset.pattern.permute.xlu0 0
        %2919 = vperm.xlu0 %2918, %v2904
        %v2920 = vpop.permute.xlu0 %2919
        %2921 = vset.pattern.permute.xlu0 0
        %2922 = vperm.xlu0 %2921, %v2905
        %v2923 = vpop.permute.xlu0 %2922
        %2924 = vset.pattern.permute.xlu0 0
        %2925 = vperm.xlu0 %2924, %v2906
        %v2926 = vpop.permute.xlu0 %2925
        %2927 = vset.pattern.permute.xlu0 0
        %2928 = vperm.xlu0 %2927, %v2907
        %v2929 = vpop.permute.xlu0 %2928
        %2930 = vset.pattern.permute.xlu0 0
        %2931 = vperm.xlu0 %2930, %v2908
        %v2932 = vpop.permute.xlu0 %2931
        %vm2933 = vcmp.eq.s32.totalorder %v2900, %v2911
        %vm2934 = vcmp.eq.s32.totalorder %v2900, %v2914
        %vm2935 = vcmp.eq.s32.totalorder %v2900, %v2917
        %vm2936 = vcmp.eq.s32.totalorder %v2900, %v2920
        %vm2937 = vcmp.eq.s32.totalorder %v2900, %v2923
        %vm2938 = vcmp.eq.s32.totalorder %v2900, %v2926
        %vm2939 = vcmp.eq.s32.totalorder %v2900, %v2929
        %vm2940 = vcmp.eq.s32.totalorder %v2900, %v2932
        %v2941 = vsel %vm2933, %v2851, 0.0
        %v2942 = vsel %vm2934, %v2852, 0.0
        %v2943 = vsel %vm2935, %v2853, 0.0
        %v2944 = vsel %vm2936, %v2854, 0.0
        %v2945 = vsel %vm2937, %v2855, 0.0
        %v2946 = vsel %vm2938, %v2856, 0.0
        %v2947 = vsel %vm2939, %v2857, 0.0
        %v2948 = vsel %vm2940, %v2858, 0.0
        %v2949 = vsel %vm2826, %v2941, 0.0
        %2950 = vadd.xlane.f32.xlu0 %v2949
        %v2951 = vpop.xlane.xlu0 %2950
        %v2952 = vsel %vm2826, %v2942, 0.0
        %2953 = vadd.xlane.f32.xlu0 %v2952
        %v2954 = vpop.xlane.xlu0 %2953
        %v2955 = vsel %vm2826, %v2943, 0.0
        %2956 = vadd.xlane.f32.xlu0 %v2955
        %v2957 = vpop.xlane.xlu0 %2956
        %v2958 = vsel %vm2826, %v2944, 0.0
        %2959 = vadd.xlane.f32.xlu0 %v2958
        %v2960 = vpop.xlane.xlu0 %2959
        %v2961 = vsel %vm2826, %v2945, 0.0
        %2962 = vadd.xlane.f32.xlu0 %v2961
        %v2963 = vpop.xlane.xlu0 %2962
        %v2964 = vsel %vm2826, %v2946, 0.0
        %2965 = vadd.xlane.f32.xlu0 %v2964
        %v2966 = vpop.xlane.xlu0 %2965
        %v2967 = vsel %vm2826, %v2947, 0.0
        %2968 = vadd.xlane.f32.xlu0 %v2967
        %v2969 = vpop.xlane.xlu0 %2968
        %v2970 = vsel %vm2826, %v2948, 0.0
        %2971 = vadd.xlane.f32.xlu0 %v2970
        %v2972 = vpop.xlane.xlu0 %2971
        %v2973 = vlog2.pop %v2877
        %v2974 = vmul.f32 %v2973, 0.6931472
        %v2975 = vlog2.pop %v2880
        %v2976 = vmul.f32 %v2975, 0.6931472
        %v2977 = vlog2.pop %v2883
        %v2978 = vmul.f32 %v2977, 0.6931472
        %v2979 = vlog2.pop %v2886
        %v2980 = vmul.f32 %v2979, 0.6931472
        %v2981 = vlog2.pop %v2889
        %v2982 = vmul.f32 %v2981, 0.6931472
        %v2983 = vlog2.pop %v2892
        %v2984 = vmul.f32 %v2983, 0.6931472
        %v2985 = vlog2.pop %v2895
        %v2986 = vmul.f32 %v2985, 0.6931472
        %v2987 = vlog2.pop %v2898
        %v2988 = vmul.f32 %v2987, 0.6931472
        %v2989 = vsub.f32 %v2974, %v2951
        %v2990 = vsub.f32 %v2976, %v2954
        %v2991 = vsub.f32 %v2978, %v2957
        %v2992 = vsub.f32 %v2980, %v2960
        %v2993 = vsub.f32 %v2982, %v2963
        %v2994 = vsub.f32 %v2984, %v2966
        %v2995 = vsub.f32 %v2986, %v2969
        %v2996 = vsub.f32 %v2988, %v2972
        %v3005 = vlaneseq
        %v3006 = vshrl.u32 %v3005, 7
        %v3007 = vsub.s32 %v2900, %v3006
        %v3008 = vrot.slane %v2989, %v3007
        %v3009 = vlaneseq
        %v3010 = vshrl.u32 %v3009, 7
        %v3011 = vsub.s32 %v2900, %v3010
        %v3012 = vrot.slane %v2990, %v3011
        %v3013 = vlaneseq
        %v3014 = vshrl.u32 %v3013, 7
        %v3015 = vsub.s32 %v2900, %v3014
        %v3016 = vrot.slane %v2991, %v3015
        %v3017 = vlaneseq
        %v3018 = vshrl.u32 %v3017, 7
        %v3019 = vsub.s32 %v2900, %v3018
        %v3020 = vrot.slane %v2992, %v3019
        %v3021 = vlaneseq
        %v3022 = vshrl.u32 %v3021, 7
        %v3023 = vsub.s32 %v2900, %v3022
        %v3024 = vrot.slane %v2993, %v3023
        %v3025 = vlaneseq
        %v3026 = vshrl.u32 %v3025, 7
        %v3027 = vsub.s32 %v2900, %v3026
        %v3028 = vrot.slane %v2994, %v3027
        %v3029 = vlaneseq
        %v3030 = vshrl.u32 %v3029, 7
        %v3031 = vsub.s32 %v2900, %v3030
        %v3032 = vrot.slane %v2995, %v3031
        %v3033 = vlaneseq
        %v3034 = vshrl.u32 %v3033, 7
        %v3035 = vsub.s32 %v2900, %v3034
        %v3036 = vrot.slane %v2996, %v3035
        %vm3037 = vcmask 1041409
        %v3038 = vsel %vm3037, %v3012, %v3008
        %vm3039 = vcmask 1042434
        %v3040 = vsel %vm3039, %v3016, %v3038
        %vm3041 = vcmask 1043459
        %v3042 = vsel %vm3041, %v3020, %v3040
        %vm3043 = vcmask 1044484
        %v3044 = vsel %vm3043, %v3024, %v3042
        %vm3045 = vcmask 1045509
        %v3046 = vsel %vm3045, %v3028, %v3044
        %vm3047 = vcmask 1046534
        %v3048 = vsel %vm3047, %v3032, %v3046
        %vm3049 = vcmask 1047559
        %v3050 = vsel %vm3049, %v3036, %v3048
        %3052 = vst.msk [vmem:[%s596] sm:$0xff] %vm607, %v3050
        %s3053 = sand.u32 %s307, 1
        %s3054 = scalar_lea.sflag [#allocation4], %s3053
        %s3055 = sand.u32 %s307, 1
        %s3056 = smul.addr %s3055, 8
        %s3057 = scalar_lea.vmem [#allocation22], %s3056
        // Predicated region
        $region117: #{fast_weight_layer.3} parent=67 // pred_check
          %p3058 = pneg %p317
        $region118: #{fast_weight_layer.3} parent=67 // pred_check_branch
          %3060 = sbr.rel (%p3058) target = $region120
        $region119: #{fast_weight_layer.3} parent=67 // pred_region
          %s3062 = ssub.s32 128, 128
          %3063 = vsyncadd %s3054, %s3062
          %s3064 = smul.addr %s37, 128
          %s3065 = scalar_lea.hbm %s12, %s3064
          %s3067 = sshll.u32 %s3057, 4
          %s3068 = int_to_ptr.vmem [resolvable:$true] %s3067
          %3070 = dma.vmem_to_hbm [thread:$0]  %s3068, 128, %s3065, %s3054
        $region120: #{fast_weight_layer.3} parent=67 // pred_fallthru
          _
      $region68: #{fast_weight_layer.3} parent=5 // pred_fallthru
        _
      %p3071 = scmp.le.s32.totalorder 2, %s32
      // Predicated region
      $region121: #{fast_weight_layer.3} parent=5 // pred_check
        %p3072 = pneg %p3071
      $region122: #{fast_weight_layer.3} parent=5 // pred_check_branch
        %3074 = sbr.rel (%p3072) target = $region124
      $region123: #{fast_weight_layer.3} parent=5 // pred_region
        %s3075 = ssub.s32 %s32, 2
        // Predicated region
        $region125: #{fast_weight_layer.3} parent=123 // pred_check
          %p3076 = pneg %p323
        $region126: #{fast_weight_layer.3} parent=123 // pred_check_branch
          %3078 = sbr.rel (%p3076) target = $region128
        $region127: #{fast_weight_layer.3} parent=123 // pred_region
          %s3079 = sand.u32 %s308, 1
          %s3080 = scalar_lea.sflag [#allocation4], %s3079
          %s3081 = sand.u32 %s308, 1
          %s3082 = smul.addr %s3081, 8
          %s3083 = scalar_lea.vmem [#allocation22], %s3082
          %3084 = dma.done %s3080, 128
        $region128: #{fast_weight_layer.3} parent=123 // pred_fallthru
          _
      $region124: #{fast_weight_layer.3} parent=5 // pred_fallthru
        _
    $region6: #{fast_weight_layer.3} parent=1 // loop_footer
      %s36 = sadd.s32 1, %s32
    $region7: #{fast_weight_layer.3} parent=1 // loop_footer_branch
      %31 = sbr.rel target = $region3
    $region8: #{fast_weight_layer.3} parent=1 // loop_exit
      _
    %3085 = vsyncpa [#allocation3], 1
    %s3086 = scalar_lea.sflag [#allocation3], 1
    %3087 = vsyncpa %s3086, 1
    %3088 = vsyncpa [#allocation6], 1
    %s3089 = scalar_lea.sflag [#allocation6], 1
    %3090 = vsyncpa %s3089, 1
    %3091 = vsyncpa [#allocation9], 1
    %3092 = vsyncpa [#allocation12], 1
    %3093 = vsyncpa [#allocation15], 1
    %3094 = vsyncpa [#allocation18], 1
    %3095 = vsyncpa [#allocation21], 1
    %3096 = vsyncpa [#allocation4], 1
    %s3097 = scalar_lea.sflag [#allocation4], 1
    %3098 = vsyncpa %s3097, 1

</llo_original>
